<compile_context>
chip_gen: v7x
topology: tpu7x:2x2x1
jax: 0.10.0
libtpu: 0.0.40
codegen_flags: <defaults>
</compile_context>

<pallas_src>
import jax
import jax.numpy as jnp
from jax.experimental import pallas as pl
from jax.experimental.pallas import tpu as pltpu

F_IN = 128          # node / edge feature dim (BatchNorm(128), edge_dim=128)
HID = 32            # hidden_channels
HEADS = 10          # GATv2 heads
HT = HEADS * HID    # 320: all heads stacked on the lane dim
NEG_SLOPE = 0.2     # GATv2Conv default negative_slope
BN_EPS = 1e-5


# ----------------------------- Pallas kernel --------------------------------

def deorphann_kernel(x_ref, adj_ref, ef_ref, pool_ref,
                     wl_ref, bl_ref, wr_ref, br_ref, we_ref, attbd_ref,
                     gatb_ref, wlin_ref, blin_ref, out_ref):
    P = pool_ref.shape[-1]          # (padded) nodes per graph

    x = x_ref[0]                    # [P, 128]   bf16 raw features (BN folded into wl/wr)
    adjf = adj_ref[0]               # [P*P, 1]   f32 edge mask, row = dst*P + src
    ef = ef_ref[0]                  # [P*P, 128] bf16 dense edge features

    # ---- stacked lin_l / lin_r for all heads: two [P,128] @ [128,320] matmuls ----
    xl = jnp.dot(x, wl_ref[...], preferred_element_type=jnp.float32) + bl_ref[...]
    xr = jnp.dot(x, wr_ref[...], preferred_element_type=jnp.float32) + br_ref[...]
    # column layout of xl/xr: col = h*HID + d

    # ---- stacked edge projection for all heads: [P*P,128] @ [128,320] ----
    e3 = jnp.dot(ef, we_ref[...],
                 preferred_element_type=jnp.float32).reshape(P, P, HT)   # [dst, src, HT]

    # ---- GATv2 attention logits, all heads at once ----
    t = e3 + xr[:, None, :] + xl[None, :, :]           # x_i + x_j + e_ij
    t = jnp.where(t >= 0, t, NEG_SLOPE * t)            # leaky_relu
    # block-diagonal att matrix turns the per-head <att_h, t_h> reduction into one matmul
    s = jnp.dot(t.reshape(P * P, HT), attbd_ref[...],
                preferred_element_type=jnp.float32)    # [P*P, HEADS]

    # ---- masked softmax over sources, batched over all heads (kept in f32) ----
    adj3 = adjf.reshape(P, P, 1)
    s3 = jnp.where(adj3 > 0, s.reshape(P, P, HEADS), jnp.float32(-1e30))
    m3 = jnp.max(s3, axis=1, keepdims=True)            # [P, 1, HEADS]
    p3 = jnp.exp(s3 - m3) * adj3
    l3 = jnp.sum(p3, axis=1, keepdims=True)
    # guard all-masked (padded) rows against a zero denominator; fold the 1/heads mean in;
    # push the divide to the EUP with an approximate reciprocal.
    inv3 = pl.reciprocal(jnp.maximum(l3, 1e-20) * jnp.float32(HEADS), approx=True)
    alpha3 = p3 * inv3                                  # [dst, src, head], rows sum to 1/HEADS

    # ---- aggregate messages + mean over heads ----
    # Total work is only P*P*HEADS*HID (~20 KFLOP here); keep it as a tiny unrolled
    # broadcast-reduce of static slices to avoid lane-splitting relayouts of xl / alpha.
    node = jnp.zeros((P, HID), jnp.float32)
    for h in range(HEADS):
        node = node + jnp.sum(
            alpha3[:, :, h:h + 1] * xl[None, :, h * HID:(h + 1) * HID], axis=1)
    node = jnp.maximum(node + gatb_ref[...], 0.0)       # + GAT bias, .relu()

    # ---- global_mean_pool (padded nodes have weight 0) + eval dropout (=identity) ----
    pooled = jnp.dot(pool_ref[0], node, preferred_element_type=jnp.float32)   # [1, HID]

    # ---- Linear(hidden, 2) ----
    out_ref[0] = jnp.dot(pooled, wlin_ref[...],
                         preferred_element_type=jnp.float32) + blin_ref[...]


# ----------------------------- host-side glue -------------------------------

def build_dense_batch(x, edge_index, edge_attr, batch, num_graphs):
    """remove_self_loops + add_self_loops(fill_value='mean') (PyG GATv2Conv defaults),
    densified PER GRAPH (block-diagonal -> per-graph blocks for the grid axis).
    Returns xg [G,P,F], adj [G,P,P], edense [G,P,P,F], pool [G,1,P] (all f32)."""
    N, F = x.shape
    counts = jnp.zeros((num_graphs,), jnp.int32).at[batch].add(1)
    P = int((int(jnp.max(counts)) + 7) // 8) * 8            # pad nodes/graph to sublanes
    starts = jnp.concatenate([jnp.zeros((1,), jnp.int32), jnp.cumsum(counts)[:-1]])
    local = jnp.arange(N, dtype=jnp.int32) - starts[batch]   # assumes `batch` is sorted (PyG)

    src, dst = edge_index[0], edge_index[1]
    w = (src != dst).astype(jnp.float32)                     # remove_self_loops (as weights)
    ge, ls, ld = batch[dst], local[src], local[dst]

    # self-loop attr = mean of incoming (non-self) edge attrs per node (fill_value='mean')
    deg = jnp.zeros((N,), jnp.float32).at[dst].add(w)
    inc = jnp.zeros((N, F), jnp.float32).at[dst].add(edge_attr * w[:, None])
    loop_attr = inc / jnp.maximum(deg, 1.0)[:, None]

    adj = jnp.zeros((num_graphs, P, P), jnp.float32).at[ge, ld, ls].add(w)
    adj = jnp.minimum(adj, 1.0)
    eden = jnp.zeros((num_graphs, P, P, F), jnp.float32).at[ge, ld, ls].add(
        edge_attr * w[:, None])
    # TODO(synk): duplicate (src,dst) pairs accumulate here; PyG keeps them as parallel edges.

    diag = jnp.arange(P)
    adj = adj.at[:, diag, diag].set(1.0)                     # self-loops (incl. padded slots)
    eden = eden.at[batch, local, local].set(loop_attr)

    xg = jnp.zeros((num_graphs, P, F), jnp.float32).at[batch, local].set(x)
    valid = jnp.zeros((num_graphs, P), jnp.float32).at[batch, local].set(1.0)
    pool = (valid / jnp.maximum(counts, 1)[:, None].astype(jnp.float32)).reshape(
        num_graphs, 1, P)
    return xg, adj, eden, pool


def prepare_kernel_params(p):
    """Fold BatchNorm into the stacked per-head weights and build the block-diag att."""
    a = p['gamma'] * jax.lax.rsqrt(p['rvar'] + BN_EPS)       # [1,128]
    b = p['beta'] - p['rmean'] * a                           # [1,128]
    a = a.reshape(F_IN)
    b = b.reshape(1, F_IN)

    def stack(W):                                            # [H,F,HID] -> [F, H*HID]
        return jnp.transpose(W, (1, 0, 2)).reshape(F_IN, HT)

    Wl_s, Wr_s, We_s = stack(p['Wl']), stack(p['Wr']), stack(p['We'])
    bl_s, br_s = p['bl'].reshape(1, HT), p['br'].reshape(1, HT)

    # BN(eval): xn = a*x + b  =>  xn @ W + bias == x @ (a[:,None]*W) + (b @ W + bias)
    wl = (a[:, None] * Wl_s).astype(jnp.bfloat16)
    wr = (a[:, None] * Wr_s).astype(jnp.bfloat16)
    bl = bl_s + b @ Wl_s
    br = br_s + b @ Wr_s
    we = We_s.astype(jnp.bfloat16)

    # block-diagonal attention matrix: logits = leaky_relu(t) @ attbd -> [*, HEADS]
    rows = jnp.arange(HT)
    attbd = jnp.zeros((HT, HEADS), jnp.float32).at[rows, rows // HID].set(
        p['att'].reshape(HT))

    return dict(wl=wl, bl=bl, wr=wr, br=br, we=we, attbd=attbd,
                gatb=p['gatb'], wlin=p['Wlin'], blin=p['blin'])


def deorphann_forward(x, edge_index, edge_attr, batch, params, num_graphs):
    xg, adj, eden, pool = build_dense_batch(x, edge_index, edge_attr, batch, num_graphs)
    G, P, _ = xg.shape
    kp = prepare_kernel_params(params)

    x_b = xg.astype(jnp.bfloat16)                       # matmul operands in bf16
    ef_b = eden.reshape(G, P * P, F_IN).astype(jnp.bfloat16)
    adjf = adj.reshape(G, P * P, 1)

    out = pl.pallas_call(
        deorphann_kernel,
        out_shape=jax.ShapeDtypeStruct((G, 1, 2), jnp.float32),
        grid=(G,),
        in_specs=[
            pl.BlockSpec((1, P, F_IN), lambda g: (g, 0, 0)),       # x (bf16)
            pl.BlockSpec((1, P * P, 1), lambda g: (g, 0, 0)),      # adjacency mask (flat)
            pl.BlockSpec((1, P * P, F_IN), lambda g: (g, 0, 0)),   # edge features (bf16)
            pl.BlockSpec((1, 1, P), lambda g: (g, 0, 0)),          # mean-pool row
            pl.BlockSpec((F_IN, HT), lambda g: (0, 0)),            # Wl stacked (BN folded)
            pl.BlockSpec((1, HT), lambda g: (0, 0)),               # bl stacked
            pl.BlockSpec((F_IN, HT), lambda g: (0, 0)),            # Wr stacked (BN folded)
            pl.BlockSpec((1, HT), lambda g: (0, 0)),               # br stacked
            pl.BlockSpec((F_IN, HT), lambda g: (0, 0)),            # We stacked
            pl.BlockSpec((HT, HEADS), lambda g: (0, 0)),           # att (block-diagonal)
            pl.BlockSpec((1, HID), lambda g: (0, 0)),              # GAT bias
            pl.BlockSpec((HID, 2), lambda g: (0, 0)),              # Linear weight
            pl.BlockSpec((1, 2), lambda g: (0, 0)),                # Linear bias
        ],
        out_specs=pl.BlockSpec((1, 1, 2), lambda g: (g, 0, 0)),
        compiler_params=pltpu.CompilerParams(
            dimension_semantics=("parallel",),                     # megacore-shardable
        ),
    )(x_b, adjf, ef_b, pool,
      kp['wl'], kp['bl'], kp['wr'], kp['br'], kp['we'], kp['attbd'],
      kp['gatb'], kp['wlin'], kp['blin'])
    return out.reshape(G, 2)


def init_params(key):
    ks = jax.random.split(key, 13)
    def nrm(k, shape, scale=0.1):
        return scale * jax.random.normal(k, shape, jnp.float32)
    return dict(
        gamma=1.0 + nrm(ks[0], (1, F_IN)),
        beta=nrm(ks[1], (1, F_IN)),
        rmean=nrm(ks[2], (1, F_IN)),
        rvar=1.0 + 0.1 * jnp.abs(jax.random.normal(ks[3], (1, F_IN), jnp.float32)),
        Wl=nrm(ks[4], (HEADS, F_IN, HID)),   # lin_l weight ([in, out] per head)
        bl=nrm(ks[5], (HEADS, 1, HID)),
        Wr=nrm(ks[6], (HEADS, F_IN, HID)),   # lin_r weight
        br=nrm(ks[7], (HEADS, 1, HID)),
        We=nrm(ks[8], (HEADS, F_IN, HID)),   # lin_edge weight (bias=False)
        att=nrm(ks[9], (HEADS, 1, HID)),
        gatb=nrm(ks[10], (1, HID)),          # GATv2 output bias (concat=False)
        Wlin=nrm(ks[11], (HID, 2)),
        blin=nrm(ks[12], (1, 2)),
    )


def ref_forward(xg, adj, edense, pool, p):
    """Plain-JAX f32 reference of the same (unfused) math, for correctness checking."""
    a = p['gamma'] / jnp.sqrt(p['rvar'] + BN_EPS)
    xn = (xg - p['rmean']) * a + p['beta']
    xl = jnp.einsum('gpf,hfo->ghpo', xn, p['Wl']) + p['bl'][None]
    xr = jnp.einsum('gpf,hfo->ghpo', xn, p['Wr']) + p['br'][None]
    e = jnp.einsum('gdsf,hfo->ghdso', edense, p['We'])
    t = xr[:, :, :, None, :] + xl[:, :, None, :, :] + e
    t = jnp.where(t >= 0, t, NEG_SLOPE * t)
    s = jnp.sum(t * p['att'][None, :, None, :, :], axis=-1)        # [g,h,dst,src]
    s = jnp.where(adj[:, None] > 0, s, -1e30)
    m = jnp.max(s, axis=-1, keepdims=True)
    pr = jnp.exp(s - m) * adj[:, None]
    alpha = pr / jnp.maximum(jnp.sum(pr, axis=-1, keepdims=True), 1e-20)
    out = jnp.einsum('ghds,ghso->ghdo', alpha, xl)
    node = jnp.maximum(out.mean(axis=1) + p['gatb'][None], 0.0)    # [g,p,o]
    pooled = jnp.einsum('gqp,gpo->gqo', pool, node)[:, 0]          # [g,o]
    return pooled @ p['Wlin'] + p['blin']


if __name__ == "__main__":
    key = jax.random.PRNGKey(0)
    kx, ke, kp = jax.random.split(key, 3)

    G, npg = 2, 8                    # 2 graphs of 8 nodes
    N = G * npg
    x = jax.random.normal(kx, (N, F_IN), jnp.float32)

    # deterministic edge list: each node -> (i+1, i+2, i+3) within its graph
    src_l, dst_l = [], []
    for g in range(G):
        base = g * npg
        for i in range(npg):
            for d in (1, 2, 3):
                src_l.append(base + i)
                dst_l.append(base + (i + d) % npg)
    edge_index = jnp.array([src_l, dst_l], dtype=jnp.int32)          # [2, E]
    edge_attr = jax.random.normal(ke, (edge_index.shape[1], F_IN), jnp.float32)
    batch = jnp.repeat(jnp.arange(G, dtype=jnp.int32), npg)

    params = init_params(kp)

    out = deorphann_forward(x, edge_index, edge_attr, batch, params, G)
    out = jax.block_until_ready(out)

    # cross-check against the plain-JAX f32 reference
    xg, adj, eden, pool = build_dense_batch(x, edge_index, edge_attr, batch, G)
    ref = ref_forward(xg, adj, eden, pool, params)
    assert out.shape == (G, 2)
    assert bool(jnp.all(jnp.isfinite(out)))
    assert jnp.allclose(out, ref, atol=2e-2, rtol=2e-2), (out, ref)

    print("KERNEL_OK")
</pallas_src>

<mosaic_0001>
module attributes {stable_mosaic.version = 11 : i64} {
  func.func @deorphann_kernel(%arg0: i32, %arg1: memref<1x8x128xbf16, #tpu.memory_space<vmem>>, %arg2: memref<1x64x1xf32, #tpu.memory_space<vmem>>, %arg3: memref<1x64x128xbf16, #tpu.memory_space<vmem>>, %arg4: memref<1x1x8xf32, #tpu.memory_space<vmem>>, %arg5: memref<128x320xbf16, #tpu.memory_space<vmem>>, %arg6: memref<1x320xf32, #tpu.memory_space<vmem>>, %arg7: memref<128x320xbf16, #tpu.memory_space<vmem>>, %arg8: memref<1x320xf32, #tpu.memory_space<vmem>>, %arg9: memref<128x320xbf16, #tpu.memory_space<vmem>>, %arg10: memref<320x10xf32, #tpu.memory_space<vmem>>, %arg11: memref<1x32xf32, #tpu.memory_space<vmem>>, %arg12: memref<32x2xf32, #tpu.memory_space<vmem>>, %arg13: memref<1x2xf32, #tpu.memory_space<vmem>>, %arg14: memref<1x1x2xf32, #tpu.memory_space<vmem>>) attributes {dimension_semantics = [#tpu.dimension_semantics<parallel>], iteration_bounds = array<i64: 2>, scalar_prefetch = 0 : i64, scratch_operands = 0 : i64, tpu.core_type = #tpu.core_type<tc>, window_params = [{transform_indices = @transform_0, window_bounds = array<i64: 1, 8, 128>}, {transform_indices = @transform_1, window_bounds = array<i64: 1, 64, 1>}, {transform_indices = @transform_2, window_bounds = array<i64: 1, 64, 128>}, {transform_indices = @transform_3, window_bounds = array<i64: 1, 1, 8>}, {pipeline_mode = #tpu.pipeline_mode<synchronous>, transform_indices = @transform_4, window_bounds = array<i64: 128, 320>}, {pipeline_mode = #tpu.pipeline_mode<synchronous>, transform_indices = @transform_5, window_bounds = array<i64: 1, 320>}, {pipeline_mode = #tpu.pipeline_mode<synchronous>, transform_indices = @transform_6, window_bounds = array<i64: 128, 320>}, {pipeline_mode = #tpu.pipeline_mode<synchronous>, transform_indices = @transform_7, window_bounds = array<i64: 1, 320>}, {pipeline_mode = #tpu.pipeline_mode<synchronous>, transform_indices = @transform_8, window_bounds = array<i64: 128, 320>}, {pipeline_mode = #tpu.pipeline_mode<synchronous>, transform_indices = @transform_9, window_bounds = array<i64: 320, 10>}, {pipeline_mode = #tpu.pipeline_mode<synchronous>, transform_indices = @transform_10, window_bounds = array<i64: 1, 32>}, {pipeline_mode = #tpu.pipeline_mode<synchronous>, transform_indices = @transform_11, window_bounds = array<i64: 32, 2>}, {pipeline_mode = #tpu.pipeline_mode<synchronous>, transform_indices = @transform_12, window_bounds = array<i64: 1, 2>}, {transform_indices = @transform_13, window_bounds = array<i64: 1, 1, 2>}]} {
    %c0 = arith.constant 0 : index
    %c0_0 = arith.constant 0 : index
    %c0_1 = arith.constant 0 : index
    %0 = vector.load %arg1[%c0, %c0_0, %c0_1] : memref<1x8x128xbf16, #tpu.memory_space<vmem>>, vector<1x8x128xbf16>
    %1 = vector.shape_cast %0 : vector<1x8x128xbf16> to vector<8x128xbf16>
    %c0_2 = arith.constant 0 : index
    %c0_3 = arith.constant 0 : index
    %c0_4 = arith.constant 0 : index
    %2 = vector.load %arg2[%c0_2, %c0_3, %c0_4] : memref<1x64x1xf32, #tpu.memory_space<vmem>>, vector<1x64x1xf32>
    %3 = vector.shape_cast %2 : vector<1x64x1xf32> to vector<64x1xf32>
    %c0_5 = arith.constant 0 : index
    %c0_6 = arith.constant 0 : index
    %c0_7 = arith.constant 0 : index
    %4 = vector.load %arg3[%c0_5, %c0_6, %c0_7] : memref<1x64x128xbf16, #tpu.memory_space<vmem>>, vector<1x64x128xbf16>
    %5 = vector.shape_cast %4 : vector<1x64x128xbf16> to vector<64x128xbf16>
    %c0_8 = arith.constant 0 : index
    %c0_9 = arith.constant 0 : index
    %6 = vector.load %arg5[%c0_8, %c0_9] : memref<128x320xbf16, #tpu.memory_space<vmem>>, vector<128x320xbf16>
    %cst = arith.constant dense<0.000000e+00> : vector<8x320xf32>
    %7 = tpu.matmul %1, %6, %cst {dimension_numbers = #tpu.dot_dimension_numbers<[1], [0], [0], [1], [0, 0, 1, 1], [], []>} : vector<8x128xbf16>, vector<128x320xbf16>, vector<8x320xf32> -> vector<8x320xf32>
    %c0_10 = arith.constant 0 : index
    %c0_11 = arith.constant 0 : index
    %8 = vector.load %arg6[%c0_10, %c0_11] : memref<1x320xf32, #tpu.memory_space<vmem>>, vector<1x320xf32>
    %9 = vector.broadcast %8 : vector<1x320xf32> to vector<8x320xf32>
    %10 = arith.addf %7, %9 : vector<8x320xf32>
    %c0_12 = arith.constant 0 : index
    %c0_13 = arith.constant 0 : index
    %11 = vector.load %arg7[%c0_12, %c0_13] : memref<128x320xbf16, #tpu.memory_space<vmem>>, vector<128x320xbf16>
    %cst_14 = arith.constant dense<0.000000e+00> : vector<8x320xf32>
    %12 = tpu.matmul %1, %11, %cst_14 {dimension_numbers = #tpu.dot_dimension_numbers<[1], [0], [0], [1], [0, 0, 1, 1], [], []>} : vector<8x128xbf16>, vector<128x320xbf16>, vector<8x320xf32> -> vector<8x320xf32>
    %c0_15 = arith.constant 0 : index
    %c0_16 = arith.constant 0 : index
    %13 = vector.load %arg8[%c0_15, %c0_16] : memref<1x320xf32, #tpu.memory_space<vmem>>, vector<1x320xf32>
    %14 = vector.broadcast %13 : vector<1x320xf32> to vector<8x320xf32>
    %15 = arith.addf %12, %14 : vector<8x320xf32>
    %c0_17 = arith.constant 0 : index
    %c0_18 = arith.constant 0 : index
    %16 = vector.load %arg9[%c0_17, %c0_18] : memref<128x320xbf16, #tpu.memory_space<vmem>>, vector<128x320xbf16>
    %cst_19 = arith.constant dense<0.000000e+00> : vector<64x320xf32>
    %17 = tpu.matmul %5, %16, %cst_19 {dimension_numbers = #tpu.dot_dimension_numbers<[1], [0], [0], [1], [0, 0, 1, 1], [], []>} : vector<64x128xbf16>, vector<128x320xbf16>, vector<64x320xf32> -> vector<64x320xf32>
    %18 = vector.shape_cast %17 : vector<64x320xf32> to vector<8x8x320xf32>
    %19 = vector.shape_cast %15 : vector<8x320xf32> to vector<8x1x320xf32>
    %20 = vector.broadcast %19 : vector<8x1x320xf32> to vector<8x8x320xf32>
    %21 = arith.addf %18, %20 : vector<8x8x320xf32>
    %22 = vector.shape_cast %10 : vector<8x320xf32> to vector<1x8x320xf32>
    %23 = vector.broadcast %22 : vector<1x8x320xf32> to vector<8x8x320xf32>
    %24 = arith.addf %21, %23 : vector<8x8x320xf32>
    %cst_20 = arith.constant 0.000000e+00 : f32
    %25 = vector.broadcast %cst_20 : f32 to vector<8x8x320xf32>
    %26 = arith.cmpf oge, %24, %25 : vector<8x8x320xf32>
    %cst_21 = arith.constant 2.000000e-01 : f32
    %27 = vector.broadcast %cst_21 : f32 to vector<8x8x320xf32>
    %28 = arith.mulf %27, %24 : vector<8x8x320xf32>
    %29 = arith.select %26, %24, %28 : vector<8x8x320xi1>, vector<8x8x320xf32>
    %30 = vector.shape_cast %29 : vector<8x8x320xf32> to vector<64x320xf32>
    %c0_22 = arith.constant 0 : index
    %c0_23 = arith.constant 0 : index
    %31 = vector.load %arg10[%c0_22, %c0_23] : memref<320x10xf32, #tpu.memory_space<vmem>>, vector<320x10xf32>
    %cst_24 = arith.constant dense<0.000000e+00> : vector<64x10xf32>
    %32 = tpu.matmul %30, %31, %cst_24 {dimension_numbers = #tpu.dot_dimension_numbers<[1], [0], [0], [1], [0, 0, 1, 1], [], []>} : vector<64x320xf32>, vector<320x10xf32>, vector<64x10xf32> -> vector<64x10xf32>
    %33 = vector.shape_cast %3 : vector<64x1xf32> to vector<8x8x1xf32>
    %cst_25 = arith.constant 0.000000e+00 : f32
    %34 = vector.broadcast %cst_25 : f32 to vector<8x8x1xf32>
    %35 = arith.cmpf ogt, %33, %34 : vector<8x8x1xf32>
    %36 = vector.shape_cast %32 : vector<64x10xf32> to vector<8x8x10xf32>
    %cst_26 = arith.constant -1.000000e+30 : f32
    %37 = vector.shape_cast %35 : vector<8x8x1xi1> to vector<8x8x1xi1>
    %38 = vector.broadcast %37 : vector<8x8x1xi1> to vector<8x8x10xi1>
    %39 = vector.broadcast %cst_26 : f32 to vector<8x8x10xf32>
    %40 = arith.select %38, %36, %39 : vector<8x8x10xi1>, vector<8x8x10xf32>
    %cst_27 = arith.constant dense<0xFF800000> : vector<8x10xf32>
    %41 = vector.multi_reduction <maximumf>, %40, %cst_27 [1] : vector<8x8x10xf32> to vector<8x10xf32>
    %42 = vector.shape_cast %41 : vector<8x10xf32> to vector<8x1x10xf32>
    %43 = vector.broadcast %42 : vector<8x1x10xf32> to vector<8x8x10xf32>
    %44 = arith.subf %40, %43 : vector<8x8x10xf32>
    %45 = math.exp %44 : vector<8x8x10xf32>
    %46 = vector.broadcast %33 : vector<8x8x1xf32> to vector<8x8x10xf32>
    %47 = arith.mulf %45, %46 : vector<8x8x10xf32>
    %cst_28 = arith.constant dense<0.000000e+00> : vector<8x10xf32>
    %48 = vector.multi_reduction <add>, %47, %cst_28 [1] : vector<8x8x10xf32> to vector<8x10xf32>
    %49 = vector.shape_cast %48 : vector<8x10xf32> to vector<8x1x10xf32>
    %cst_29 = arith.constant 9.99999968E-21 : f32
    %50 = vector.broadcast %cst_29 : f32 to vector<8x1x10xf32>
    %51 = arith.maximumf %49, %50 : vector<8x1x10xf32>
    %cst_30 = arith.constant 1.000000e+01 : f32
    %52 = vector.broadcast %cst_30 : f32 to vector<8x1x10xf32>
    %53 = arith.mulf %51, %52 : vector<8x1x10xf32>
    %54 = tpu.reciprocal %53 {approx = true} : vector<8x1x10xf32> -> vector<8x1x10xf32>
    %55 = vector.broadcast %54 : vector<8x1x10xf32> to vector<8x8x10xf32>
    %56 = arith.mulf %47, %55 : vector<8x8x10xf32>
    %cst_31 = arith.constant 0.000000e+00 : f32
    %57 = vector.broadcast %cst_31 : f32 to vector<8x32xf32>
    %58 = vector.extract_strided_slice %56 {offsets = [0, 0, 0], sizes = [8, 8, 1], strides = [1, 1, 1]} : vector<8x8x10xf32> to vector<8x8x1xf32>
    %59 = vector.extract_strided_slice %10 {offsets = [0, 0], sizes = [8, 32], strides = [1, 1]} : vector<8x320xf32> to vector<8x32xf32>
    %60 = vector.shape_cast %59 : vector<8x32xf32> to vector<1x8x32xf32>
    %61 = vector.broadcast %58 : vector<8x8x1xf32> to vector<8x8x32xf32>
    %62 = vector.broadcast %60 : vector<1x8x32xf32> to vector<8x8x32xf32>
    %63 = arith.mulf %61, %62 : vector<8x8x32xf32>
    %cst_32 = arith.constant dense<0.000000e+00> : vector<8x32xf32>
    %64 = vector.multi_reduction <add>, %63, %cst_32 [1] : vector<8x8x32xf32> to vector<8x32xf32>
    %65 = arith.addf %57, %64 : vector<8x32xf32>
    %66 = vector.extract_strided_slice %56 {offsets = [0, 0, 1], sizes = [8, 8, 1], strides = [1, 1, 1]} : vector<8x8x10xf32> to vector<8x8x1xf32>
    %67 = vector.extract_strided_slice %10 {offsets = [0, 32], sizes = [8, 32], strides = [1, 1]} : vector<8x320xf32> to vector<8x32xf32>
    %68 = vector.shape_cast %67 : vector<8x32xf32> to vector<1x8x32xf32>
    %69 = vector.broadcast %66 : vector<8x8x1xf32> to vector<8x8x32xf32>
    %70 = vector.broadcast %68 : vector<1x8x32xf32> to vector<8x8x32xf32>
    %71 = arith.mulf %69, %70 : vector<8x8x32xf32>
    %cst_33 = arith.constant dense<0.000000e+00> : vector<8x32xf32>
    %72 = vector.multi_reduction <add>, %71, %cst_33 [1] : vector<8x8x32xf32> to vector<8x32xf32>
    %73 = arith.addf %65, %72 : vector<8x32xf32>
    %74 = vector.extract_strided_slice %56 {offsets = [0, 0, 2], sizes = [8, 8, 1], strides = [1, 1, 1]} : vector<8x8x10xf32> to vector<8x8x1xf32>
    %75 = vector.extract_strided_slice %10 {offsets = [0, 64], sizes = [8, 32], strides = [1, 1]} : vector<8x320xf32> to vector<8x32xf32>
    %76 = vector.shape_cast %75 : vector<8x32xf32> to vector<1x8x32xf32>
    %77 = vector.broadcast %74 : vector<8x8x1xf32> to vector<8x8x32xf32>
    %78 = vector.broadcast %76 : vector<1x8x32xf32> to vector<8x8x32xf32>
    %79 = arith.mulf %77, %78 : vector<8x8x32xf32>
    %cst_34 = arith.constant dense<0.000000e+00> : vector<8x32xf32>
    %80 = vector.multi_reduction <add>, %79, %cst_34 [1] : vector<8x8x32xf32> to vector<8x32xf32>
    %81 = arith.addf %73, %80 : vector<8x32xf32>
    %82 = vector.extract_strided_slice %56 {offsets = [0, 0, 3], sizes = [8, 8, 1], strides = [1, 1, 1]} : vector<8x8x10xf32> to vector<8x8x1xf32>
    %83 = vector.extract_strided_slice %10 {offsets = [0, 96], sizes = [8, 32], strides = [1, 1]} : vector<8x320xf32> to vector<8x32xf32>
    %84 = vector.shape_cast %83 : vector<8x32xf32> to vector<1x8x32xf32>
    %85 = vector.broadcast %82 : vector<8x8x1xf32> to vector<8x8x32xf32>
    %86 = vector.broadcast %84 : vector<1x8x32xf32> to vector<8x8x32xf32>
    %87 = arith.mulf %85, %86 : vector<8x8x32xf32>
    %cst_35 = arith.constant dense<0.000000e+00> : vector<8x32xf32>
    %88 = vector.multi_reduction <add>, %87, %cst_35 [1] : vector<8x8x32xf32> to vector<8x32xf32>
    %89 = arith.addf %81, %88 : vector<8x32xf32>
    %90 = vector.extract_strided_slice %56 {offsets = [0, 0, 4], sizes = [8, 8, 1], strides = [1, 1, 1]} : vector<8x8x10xf32> to vector<8x8x1xf32>
    %91 = vector.extract_strided_slice %10 {offsets = [0, 128], sizes = [8, 32], strides = [1, 1]} : vector<8x320xf32> to vector<8x32xf32>
    %92 = vector.shape_cast %91 : vector<8x32xf32> to vector<1x8x32xf32>
    %93 = vector.broadcast %90 : vector<8x8x1xf32> to vector<8x8x32xf32>
    %94 = vector.broadcast %92 : vector<1x8x32xf32> to vector<8x8x32xf32>
    %95 = arith.mulf %93, %94 : vector<8x8x32xf32>
    %cst_36 = arith.constant dense<0.000000e+00> : vector<8x32xf32>
    %96 = vector.multi_reduction <add>, %95, %cst_36 [1] : vector<8x8x32xf32> to vector<8x32xf32>
    %97 = arith.addf %89, %96 : vector<8x32xf32>
    %98 = vector.extract_strided_slice %56 {offsets = [0, 0, 5], sizes = [8, 8, 1], strides = [1, 1, 1]} : vector<8x8x10xf32> to vector<8x8x1xf32>
    %99 = vector.extract_strided_slice %10 {offsets = [0, 160], sizes = [8, 32], strides = [1, 1]} : vector<8x320xf32> to vector<8x32xf32>
    %100 = vector.shape_cast %99 : vector<8x32xf32> to vector<1x8x32xf32>
    %101 = vector.broadcast %98 : vector<8x8x1xf32> to vector<8x8x32xf32>
    %102 = vector.broadcast %100 : vector<1x8x32xf32> to vector<8x8x32xf32>
    %103 = arith.mulf %101, %102 : vector<8x8x32xf32>
    %cst_37 = arith.constant dense<0.000000e+00> : vector<8x32xf32>
    %104 = vector.multi_reduction <add>, %103, %cst_37 [1] : vector<8x8x32xf32> to vector<8x32xf32>
    %105 = arith.addf %97, %104 : vector<8x32xf32>
    %106 = vector.extract_strided_slice %56 {offsets = [0, 0, 6], sizes = [8, 8, 1], strides = [1, 1, 1]} : vector<8x8x10xf32> to vector<8x8x1xf32>
    %107 = vector.extract_strided_slice %10 {offsets = [0, 192], sizes = [8, 32], strides = [1, 1]} : vector<8x320xf32> to vector<8x32xf32>
    %108 = vector.shape_cast %107 : vector<8x32xf32> to vector<1x8x32xf32>
    %109 = vector.broadcast %106 : vector<8x8x1xf32> to vector<8x8x32xf32>
    %110 = vector.broadcast %108 : vector<1x8x32xf32> to vector<8x8x32xf32>
    %111 = arith.mulf %109, %110 : vector<8x8x32xf32>
    %cst_38 = arith.constant dense<0.000000e+00> : vector<8x32xf32>
    %112 = vector.multi_reduction <add>, %111, %cst_38 [1] : vector<8x8x32xf32> to vector<8x32xf32>
    %113 = arith.addf %105, %112 : vector<8x32xf32>
    %114 = vector.extract_strided_slice %56 {offsets = [0, 0, 7], sizes = [8, 8, 1], strides = [1, 1, 1]} : vector<8x8x10xf32> to vector<8x8x1xf32>
    %115 = vector.extract_strided_slice %10 {offsets = [0, 224], sizes = [8, 32], strides = [1, 1]} : vector<8x320xf32> to vector<8x32xf32>
    %116 = vector.shape_cast %115 : vector<8x32xf32> to vector<1x8x32xf32>
    %117 = vector.broadcast %114 : vector<8x8x1xf32> to vector<8x8x32xf32>
    %118 = vector.broadcast %116 : vector<1x8x32xf32> to vector<8x8x32xf32>
    %119 = arith.mulf %117, %118 : vector<8x8x32xf32>
    %cst_39 = arith.constant dense<0.000000e+00> : vector<8x32xf32>
    %120 = vector.multi_reduction <add>, %119, %cst_39 [1] : vector<8x8x32xf32> to vector<8x32xf32>
    %121 = arith.addf %113, %120 : vector<8x32xf32>
    %122 = vector.extract_strided_slice %56 {offsets = [0, 0, 8], sizes = [8, 8, 1], strides = [1, 1, 1]} : vector<8x8x10xf32> to vector<8x8x1xf32>
    %123 = vector.extract_strided_slice %10 {offsets = [0, 256], sizes = [8, 32], strides = [1, 1]} : vector<8x320xf32> to vector<8x32xf32>
    %124 = vector.shape_cast %123 : vector<8x32xf32> to vector<1x8x32xf32>
    %125 = vector.broadcast %122 : vector<8x8x1xf32> to vector<8x8x32xf32>
    %126 = vector.broadcast %124 : vector<1x8x32xf32> to vector<8x8x32xf32>
    %127 = arith.mulf %125, %126 : vector<8x8x32xf32>
    %cst_40 = arith.constant dense<0.000000e+00> : vector<8x32xf32>
    %128 = vector.multi_reduction <add>, %127, %cst_40 [1] : vector<8x8x32xf32> to vector<8x32xf32>
    %129 = arith.addf %121, %128 : vector<8x32xf32>
    %130 = vector.extract_strided_slice %56 {offsets = [0, 0, 9], sizes = [8, 8, 1], strides = [1, 1, 1]} : vector<8x8x10xf32> to vector<8x8x1xf32>
    %131 = vector.extract_strided_slice %10 {offsets = [0, 288], sizes = [8, 32], strides = [1, 1]} : vector<8x320xf32> to vector<8x32xf32>
    %132 = vector.shape_cast %131 : vector<8x32xf32> to vector<1x8x32xf32>
    %133 = vector.broadcast %130 : vector<8x8x1xf32> to vector<8x8x32xf32>
    %134 = vector.broadcast %132 : vector<1x8x32xf32> to vector<8x8x32xf32>
    %135 = arith.mulf %133, %134 : vector<8x8x32xf32>
    %cst_41 = arith.constant dense<0.000000e+00> : vector<8x32xf32>
    %136 = vector.multi_reduction <add>, %135, %cst_41 [1] : vector<8x8x32xf32> to vector<8x32xf32>
    %137 = arith.addf %129, %136 : vector<8x32xf32>
    %c0_42 = arith.constant 0 : index
    %c0_43 = arith.constant 0 : index
    %138 = vector.load %arg11[%c0_42, %c0_43] : memref<1x32xf32, #tpu.memory_space<vmem>>, vector<1x32xf32>
    %139 = vector.broadcast %138 : vector<1x32xf32> to vector<8x32xf32>
    %140 = arith.addf %137, %139 : vector<8x32xf32>
    %cst_44 = arith.constant 0.000000e+00 : f32
    %141 = vector.broadcast %cst_44 : f32 to vector<8x32xf32>
    %142 = arith.maximumf %140, %141 : vector<8x32xf32>
    %c0_45 = arith.constant 0 : index
    %c0_46 = arith.constant 0 : index
    %c0_47 = arith.constant 0 : index
    %143 = vector.load %arg4[%c0_45, %c0_46, %c0_47] : memref<1x1x8xf32, #tpu.memory_space<vmem>>, vector<1x1x8xf32>
    %144 = vector.shape_cast %143 : vector<1x1x8xf32> to vector<1x8xf32>
    %cst_48 = arith.constant dense<0.000000e+00> : vector<1x32xf32>
    %145 = tpu.matmul %144, %142, %cst_48 {dimension_numbers = #tpu.dot_dimension_numbers<[1], [0], [0], [1], [0, 0, 1, 1], [], []>} : vector<1x8xf32>, vector<8x32xf32>, vector<1x32xf32> -> vector<1x32xf32>
    %c0_49 = arith.constant 0 : index
    %c0_50 = arith.constant 0 : index
    %146 = vector.load %arg12[%c0_49, %c0_50] : memref<32x2xf32, #tpu.memory_space<vmem>>, vector<32x2xf32>
    %cst_51 = arith.constant dense<0.000000e+00> : vector<1x2xf32>
    %147 = tpu.matmul %145, %146, %cst_51 {dimension_numbers = #tpu.dot_dimension_numbers<[1], [0], [0], [1], [0, 0, 1, 1], [], []>} : vector<1x32xf32>, vector<32x2xf32>, vector<1x2xf32> -> vector<1x2xf32>
    %c0_52 = arith.constant 0 : index
    %c0_53 = arith.constant 0 : index
    %148 = vector.load %arg13[%c0_52, %c0_53] : memref<1x2xf32, #tpu.memory_space<vmem>>, vector<1x2xf32>
    %149 = arith.addf %147, %148 : vector<1x2xf32>
    %c0_54 = arith.constant 0 : index
    %c0_55 = arith.constant 0 : index
    %c0_56 = arith.constant 0 : index
    %150 = vector.load %arg14[%c0_54, %c0_55, %c0_56] : memref<1x1x2xf32, #tpu.memory_space<vmem>>, vector<1x1x2xf32>
    %151 = vector.shape_cast %150 : vector<1x1x2xf32> to vector<1x2xf32>
    %152 = vector.shape_cast %149 : vector<1x2xf32> to vector<1x1x2xf32>
    tpu.vector_store %arg14[%c0_54, %c0_55, %c0_56], %152 {strides = array<i32>} : memref<1x1x2xf32, #tpu.memory_space<vmem>>, vector<1x1x2xf32>,
    return
  }
  func.func @transform_0(%arg0: i32) -> (i32, i32, i32) {
    %c0_i32 = arith.constant 0 : i32
    %c0_i32_0 = arith.constant 0 : i32
    %c0_i32_1 = arith.constant 0 : i32
    return %arg0, %c0_i32, %c0_i32_0 : i32, i32, i32
  }
  func.func @transform_1(%arg0: i32) -> (i32, i32, i32) {
    %c0_i32 = arith.constant 0 : i32
    %c0_i32_0 = arith.constant 0 : i32
    %c0_i32_1 = arith.constant 0 : i32
    return %arg0, %c0_i32, %c0_i32_0 : i32, i32, i32
  }
  func.func @transform_2(%arg0: i32) -> (i32, i32, i32) {
    %c0_i32 = arith.constant 0 : i32
    %c0_i32_0 = arith.constant 0 : i32
    %c0_i32_1 = arith.constant 0 : i32
    return %arg0, %c0_i32, %c0_i32_0 : i32, i32, i32
  }
  func.func @transform_3(%arg0: i32) -> (i32, i32, i32) {
    %c0_i32 = arith.constant 0 : i32
    %c0_i32_0 = arith.constant 0 : i32
    %c0_i32_1 = arith.constant 0 : i32
    return %arg0, %c0_i32, %c0_i32_0 : i32, i32, i32
  }
  func.func @transform_4(%arg0: i32) -> (i32, i32) {
    %c0_i32 = arith.constant 0 : i32
    %c0_i32_0 = arith.constant 0 : i32
    %c0_i32_1 = arith.constant 0 : i32
    return %c0_i32, %c0_i32_0 : i32, i32
  }
  func.func @transform_5(%arg0: i32) -> (i32, i32) {
    %c0_i32 = arith.constant 0 : i32
    %c0_i32_0 = arith.constant 0 : i32
    %c0_i32_1 = arith.constant 0 : i32
    return %c0_i32, %c0_i32_0 : i32, i32
  }
  func.func @transform_6(%arg0: i32) -> (i32, i32) {
    %c0_i32 = arith.constant 0 : i32
    %c0_i32_0 = arith.constant 0 : i32
    %c0_i32_1 = arith.constant 0 : i32
    return %c0_i32, %c0_i32_0 : i32, i32
  }
  func.func @transform_7(%arg0: i32) -> (i32, i32) {
    %c0_i32 = arith.constant 0 : i32
    %c0_i32_0 = arith.constant 0 : i32
    %c0_i32_1 = arith.constant 0 : i32
    return %c0_i32, %c0_i32_0 : i32, i32
  }
  func.func @transform_8(%arg0: i32) -> (i32, i32) {
    %c0_i32 = arith.constant 0 : i32
    %c0_i32_0 = arith.constant 0 : i32
    %c0_i32_1 = arith.constant 0 : i32
    return %c0_i32, %c0_i32_0 : i32, i32
  }
  func.func @transform_9(%arg0: i32) -> (i32, i32) {
    %c0_i32 = arith.constant 0 : i32
    %c0_i32_0 = arith.constant 0 : i32
    %c0_i32_1 = arith.constant 0 : i32
    return %c0_i32, %c0_i32_0 : i32, i32
  }
  func.func @transform_10(%arg0: i32) -> (i32, i32) {
    %c0_i32 = arith.constant 0 : i32
    %c0_i32_0 = arith.constant 0 : i32
    %c0_i32_1 = arith.constant 0 : i32
    return %c0_i32, %c0_i32_0 : i32, i32
  }
  func.func @transform_11(%arg0: i32) -> (i32, i32) {
    %c0_i32 = arith.constant 0 : i32
    %c0_i32_0 = arith.constant 0 : i32
    %c0_i32_1 = arith.constant 0 : i32
    return %c0_i32, %c0_i32_0 : i32, i32
  }
  func.func @transform_12(%arg0: i32) -> (i32, i32) {
    %c0_i32 = arith.constant 0 : i32
    %c0_i32_0 = arith.constant 0 : i32
    %c0_i32_1 = arith.constant 0 : i32
    return %c0_i32, %c0_i32_0 : i32, i32
  }
  func.func @transform_13(%arg0: i32) -> (i32, i32, i32) {
    %c0_i32 = arith.constant 0 : i32
    %c0_i32_0 = arith.constant 0 : i32
    %c0_i32_1 = arith.constant 0 : i32
    return %arg0, %c0_i32, %c0_i32_0 : i32, i32, i32
  }
}

</mosaic_0001>

<llo_original>
// kernel: tpu_custom_call.1
$region0: #{tpu_custom_call.1}
  #allocation0 [shape = 'u32[]', space=smem, size = 0x4, offset = 0x4, fixed_abs, tag = 'smem constant byte address 0x4 - core index']
  #allocation1 [shape = 'u32[144,128]{1,0:T(1,128)}', space=vmem, size = 0x12000, scoped, tag = 'internal scratch']
  %s0 = inlined_call_operand.vmem [shape: bf16[2,8,128], index: 0, kind: input, shape index: {}]
  %s1 = inlined_call_operand.vmem [shape: f32[2,64,1], index: 1, kind: input, shape index: {}]
  %s2 = inlined_call_operand.vmem [shape: bf16[2,64,128], index: 2, kind: input, shape index: {}]
  %s3 = inlined_call_operand.vmem [shape: f32[2,1,8], index: 3, kind: input, shape index: {}]
  %s4 = inlined_call_operand.vmem [shape: bf16[128,320], index: 4, kind: input, shape index: {}]
  %s5 = inlined_call_operand.vmem [shape: f32[1,320], index: 5, kind: input, shape index: {}]
  %s6 = inlined_call_operand.vmem [shape: bf16[128,320], index: 6, kind: input, shape index: {}]
  %s7 = inlined_call_operand.vmem [shape: f32[1,320], index: 7, kind: input, shape index: {}]
  %s8 = inlined_call_operand.vmem [shape: bf16[128,320], index: 8, kind: input, shape index: {}]
  %s9 = inlined_call_operand.vmem [shape: f32[320,10], index: 9, kind: input, shape index: {}]
  %s10 = inlined_call_operand.vmem [shape: f32[1,32], index: 10, kind: input, shape index: {}]
  %s11 = inlined_call_operand.vmem [shape: f32[32,2], index: 11, kind: input, shape index: {}]
  %s12 = inlined_call_operand.vmem [shape: f32[1,2], index: 12, kind: input, shape index: {}]
  %s13 = inlined_call_operand.hbm [shape: f32[2,1,2], index: 13, kind: output, shape index: {}]
  %s14 = sld [smem:[#allocation0]]
  $region85: #{tpu_custom_call.1} parent=0
    _
  %s16 = ssub.s32 1, %s14
  %s17 = scalar_select 0, %s16, %s14
  $region1: #{tpu_custom_call.1} parent=0
    #allocation2 [shape = 'u8[1024]{0}', space=vmem, size = 0x400, scoped, tag = 'output window, operand 0']
    #allocation3 [shape = 's32[2]{0}', space=sflag, size = 0x8, scoped, tag = 'scoped memory for tpu_custom_call.1']
    %18 = vsyncpa [#allocation3], 0
    %s19 = scalar_lea.sflag [#allocation3], 1
    %20 = vsyncpa %s19, 0
    loop: start=0, step=1, limit=4
    $region2: #{tpu_custom_call.1} parent=1 // loop_pre_header
      _
    $region3: #{tpu_custom_call.1} parent=1 // loop_header
      %s22 = sphi 0, %s26
      %p23 = scmp.ge.s32.totalorder %s22, 4
      %s32 = sphi 0, %s34
      %s35 = sphi 0, %s32
      %s36 = sphi 0, %s35
      %s52 = sphi 0, %s36
      %s58 = sphi 0, %s60
      %s61 = sphi 0, %s58
      %s62 = sphi 0, %s61
      %s78 = sphi 0, %s62
      %s84 = sphi 0, %s86
      %s87 = sphi 0, %s84
      %s88 = sphi 0, %s87
      %s104 = sphi 0, %s88
      %s110 = sphi 0, %s112
      %s113 = sphi 0, %s110
      %s114 = sphi 0, %s113
      %s130 = sphi 0, %s114
      %s134 = sphi 0, %s134
      %s136 = sphi 0, %s134
      %s137 = sphi 0, %s136
      %s151 = sphi 0, %s137
      %s155 = sphi 0, %s155
      %s157 = sphi 0, %s155
      %s158 = sphi 0, %s157
      %s172 = sphi 0, %s158
      %s176 = sphi 0, %s176
      %s178 = sphi 0, %s176
      %s179 = sphi 0, %s178
      %s193 = sphi 0, %s179
      %s197 = sphi 0, %s197
      %s199 = sphi 0, %s197
      %s200 = sphi 0, %s199
      %s214 = sphi 0, %s200
      %s218 = sphi 0, %s218
      %s220 = sphi 0, %s218
      %s221 = sphi 0, %s220
      %s235 = sphi 0, %s221
      %s239 = sphi 0, %s239
      %s241 = sphi 0, %s239
      %s242 = sphi 0, %s241
      %s256 = sphi 0, %s242
      %s260 = sphi 0, %s260
      %s262 = sphi 0, %s260
      %s263 = sphi 0, %s262
      %s277 = sphi 0, %s263
      %s281 = sphi 0, %s281
      %s283 = sphi 0, %s281
      %s284 = sphi 0, %s283
      %s298 = sphi 0, %s284
      %s302 = sphi 0, %s302
      %s304 = sphi 0, %s302
      %s305 = sphi 0, %s304
      %s319 = sphi 0, %s305
      %s325 = sphi 0, %s327
      %s328 = sphi 0, %s325
      %s329 = sphi 0, %s328
      %s345 = sphi 0, %s329
    $region4: #{tpu_custom_call.1} parent=1 // loop_header_branch
      %25 = sbr.rel (%p23) target = $region8
    $region5: #{tpu_custom_call.1} parent=1 // loop_body
      %s27 = ssub.s32 %s22, 1
      %s28 = ssub.s32 %s22, 2
      %s29 = sadd.s32 %s22, 1
      %s30 = ssub.s32 %s22, %s29
      %p31 = scmp.eq.s32.totalorder %s30, 0
      %s33 = sadd.s32 %s32, 1
      %s34 = scalar_select %p31, %s32, %s33
      %p37 = pneg %p31
      %p38 = scmp.eq.s32.totalorder %s22, 1
      %p39 = por %p37, %p38
      %p40 = scmp.ne.s32.totalorder %s32, %s35
      %p41 = scmp.eq.s32.totalorder %s22, 0
      %p42 = por %p40, %p41
      %p43 = scmp.ne.s32.totalorder %s32, %s35
      %p44 = scmp.eq.s32.totalorder %s27, 1
      %p45 = por %p43, %p44
      %p46 = scmp.ne.s32.totalorder %s35, %s36
      %p47 = scmp.eq.s32.totalorder %s27, 0
      %p48 = por %p46, %p47
      %p49 = scmp.ne.s32.totalorder %s35, %s36
      %p50 = scmp.eq.s32.totalorder %s28, 1
      %p51 = por %p49, %p50
      %p53 = scmp.ne.s32.totalorder %s36, %s52
      %p54 = scmp.eq.s32.totalorder %s28, 0
      %p55 = por %p53, %p54
      %s56 = ssub.s32 %s22, %s29
      %p57 = scmp.eq.s32.totalorder %s56, 0
      %s59 = sadd.s32 %s58, 1
      %s60 = scalar_select %p57, %s58, %s59
      %p63 = pneg %p57
      %p64 = scmp.eq.s32.totalorder %s22, 1
      %p65 = por %p63, %p64
      %p66 = scmp.ne.s32.totalorder %s58, %s61
      %p67 = scmp.eq.s32.totalorder %s22, 0
      %p68 = por %p66, %p67
      %p69 = scmp.ne.s32.totalorder %s58, %s61
      %p70 = scmp.eq.s32.totalorder %s27, 1
      %p71 = por %p69, %p70
      %p72 = scmp.ne.s32.totalorder %s61, %s62
      %p73 = scmp.eq.s32.totalorder %s27, 0
      %p74 = por %p72, %p73
      %p75 = scmp.ne.s32.totalorder %s61, %s62
      %p76 = scmp.eq.s32.totalorder %s28, 1
      %p77 = por %p75, %p76
      %p79 = scmp.ne.s32.totalorder %s62, %s78
      %p80 = scmp.eq.s32.totalorder %s28, 0
      %p81 = por %p79, %p80
      %s82 = ssub.s32 %s22, %s29
      %p83 = scmp.eq.s32.totalorder %s82, 0
      %s85 = sadd.s32 %s84, 1
      %s86 = scalar_select %p83, %s84, %s85
      %p89 = pneg %p83
      %p90 = scmp.eq.s32.totalorder %s22, 1
      %p91 = por %p89, %p90
      %p92 = scmp.ne.s32.totalorder %s84, %s87
      %p93 = scmp.eq.s32.totalorder %s22, 0
      %p94 = por %p92, %p93
      %p95 = scmp.ne.s32.totalorder %s84, %s87
      %p96 = scmp.eq.s32.totalorder %s27, 1
      %p97 = por %p95, %p96
      %p98 = scmp.ne.s32.totalorder %s87, %s88
      %p99 = scmp.eq.s32.totalorder %s27, 0
      %p100 = por %p98, %p99
      %p101 = scmp.ne.s32.totalorder %s87, %s88
      %p102 = scmp.eq.s32.totalorder %s28, 1
      %p103 = por %p101, %p102
      %p105 = scmp.ne.s32.totalorder %s88, %s104
      %p106 = scmp.eq.s32.totalorder %s28, 0
      %p107 = por %p105, %p106
      %s108 = ssub.s32 %s22, %s29
      %p109 = scmp.eq.s32.totalorder %s108, 0
      %s111 = sadd.s32 %s110, 1
      %s112 = scalar_select %p109, %s110, %s111
      %p115 = pneg %p109
      %p116 = scmp.eq.s32.totalorder %s22, 1
      %p117 = por %p115, %p116
      %p118 = scmp.ne.s32.totalorder %s110, %s113
      %p119 = scmp.eq.s32.totalorder %s22, 0
      %p120 = por %p118, %p119
      %p121 = scmp.ne.s32.totalorder %s110, %s113
      %p122 = scmp.eq.s32.totalorder %s27, 1
      %p123 = por %p121, %p122
      %p124 = scmp.ne.s32.totalorder %s113, %s114
      %p125 = scmp.eq.s32.totalorder %s27, 0
      %p126 = por %p124, %p125
      %p127 = scmp.ne.s32.totalorder %s113, %s114
      %p128 = scmp.eq.s32.totalorder %s28, 1
      %p129 = por %p127, %p128
      %p131 = scmp.ne.s32.totalorder %s114, %s130
      %p132 = scmp.eq.s32.totalorder %s28, 0
      %p133 = por %p131, %p132
      %s135 = sadd.s32 %s134, 1
      %p138 = scmp.eq.s32.totalorder %s22, 1
      %p139 = scmp.ne.s32.totalorder %s134, %s136
      %p140 = scmp.eq.s32.totalorder %s22, 0
      %p141 = por %p139, %p140
      %p142 = scmp.ne.s32.totalorder %s134, %s136
      %p143 = scmp.eq.s32.totalorder %s27, 1
      %p144 = por %p142, %p143
      %p145 = scmp.ne.s32.totalorder %s136, %s137
      %p146 = scmp.eq.s32.totalorder %s27, 0
      %p147 = por %p145, %p146
      %p148 = scmp.ne.s32.totalorder %s136, %s137
      %p149 = scmp.eq.s32.totalorder %s28, 1
      %p150 = por %p148, %p149
      %p152 = scmp.ne.s32.totalorder %s137, %s151
      %p153 = scmp.eq.s32.totalorder %s28, 0
      %p154 = por %p152, %p153
      %s156 = sadd.s32 %s155, 1
      %p159 = scmp.eq.s32.totalorder %s22, 1
      %p160 = scmp.ne.s32.totalorder %s155, %s157
      %p161 = scmp.eq.s32.totalorder %s22, 0
      %p162 = por %p160, %p161
      %p163 = scmp.ne.s32.totalorder %s155, %s157
      %p164 = scmp.eq.s32.totalorder %s27, 1
      %p165 = por %p163, %p164
      %p166 = scmp.ne.s32.totalorder %s157, %s158
      %p167 = scmp.eq.s32.totalorder %s27, 0
      %p168 = por %p166, %p167
      %p169 = scmp.ne.s32.totalorder %s157, %s158
      %p170 = scmp.eq.s32.totalorder %s28, 1
      %p171 = por %p169, %p170
      %p173 = scmp.ne.s32.totalorder %s158, %s172
      %p174 = scmp.eq.s32.totalorder %s28, 0
      %p175 = por %p173, %p174
      %s177 = sadd.s32 %s176, 1
      %p180 = scmp.eq.s32.totalorder %s22, 1
      %p181 = scmp.ne.s32.totalorder %s176, %s178
      %p182 = scmp.eq.s32.totalorder %s22, 0
      %p183 = por %p181, %p182
      %p184 = scmp.ne.s32.totalorder %s176, %s178
      %p185 = scmp.eq.s32.totalorder %s27, 1
      %p186 = por %p184, %p185
      %p187 = scmp.ne.s32.totalorder %s178, %s179
      %p188 = scmp.eq.s32.totalorder %s27, 0
      %p189 = por %p187, %p188
      %p190 = scmp.ne.s32.totalorder %s178, %s179
      %p191 = scmp.eq.s32.totalorder %s28, 1
      %p192 = por %p190, %p191
      %p194 = scmp.ne.s32.totalorder %s179, %s193
      %p195 = scmp.eq.s32.totalorder %s28, 0
      %p196 = por %p194, %p195
      %s198 = sadd.s32 %s197, 1
      %p201 = scmp.eq.s32.totalorder %s22, 1
      %p202 = scmp.ne.s32.totalorder %s197, %s199
      %p203 = scmp.eq.s32.totalorder %s22, 0
      %p204 = por %p202, %p203
      %p205 = scmp.ne.s32.totalorder %s197, %s199
      %p206 = scmp.eq.s32.totalorder %s27, 1
      %p207 = por %p205, %p206
      %p208 = scmp.ne.s32.totalorder %s199, %s200
      %p209 = scmp.eq.s32.totalorder %s27, 0
      %p210 = por %p208, %p209
      %p211 = scmp.ne.s32.totalorder %s199, %s200
      %p212 = scmp.eq.s32.totalorder %s28, 1
      %p213 = por %p211, %p212
      %p215 = scmp.ne.s32.totalorder %s200, %s214
      %p216 = scmp.eq.s32.totalorder %s28, 0
      %p217 = por %p215, %p216
      %s219 = sadd.s32 %s218, 1
      %p222 = scmp.eq.s32.totalorder %s22, 1
      %p223 = scmp.ne.s32.totalorder %s218, %s220
      %p224 = scmp.eq.s32.totalorder %s22, 0
      %p225 = por %p223, %p224
      %p226 = scmp.ne.s32.totalorder %s218, %s220
      %p227 = scmp.eq.s32.totalorder %s27, 1
      %p228 = por %p226, %p227
      %p229 = scmp.ne.s32.totalorder %s220, %s221
      %p230 = scmp.eq.s32.totalorder %s27, 0
      %p231 = por %p229, %p230
      %p232 = scmp.ne.s32.totalorder %s220, %s221
      %p233 = scmp.eq.s32.totalorder %s28, 1
      %p234 = por %p232, %p233
      %p236 = scmp.ne.s32.totalorder %s221, %s235
      %p237 = scmp.eq.s32.totalorder %s28, 0
      %p238 = por %p236, %p237
      %s240 = sadd.s32 %s239, 1
      %p243 = scmp.eq.s32.totalorder %s22, 1
      %p244 = scmp.ne.s32.totalorder %s239, %s241
      %p245 = scmp.eq.s32.totalorder %s22, 0
      %p246 = por %p244, %p245
      %p247 = scmp.ne.s32.totalorder %s239, %s241
      %p248 = scmp.eq.s32.totalorder %s27, 1
      %p249 = por %p247, %p248
      %p250 = scmp.ne.s32.totalorder %s241, %s242
      %p251 = scmp.eq.s32.totalorder %s27, 0
      %p252 = por %p250, %p251
      %p253 = scmp.ne.s32.totalorder %s241, %s242
      %p254 = scmp.eq.s32.totalorder %s28, 1
      %p255 = por %p253, %p254
      %p257 = scmp.ne.s32.totalorder %s242, %s256
      %p258 = scmp.eq.s32.totalorder %s28, 0
      %p259 = por %p257, %p258
      %s261 = sadd.s32 %s260, 1
      %p264 = scmp.eq.s32.totalorder %s22, 1
      %p265 = scmp.ne.s32.totalorder %s260, %s262
      %p266 = scmp.eq.s32.totalorder %s22, 0
      %p267 = por %p265, %p266
      %p268 = scmp.ne.s32.totalorder %s260, %s262
      %p269 = scmp.eq.s32.totalorder %s27, 1
      %p270 = por %p268, %p269
      %p271 = scmp.ne.s32.totalorder %s262, %s263
      %p272 = scmp.eq.s32.totalorder %s27, 0
      %p273 = por %p271, %p272
      %p274 = scmp.ne.s32.totalorder %s262, %s263
      %p275 = scmp.eq.s32.totalorder %s28, 1
      %p276 = por %p274, %p275
      %p278 = scmp.ne.s32.totalorder %s263, %s277
      %p279 = scmp.eq.s32.totalorder %s28, 0
      %p280 = por %p278, %p279
      %s282 = sadd.s32 %s281, 1
      %p285 = scmp.eq.s32.totalorder %s22, 1
      %p286 = scmp.ne.s32.totalorder %s281, %s283
      %p287 = scmp.eq.s32.totalorder %s22, 0
      %p288 = por %p286, %p287
      %p289 = scmp.ne.s32.totalorder %s281, %s283
      %p290 = scmp.eq.s32.totalorder %s27, 1
      %p291 = por %p289, %p290
      %p292 = scmp.ne.s32.totalorder %s283, %s284
      %p293 = scmp.eq.s32.totalorder %s27, 0
      %p294 = por %p292, %p293
      %p295 = scmp.ne.s32.totalorder %s283, %s284
      %p296 = scmp.eq.s32.totalorder %s28, 1
      %p297 = por %p295, %p296
      %p299 = scmp.ne.s32.totalorder %s284, %s298
      %p300 = scmp.eq.s32.totalorder %s28, 0
      %p301 = por %p299, %p300
      %s303 = sadd.s32 %s302, 1
      %p306 = scmp.eq.s32.totalorder %s22, 1
      %p307 = scmp.ne.s32.totalorder %s302, %s304
      %p308 = scmp.eq.s32.totalorder %s22, 0
      %p309 = por %p307, %p308
      %p310 = scmp.ne.s32.totalorder %s302, %s304
      %p311 = scmp.eq.s32.totalorder %s27, 1
      %p312 = por %p310, %p311
      %p313 = scmp.ne.s32.totalorder %s304, %s305
      %p314 = scmp.eq.s32.totalorder %s27, 0
      %p315 = por %p313, %p314
      %p316 = scmp.ne.s32.totalorder %s304, %s305
      %p317 = scmp.eq.s32.totalorder %s28, 1
      %p318 = por %p316, %p317
      %p320 = scmp.ne.s32.totalorder %s305, %s319
      %p321 = scmp.eq.s32.totalorder %s28, 0
      %p322 = por %p320, %p321
      %s323 = ssub.s32 %s22, %s29
      %p324 = scmp.eq.s32.totalorder %s323, 0
      %s326 = sadd.s32 %s325, 1
      %s327 = scalar_select %p324, %s325, %s326
      %p330 = pneg %p324
      %p331 = scmp.eq.s32.totalorder %s22, 1
      %p332 = por %p330, %p331
      %p333 = scmp.ne.s32.totalorder %s325, %s328
      %p334 = scmp.eq.s32.totalorder %s22, 0
      %p335 = por %p333, %p334
      %p336 = scmp.ne.s32.totalorder %s325, %s328
      %p337 = scmp.eq.s32.totalorder %s27, 1
      %p338 = por %p336, %p337
      %p339 = scmp.ne.s32.totalorder %s328, %s329
      %p340 = scmp.eq.s32.totalorder %s27, 0
      %p341 = por %p339, %p340
      %p342 = scmp.ne.s32.totalorder %s328, %s329
      %p343 = scmp.eq.s32.totalorder %s28, 1
      %p344 = por %p342, %p343
      %p346 = scmp.ne.s32.totalorder %s329, %s345
      %p347 = scmp.eq.s32.totalorder %s28, 0
      %p348 = por %p346, %p347
      %p349 = scmp.le.s32.totalorder 1, %s22
      %p350 = scmp.lt.s32.totalorder %s22, 3
      %p351 = pnand %p349, %p350
      %p352 = pneg %p351
      // Predicated region
      $region9: #{tpu_custom_call.1} parent=5 // pred_check
        _
      $region10: #{tpu_custom_call.1} parent=5 // pred_check_branch
        %354 = sbr.rel (%p351) target = $region12
      $region11: #{tpu_custom_call.1} parent=5 // pred_region
        %s355 = ssub.s32 %s22, 1
        // Predicated region
        $region13: #{tpu_custom_call.1} parent=11 // pred_check
          %p356 = pneg %p147
        $region14: #{tpu_custom_call.1} parent=11 // pred_check_branch
          %358 = sbr.rel (%p356) target = $region16
        $region15: #{tpu_custom_call.1} parent=11 // pred_region
          _
        $region16: #{tpu_custom_call.1} parent=11 // pred_fallthru
          _
        // Predicated region
        $region17: #{tpu_custom_call.1} parent=11 // pred_check
          %p359 = pneg %p168
        $region18: #{tpu_custom_call.1} parent=11 // pred_check_branch
          %361 = sbr.rel (%p359) target = $region20
        $region19: #{tpu_custom_call.1} parent=11 // pred_region
          _
        $region20: #{tpu_custom_call.1} parent=11 // pred_fallthru
          _
        // Predicated region
        $region21: #{tpu_custom_call.1} parent=11 // pred_check
          %p362 = pneg %p189
        $region22: #{tpu_custom_call.1} parent=11 // pred_check_branch
          %364 = sbr.rel (%p362) target = $region24
        $region23: #{tpu_custom_call.1} parent=11 // pred_region
          _
        $region24: #{tpu_custom_call.1} parent=11 // pred_fallthru
          _
        // Predicated region
        $region25: #{tpu_custom_call.1} parent=11 // pred_check
          %p365 = pneg %p210
        $region26: #{tpu_custom_call.1} parent=11 // pred_check_branch
          %367 = sbr.rel (%p365) target = $region28
        $region27: #{tpu_custom_call.1} parent=11 // pred_region
          _
        $region28: #{tpu_custom_call.1} parent=11 // pred_fallthru
          _
        // Predicated region
        $region29: #{tpu_custom_call.1} parent=11 // pred_check
          %p368 = pneg %p231
        $region30: #{tpu_custom_call.1} parent=11 // pred_check_branch
          %370 = sbr.rel (%p368) target = $region32
        $region31: #{tpu_custom_call.1} parent=11 // pred_region
          _
        $region32: #{tpu_custom_call.1} parent=11 // pred_fallthru
          _
        // Predicated region
        $region33: #{tpu_custom_call.1} parent=11 // pred_check
          %p371 = pneg %p252
        $region34: #{tpu_custom_call.1} parent=11 // pred_check_branch
          %373 = sbr.rel (%p371) target = $region36
        $region35: #{tpu_custom_call.1} parent=11 // pred_region
          _
        $region36: #{tpu_custom_call.1} parent=11 // pred_fallthru
          _
        // Predicated region
        $region37: #{tpu_custom_call.1} parent=11 // pred_check
          %p374 = pneg %p273
        $region38: #{tpu_custom_call.1} parent=11 // pred_check_branch
          %376 = sbr.rel (%p374) target = $region40
        $region39: #{tpu_custom_call.1} parent=11 // pred_region
          _
        $region40: #{tpu_custom_call.1} parent=11 // pred_fallthru
          _
        // Predicated region
        $region41: #{tpu_custom_call.1} parent=11 // pred_check
          %p377 = pneg %p294
        $region42: #{tpu_custom_call.1} parent=11 // pred_check_branch
          %379 = sbr.rel (%p377) target = $region44
        $region43: #{tpu_custom_call.1} parent=11 // pred_region
          _
        $region44: #{tpu_custom_call.1} parent=11 // pred_fallthru
          _
        // Predicated region
        $region45: #{tpu_custom_call.1} parent=11 // pred_check
          %p380 = pneg %p315
        $region46: #{tpu_custom_call.1} parent=11 // pred_check_branch
          %382 = sbr.rel (%p380) target = $region48
        $region47: #{tpu_custom_call.1} parent=11 // pred_region
          _
        $region48: #{tpu_custom_call.1} parent=11 // pred_fallthru
          _
      $region12: #{tpu_custom_call.1} parent=5 // pred_fallthru
        _
      %p383 = scmp.lt.s32.totalorder %s22, 2
      // Predicated region
      $region49: #{tpu_custom_call.1} parent=5 // pred_check
        %p384 = pneg %p383
      $region50: #{tpu_custom_call.1} parent=5 // pred_check_branch
        %386 = sbr.rel (%p384) target = $region52
      $region51: #{tpu_custom_call.1} parent=5 // pred_region
        // Predicated region
        $region53: #{tpu_custom_call.1} parent=51 // pred_check
          %p387 = pneg %p42
        $region54: #{tpu_custom_call.1} parent=51 // pred_check_branch
          %389 = sbr.rel (%p387) target = $region56
        $region55: #{tpu_custom_call.1} parent=51 // pred_region
          %p390 = scmp.lt.s32.totalorder %s22, 1
          %s391 = scalar_select %p390, %s22, 1
          %s392 = smul.addr %s391, 4
          %s393 = scalar_lea.vmem %s0, %s392
        $region56: #{tpu_custom_call.1} parent=51 // pred_fallthru
          _
        // Predicated region
        $region57: #{tpu_custom_call.1} parent=51 // pred_check
          %p394 = pneg %p68
        $region58: #{tpu_custom_call.1} parent=51 // pred_check_branch
          %396 = sbr.rel (%p394) target = $region60
        $region59: #{tpu_custom_call.1} parent=51 // pred_region
          %p397 = scmp.lt.s32.totalorder %s22, 1
          %s398 = scalar_select %p397, %s22, 1
          %s399 = smul.addr %s398, 8
          %s400 = smul.addr %s399, 8
          %s401 = scalar_lea.vmem %s1, %s400
        $region60: #{tpu_custom_call.1} parent=51 // pred_fallthru
          _
        // Predicated region
        $region61: #{tpu_custom_call.1} parent=51 // pred_check
          %p402 = pneg %p94
        $region62: #{tpu_custom_call.1} parent=51 // pred_check_branch
          %404 = sbr.rel (%p402) target = $region64
        $region63: #{tpu_custom_call.1} parent=51 // pred_region
          %p405 = scmp.lt.s32.totalorder %s22, 1
          %s406 = scalar_select %p405, %s22, 1
          %s407 = smul.addr %s406, 8
          %s408 = smul.addr %s407, 4
          %s409 = scalar_lea.vmem %s2, %s408
        $region64: #{tpu_custom_call.1} parent=51 // pred_fallthru
          _
        // Predicated region
        $region65: #{tpu_custom_call.1} parent=51 // pred_check
          %p410 = pneg %p120
        $region66: #{tpu_custom_call.1} parent=51 // pred_check_branch
          %412 = sbr.rel (%p410) target = $region68
        $region67: #{tpu_custom_call.1} parent=51 // pred_region
          %p413 = scmp.lt.s32.totalorder %s22, 1
          %s414 = scalar_select %p413, %s22, 1
          %s415 = scalar_lea.vmem %s3, %s414
        $region68: #{tpu_custom_call.1} parent=51 // pred_fallthru
          _
      $region52: #{tpu_custom_call.1} parent=5 // pred_fallthru
        _
      %p416 = scmp.le.s32.totalorder 1, %s22
      %p417 = scmp.lt.s32.totalorder %s22, 3
      %p418 = pnand %p416, %p417
      %p419 = pneg %p418
      // Predicated region
      $region69: #{tpu_custom_call.1} parent=5 // pred_check
        _
      $region70: #{tpu_custom_call.1} parent=5 // pred_check_branch
        %421 = sbr.rel (%p418) target = $region72
      $region71: #{tpu_custom_call.1} parent=5 // pred_region
        %s422 = ssub.s32 %s22, 1
        %p423 = scmp.lt.s32.totalorder %s27, 1
        %s424 = scalar_select %p423, %s27, 1
        %s425 = smul.addr %s424, 4
        %s426 = scalar_lea.vmem %s0, %s425
        %p427 = pneg %p48
        %p428 = pneg %p45
        %p429 = scmp.lt.s32.totalorder %s27, 1
        %s430 = scalar_select %p429, %s27, 1
        %s431 = smul.addr %s430, 8
        %s432 = smul.addr %s431, 8
        %s433 = scalar_lea.vmem %s1, %s432
        %p434 = pneg %p74
        %p435 = pneg %p71
        %p436 = scmp.lt.s32.totalorder %s27, 1
        %s437 = scalar_select %p436, %s27, 1
        %s438 = smul.addr %s437, 8
        %s439 = smul.addr %s438, 4
        %s440 = scalar_lea.vmem %s2, %s439
        %p441 = pneg %p100
        %p442 = pneg %p97
        %p443 = scmp.lt.s32.totalorder %s27, 1
        %s444 = scalar_select %p443, %s27, 1
        %s445 = scalar_lea.vmem %s3, %s444
        %p446 = pneg %p126
        %p447 = pneg %p123
        %p448 = pneg %p147
        %p449 = pneg %p144
        %p450 = pneg %p168
        %p451 = pneg %p165
        %p452 = pneg %p189
        %p453 = pneg %p186
        %p454 = pneg %p210
        %p455 = pneg %p207
        %p456 = pneg %p231
        %p457 = pneg %p228
        %p458 = pneg %p252
        %p459 = pneg %p249
        %p460 = pneg %p273
        %p461 = pneg %p270
        %p462 = pneg %p294
        %p463 = pneg %p291
        %p464 = pneg %p315
        %p465 = pneg %p312
        %p466 = pneg %p341
        %p467 = pneg %p338
        %s468 = sand.u32 %s328, 1
        %s469 = scalar_lea.sflag [#allocation3], %s468
        %s470 = sand.u32 %s328, 1
        %s471 = scalar_lea.vmem [#allocation2], %s470
        %p472 = scmp.lt.s32.totalorder %s27, 1
        %s473 = scalar_select %p472, %s27, 1
        %s474 = smul.addr %s473, 4
        %s475 = scalar_lea.vmem %s0, %s474
        %p476 = scmp.lt.s32.totalorder %s27, 1
        %s477 = scalar_select %p476, %s27, 1
        %s478 = smul.addr %s477, 8
        %s479 = smul.addr %s478, 8
        %s480 = scalar_lea.vmem %s1, %s479
        %p481 = scmp.lt.s32.totalorder %s27, 1
        %s482 = scalar_select %p481, %s27, 1
        %s483 = smul.addr %s482, 8
        %s484 = smul.addr %s483, 4
        %s485 = scalar_lea.vmem %s2, %s484
        %p486 = scmp.lt.s32.totalorder %s27, 1
        %s487 = scalar_select %p486, %s27, 1
        %s488 = scalar_lea.vmem %s3, %s487
        %v490 = vld [vmem:[%s475] sm:$0xf]
        %v491 = vld [vmem:[%s480] sm:$0xff]
        %v492 = vld [vmem:[%s480 + $0x8] sm:$0xff]
        %v493 = vld [vmem:[%s480 + $0x10] sm:$0xff]
        %v494 = vld [vmem:[%s480 + $0x18] sm:$0xff]
        %v495 = vld [vmem:[%s480 + $0x20] sm:$0xff]
        %v496 = vld [vmem:[%s480 + $0x28] sm:$0xff]
        %v497 = vld [vmem:[%s480 + $0x30] sm:$0xff]
        %v498 = vld [vmem:[%s480 + $0x38] sm:$0xff]
        %v499 = vld [vmem:[%s485] sm:$0xf]
        %v500 = vld [vmem:[%s485 + $0x4] sm:$0xf]
        %v501 = vld [vmem:[%s485 + $0x8] sm:$0xf]
        %v502 = vld [vmem:[%s485 + $0xc] sm:$0xf]
        %v503 = vld [vmem:[%s485 + $0x10] sm:$0xf]
        %v504 = vld [vmem:[%s485 + $0x14] sm:$0xf]
        %v505 = vld [vmem:[%s485 + $0x18] sm:$0xf]
        %v506 = vld [vmem:[%s485 + $0x1c] sm:$0xf]
        %v507 = vld [vmem:[%s4] sm:$0xff]
        %v508 = vld [vmem:[%s4 + $0x8] sm:$0xf]
        %v509 = vld [vmem:[%s4 + $0xc] sm:$0xff]
        %v510 = vld [vmem:[%s4 + $0x14] sm:$0xf]
        %v511 = vld [vmem:[%s4 + $0x18] sm:$0xff]
        %v512 = vld [vmem:[%s4 + $0x20] sm:$0xf]
        %v513 = vld [vmem:[%s4 + $0x24] sm:$0xff]
        %v514 = vld [vmem:[%s4 + $0x2c] sm:$0xf]
        %v515 = vld [vmem:[%s4 + $0x30] sm:$0xff]
        %v516 = vld [vmem:[%s4 + $0x38] sm:$0xf]
        %v517 = vld [vmem:[%s4 + $0x3c] sm:$0xff]
        %v518 = vld [vmem:[%s4 + $0x44] sm:$0xf]
        %v519 = vld [vmem:[%s4 + $0x48] sm:$0xff]
        %v520 = vld [vmem:[%s4 + $0x50] sm:$0xf]
        %v521 = vld [vmem:[%s4 + $0x54] sm:$0xff]
        %v522 = vld [vmem:[%s4 + $0x5c] sm:$0xf]
        %v523 = vld [vmem:[%s4 + $0x60] sm:$0xff]
        %v524 = vld [vmem:[%s4 + $0x68] sm:$0xf]
        %v525 = vld [vmem:[%s4 + $0x6c] sm:$0xff]
        %v526 = vld [vmem:[%s4 + $0x74] sm:$0xf]
        %v527 = vld [vmem:[%s4 + $0x78] sm:$0xff]
        %v528 = vld [vmem:[%s4 + $0x80] sm:$0xf]
        %v529 = vld [vmem:[%s4 + $0x84] sm:$0xff]
        %v530 = vld [vmem:[%s4 + $0x8c] sm:$0xf]
        %v531 = vld [vmem:[%s4 + $0x90] sm:$0xff]
        %v532 = vld [vmem:[%s4 + $0x98] sm:$0xf]
        %v533 = vld [vmem:[%s4 + $0x9c] sm:$0xff]
        %v534 = vld [vmem:[%s4 + $0xa4] sm:$0xf]
        %v535 = vld [vmem:[%s4 + $0xa8] sm:$0xff]
        %v536 = vld [vmem:[%s4 + $0xb0] sm:$0xf]
        %v537 = vld [vmem:[%s4 + $0xb4] sm:$0xff]
        %v538 = vld [vmem:[%s4 + $0xbc] sm:$0xf]
        %v539 = vld [vmem:[%s5] sm:$0x7]
        %v541 = vlaneseq
        %v542 = vshrl.u32 %v541, 7
        %v543 = vsub.s32 0, %v542
        %v544 = vrot.slane %v539, %v543
        %v545 = vlaneseq
        %v546 = vshrl.u32 %v545, 7
        %v547 = vsub.s32 1, %v546
        %v548 = vrot.slane %v539, %v547
        %v549 = vlaneseq
        %v550 = vshrl.u32 %v549, 7
        %v551 = vsub.s32 2, %v550
        %v552 = vrot.slane %v539, %v551
        %v588 = vunpack.c.l.b16 %v507
        %v589 = vunpack.c.h.b16 %v507
        %v590 = vunpack.c.l.b16 %v508
        %v591 = vunpack.c.l.b16 %v509
        %v592 = vunpack.c.h.b16 %v509
        %v593 = vunpack.c.l.b16 %v510
        %v594 = vunpack.c.l.b16 %v511
        %v595 = vunpack.c.h.b16 %v511
        %v596 = vunpack.c.l.b16 %v512
        %v597 = vunpack.c.l.b16 %v513
        %v598 = vunpack.c.h.b16 %v513
        %v599 = vunpack.c.l.b16 %v514
        %v600 = vunpack.c.l.b16 %v515
        %v601 = vunpack.c.h.b16 %v515
        %v602 = vunpack.c.l.b16 %v516
        %v603 = vunpack.c.l.b16 %v517
        %v604 = vunpack.c.h.b16 %v517
        %v605 = vunpack.c.l.b16 %v518
        %v606 = vunpack.c.l.b16 %v519
        %v607 = vunpack.c.h.b16 %v519
        %v608 = vunpack.c.l.b16 %v520
        %v609 = vunpack.c.l.b16 %v521
        %v610 = vunpack.c.h.b16 %v521
        %v611 = vunpack.c.l.b16 %v522
        %v612 = vunpack.c.l.b16 %v523
        %v613 = vunpack.c.h.b16 %v523
        %v614 = vunpack.c.l.b16 %v524
        %v615 = vunpack.c.l.b16 %v525
        %v616 = vunpack.c.h.b16 %v525
        %v617 = vunpack.c.l.b16 %v526
        %v618 = vunpack.c.l.b16 %v527
        %v619 = vunpack.c.h.b16 %v527
        %v620 = vunpack.c.l.b16 %v528
        %v621 = vunpack.c.l.b16 %v529
        %v622 = vunpack.c.h.b16 %v529
        %v623 = vunpack.c.l.b16 %v530
        %v624 = vunpack.c.l.b16 %v531
        %v625 = vunpack.c.h.b16 %v531
        %v626 = vunpack.c.l.b16 %v532
        %v627 = vunpack.c.l.b16 %v533
        %v628 = vunpack.c.h.b16 %v533
        %v629 = vunpack.c.l.b16 %v534
        %v630 = vunpack.c.l.b16 %v535
        %v631 = vunpack.c.h.b16 %v535
        %v632 = vunpack.c.l.b16 %v536
        %v633 = vunpack.c.l.b16 %v537
        %v634 = vunpack.c.h.b16 %v537
        %v635 = vunpack.c.l.b16 %v538
        %v636 = vpack.c.b16 %v591, %v588
        %v637 = vpack.c.b16 %v592, %v589
        %v638 = vpack.c.b16 %v593, %v590
        %v639 = vpack.c.b16 %v597, %v594
        %v640 = vpack.c.b16 %v598, %v595
        %v641 = vpack.c.b16 %v599, %v596
        %v642 = vpack.c.b16 %v603, %v600
        %v643 = vpack.c.b16 %v604, %v601
        %v644 = vpack.c.b16 %v605, %v602
        %v645 = vpack.c.b16 %v609, %v606
        %v646 = vpack.c.b16 %v610, %v607
        %v647 = vpack.c.b16 %v611, %v608
        %v648 = vpack.c.b16 %v615, %v612
        %v649 = vpack.c.b16 %v616, %v613
        %v650 = vpack.c.b16 %v617, %v614
        %v651 = vpack.c.b16 %v621, %v618
        %v652 = vpack.c.b16 %v622, %v619
        %v653 = vpack.c.b16 %v623, %v620
        %v654 = vpack.c.b16 %v627, %v624
        %v655 = vpack.c.b16 %v628, %v625
        %v656 = vpack.c.b16 %v629, %v626
        %v657 = vpack.c.b16 %v633, %v630
        %v658 = vpack.c.b16 %v634, %v631
        %v659 = vpack.c.b16 %v635, %v632
        %684 = vmatprep.subr.bf16.mxu0 %v637
        %685 = vmatpush1.bf16.msra.mxu0 %v636
        %686 = vmatprep.subr.bf16.mxu0 %v640
        %687 = vmatpush1.bf16.msra.mxu0 %v639
        %688 = vmatprep.subr.bf16.mxu0 %v643
        %689 = vmatpush1.bf16.msra.mxu0 %v642
        %690 = vmatprep.subr.bf16.mxu0 %v646
        %691 = vmatpush1.bf16.msra.mxu0 %v645
        %692 = vmatprep.subr.bf16.mxu0 %v649
        %693 = vmatpush1.bf16.msra.mxu0 %v648
        %694 = vmatprep.subr.bf16.mxu0 %v652
        %695 = vmatpush1.bf16.msra.mxu0 %v651
        %696 = vmatprep.subr.bf16.mxu0 %v655
        %697 = vmatpush1.bf16.msra.mxu0 %v654
        %698 = vmatprep.subr.bf16.mxu0 %v658
        %699 = vmatpush1.bf16.msra.mxu0 %v657
        %700 = vmatprep.subr.bf16.mxu0 0
        %701 = vmatpush1.bf16.msra.mxu0 0
        %702 = vmatprep.subr.bf16.mxu0 0
        %703 = vmatpush1.bf16.msra.mxu0 0
        %704 = vmatprep.subr.bf16.mxu0 0
        %705 = vmatpush1.bf16.msra.mxu0 0
        %706 = vmatprep.subr.bf16.mxu0 0
        %707 = vmatpush1.bf16.msra.mxu0 0
        %708 = vmatprep.subr.bf16.mxu0 0
        %709 = vmatpush1.bf16.msra.mxu0 0
        %710 = vmatprep.subr.bf16.mxu0 0
        %711 = vmatpush1.bf16.msra.mxu0 0
        %712 = vmatprep.subr.bf16.mxu0 0
        %713 = vmatpush1.bf16.msra.mxu0 0
        %714 = vmatprep.subr.bf16.mxu0 0
        %715 = vmatpush1.bf16.msra.mxu0 0
        %716 = vmatprep.mubr.bf16.mxu0 0
        %717 = vmatmul.mubr.bf16.gmra.mrb[0].mxu0 %v490
        %v718 = vpop.f32.mrb[0].mxu0
        %v719 = vadd.f32 %v544, %v718
        %v720 = vpop.f32.mrb[0].mxu0
        %v721 = vadd.f32 %v548, %v720
        %v722 = vpop.f32.mrb[0].mxu0
        %v723 = vpop.f32.mrb[0].mxu0
        %724 = vdwg.mxu0
        %725 = vmatprep.subr.bf16.mxu0 0
        %726 = vmatpush1.bf16.msra.mxu0 %v638
        %727 = vmatprep.subr.bf16.mxu0 0
        %728 = vmatpush1.bf16.msra.mxu0 %v641
        %729 = vmatprep.subr.bf16.mxu0 0
        %730 = vmatpush1.bf16.msra.mxu0 %v644
        %731 = vmatprep.subr.bf16.mxu0 0
        %732 = vmatpush1.bf16.msra.mxu0 %v647
        %733 = vmatprep.subr.bf16.mxu0 0
        %734 = vmatpush1.bf16.msra.mxu0 %v650
        %735 = vmatprep.subr.bf16.mxu0 0
        %736 = vmatpush1.bf16.msra.mxu0 %v653
        %737 = vmatprep.subr.bf16.mxu0 0
        %738 = vmatpush1.bf16.msra.mxu0 %v656
        %739 = vmatprep.subr.bf16.mxu0 0
        %740 = vmatpush1.bf16.msra.mxu0 %v659
        %741 = vmatprep.subr.bf16.mxu0 0
        %742 = vmatpush1.bf16.msra.mxu0 0
        %743 = vmatprep.subr.bf16.mxu0 0
        %744 = vmatpush1.bf16.msra.mxu0 0
        %745 = vmatprep.subr.bf16.mxu0 0
        %746 = vmatpush1.bf16.msra.mxu0 0
        %747 = vmatprep.subr.bf16.mxu0 0
        %748 = vmatpush1.bf16.msra.mxu0 0
        %749 = vmatprep.subr.bf16.mxu0 0
        %750 = vmatpush1.bf16.msra.mxu0 0
        %751 = vmatprep.subr.bf16.mxu0 0
        %752 = vmatpush1.bf16.msra.mxu0 0
        %753 = vmatprep.subr.bf16.mxu0 0
        %754 = vmatpush1.bf16.msra.mxu0 0
        %755 = vmatprep.subr.bf16.mxu0 0
        %756 = vmatpush1.bf16.msra.mxu0 0
        %757 = vmatprep.mubr.bf16.mxu0 0
        %758 = vmatmul.mubr.bf16.gmra.mrb[0].mxu0 %v490
        %v759 = vpop.f32.mrb[0].mxu0
        %v760 = vadd.f32 %v552, %v759
        %v761 = vpop.f32.mrb[0].mxu0
        %v762 = vpop.f32.mrb[0].mxu0
        %v763 = vpop.f32.mrb[0].mxu0
        %764 = vdwg.mxu0
        %v765 = vld [vmem:[%s6] sm:$0xff]
        %v766 = vld [vmem:[%s6 + $0x8] sm:$0xf]
        %v767 = vld [vmem:[%s6 + $0xc] sm:$0xff]
        %v768 = vld [vmem:[%s6 + $0x14] sm:$0xf]
        %v769 = vld [vmem:[%s6 + $0x18] sm:$0xff]
        %v770 = vld [vmem:[%s6 + $0x20] sm:$0xf]
        %v771 = vld [vmem:[%s6 + $0x24] sm:$0xff]
        %v772 = vld [vmem:[%s6 + $0x2c] sm:$0xf]
        %v773 = vld [vmem:[%s6 + $0x30] sm:$0xff]
        %v774 = vld [vmem:[%s6 + $0x38] sm:$0xf]
        %v775 = vld [vmem:[%s6 + $0x3c] sm:$0xff]
        %v776 = vld [vmem:[%s6 + $0x44] sm:$0xf]
        %v777 = vld [vmem:[%s6 + $0x48] sm:$0xff]
        %v778 = vld [vmem:[%s6 + $0x50] sm:$0xf]
        %v779 = vld [vmem:[%s6 + $0x54] sm:$0xff]
        %v780 = vld [vmem:[%s6 + $0x5c] sm:$0xf]
        %v781 = vld [vmem:[%s6 + $0x60] sm:$0xff]
        %v782 = vld [vmem:[%s6 + $0x68] sm:$0xf]
        %v783 = vld [vmem:[%s6 + $0x6c] sm:$0xff]
        %v784 = vld [vmem:[%s6 + $0x74] sm:$0xf]
        %v785 = vld [vmem:[%s6 + $0x78] sm:$0xff]
        %v786 = vld [vmem:[%s6 + $0x80] sm:$0xf]
        %v787 = vld [vmem:[%s6 + $0x84] sm:$0xff]
        %v788 = vld [vmem:[%s6 + $0x8c] sm:$0xf]
        %v789 = vld [vmem:[%s6 + $0x90] sm:$0xff]
        %v790 = vld [vmem:[%s6 + $0x98] sm:$0xf]
        %v791 = vld [vmem:[%s6 + $0x9c] sm:$0xff]
        %v792 = vld [vmem:[%s6 + $0xa4] sm:$0xf]
        %v793 = vld [vmem:[%s6 + $0xa8] sm:$0xff]
        %v794 = vld [vmem:[%s6 + $0xb0] sm:$0xf]
        %v795 = vld [vmem:[%s6 + $0xb4] sm:$0xff]
        %v796 = vld [vmem:[%s6 + $0xbc] sm:$0xf]
        %v797 = vld [vmem:[%s7] sm:$0x7]
        %v799 = vlaneseq
        %v800 = vshrl.u32 %v799, 7
        %v801 = vsub.s32 0, %v800
        %v802 = vrot.slane %v797, %v801
        %v803 = vlaneseq
        %v804 = vshrl.u32 %v803, 7
        %v805 = vsub.s32 1, %v804
        %v806 = vrot.slane %v797, %v805
        %v807 = vlaneseq
        %v808 = vshrl.u32 %v807, 7
        %v809 = vsub.s32 2, %v808
        %v810 = vrot.slane %v797, %v809
        %v846 = vunpack.c.l.b16 %v765
        %v847 = vunpack.c.h.b16 %v765
        %v848 = vunpack.c.l.b16 %v766
        %v849 = vunpack.c.l.b16 %v767
        %v850 = vunpack.c.h.b16 %v767
        %v851 = vunpack.c.l.b16 %v768
        %v852 = vunpack.c.l.b16 %v769
        %v853 = vunpack.c.h.b16 %v769
        %v854 = vunpack.c.l.b16 %v770
        %v855 = vunpack.c.l.b16 %v771
        %v856 = vunpack.c.h.b16 %v771
        %v857 = vunpack.c.l.b16 %v772
        %v858 = vunpack.c.l.b16 %v773
        %v859 = vunpack.c.h.b16 %v773
        %v860 = vunpack.c.l.b16 %v774
        %v861 = vunpack.c.l.b16 %v775
        %v862 = vunpack.c.h.b16 %v775
        %v863 = vunpack.c.l.b16 %v776
        %v864 = vunpack.c.l.b16 %v777
        %v865 = vunpack.c.h.b16 %v777
        %v866 = vunpack.c.l.b16 %v778
        %v867 = vunpack.c.l.b16 %v779
        %v868 = vunpack.c.h.b16 %v779
        %v869 = vunpack.c.l.b16 %v780
        %v870 = vunpack.c.l.b16 %v781
        %v871 = vunpack.c.h.b16 %v781
        %v872 = vunpack.c.l.b16 %v782
        %v873 = vunpack.c.l.b16 %v783
        %v874 = vunpack.c.h.b16 %v783
        %v875 = vunpack.c.l.b16 %v784
        %v876 = vunpack.c.l.b16 %v785
        %v877 = vunpack.c.h.b16 %v785
        %v878 = vunpack.c.l.b16 %v786
        %v879 = vunpack.c.l.b16 %v787
        %v880 = vunpack.c.h.b16 %v787
        %v881 = vunpack.c.l.b16 %v788
        %v882 = vunpack.c.l.b16 %v789
        %v883 = vunpack.c.h.b16 %v789
        %v884 = vunpack.c.l.b16 %v790
        %v885 = vunpack.c.l.b16 %v791
        %v886 = vunpack.c.h.b16 %v791
        %v887 = vunpack.c.l.b16 %v792
        %v888 = vunpack.c.l.b16 %v793
        %v889 = vunpack.c.h.b16 %v793
        %v890 = vunpack.c.l.b16 %v794
        %v891 = vunpack.c.l.b16 %v795
        %v892 = vunpack.c.h.b16 %v795
        %v893 = vunpack.c.l.b16 %v796
        %v894 = vpack.c.b16 %v849, %v846
        %v895 = vpack.c.b16 %v850, %v847
        %v896 = vpack.c.b16 %v851, %v848
        %v897 = vpack.c.b16 %v855, %v852
        %v898 = vpack.c.b16 %v856, %v853
        %v899 = vpack.c.b16 %v857, %v854
        %v900 = vpack.c.b16 %v861, %v858
        %v901 = vpack.c.b16 %v862, %v859
        %v902 = vpack.c.b16 %v863, %v860
        %v903 = vpack.c.b16 %v867, %v864
        %v904 = vpack.c.b16 %v868, %v865
        %v905 = vpack.c.b16 %v869, %v866
        %v906 = vpack.c.b16 %v873, %v870
        %v907 = vpack.c.b16 %v874, %v871
        %v908 = vpack.c.b16 %v875, %v872
        %v909 = vpack.c.b16 %v879, %v876
        %v910 = vpack.c.b16 %v880, %v877
        %v911 = vpack.c.b16 %v881, %v878
        %v912 = vpack.c.b16 %v885, %v882
        %v913 = vpack.c.b16 %v886, %v883
        %v914 = vpack.c.b16 %v887, %v884
        %v915 = vpack.c.b16 %v891, %v888
        %v916 = vpack.c.b16 %v892, %v889
        %v917 = vpack.c.b16 %v893, %v890
        %942 = vmatprep.subr.bf16.mxu0 %v895
        %943 = vmatpush1.bf16.msra.mxu0 %v894
        %944 = vmatprep.subr.bf16.mxu0 %v898
        %945 = vmatpush1.bf16.msra.mxu0 %v897
        %946 = vmatprep.subr.bf16.mxu0 %v901
        %947 = vmatpush1.bf16.msra.mxu0 %v900
        %948 = vmatprep.subr.bf16.mxu0 %v904
        %949 = vmatpush1.bf16.msra.mxu0 %v903
        %950 = vmatprep.subr.bf16.mxu0 %v907
        %951 = vmatpush1.bf16.msra.mxu0 %v906
        %952 = vmatprep.subr.bf16.mxu0 %v910
        %953 = vmatpush1.bf16.msra.mxu0 %v909
        %954 = vmatprep.subr.bf16.mxu0 %v913
        %955 = vmatpush1.bf16.msra.mxu0 %v912
        %956 = vmatprep.subr.bf16.mxu0 %v916
        %957 = vmatpush1.bf16.msra.mxu0 %v915
        %958 = vmatprep.subr.bf16.mxu0 0
        %959 = vmatpush1.bf16.msra.mxu0 0
        %960 = vmatprep.subr.bf16.mxu0 0
        %961 = vmatpush1.bf16.msra.mxu0 0
        %962 = vmatprep.subr.bf16.mxu0 0
        %963 = vmatpush1.bf16.msra.mxu0 0
        %964 = vmatprep.subr.bf16.mxu0 0
        %965 = vmatpush1.bf16.msra.mxu0 0
        %966 = vmatprep.subr.bf16.mxu0 0
        %967 = vmatpush1.bf16.msra.mxu0 0
        %968 = vmatprep.subr.bf16.mxu0 0
        %969 = vmatpush1.bf16.msra.mxu0 0
        %970 = vmatprep.subr.bf16.mxu0 0
        %971 = vmatpush1.bf16.msra.mxu0 0
        %972 = vmatprep.subr.bf16.mxu0 0
        %973 = vmatpush1.bf16.msra.mxu0 0
        %974 = vmatprep.mubr.bf16.mxu0 0
        %975 = vmatmul.mubr.bf16.gmra.mrb[0].mxu0 %v490
        %v976 = vpop.f32.mrb[0].mxu0
        %v977 = vadd.f32 %v802, %v976
        %v978 = vpop.f32.mrb[0].mxu0
        %v979 = vadd.f32 %v806, %v978
        %v980 = vpop.f32.mrb[0].mxu0
        %v981 = vpop.f32.mrb[0].mxu0
        %982 = vdwg.mxu0
        %983 = vmatprep.subr.bf16.mxu0 0
        %984 = vmatpush1.bf16.msra.mxu0 %v896
        %985 = vmatprep.subr.bf16.mxu0 0
        %986 = vmatpush1.bf16.msra.mxu0 %v899
        %987 = vmatprep.subr.bf16.mxu0 0
        %988 = vmatpush1.bf16.msra.mxu0 %v902
        %989 = vmatprep.subr.bf16.mxu0 0
        %990 = vmatpush1.bf16.msra.mxu0 %v905
        %991 = vmatprep.subr.bf16.mxu0 0
        %992 = vmatpush1.bf16.msra.mxu0 %v908
        %993 = vmatprep.subr.bf16.mxu0 0
        %994 = vmatpush1.bf16.msra.mxu0 %v911
        %995 = vmatprep.subr.bf16.mxu0 0
        %996 = vmatpush1.bf16.msra.mxu0 %v914
        %997 = vmatprep.subr.bf16.mxu0 0
        %998 = vmatpush1.bf16.msra.mxu0 %v917
        %999 = vmatprep.subr.bf16.mxu0 0
        %1000 = vmatpush1.bf16.msra.mxu0 0
        %1001 = vmatprep.subr.bf16.mxu0 0
        %1002 = vmatpush1.bf16.msra.mxu0 0
        %1003 = vmatprep.subr.bf16.mxu0 0
        %1004 = vmatpush1.bf16.msra.mxu0 0
        %1005 = vmatprep.subr.bf16.mxu0 0
        %1006 = vmatpush1.bf16.msra.mxu0 0
        %1007 = vmatprep.subr.bf16.mxu0 0
        %1008 = vmatpush1.bf16.msra.mxu0 0
        %1009 = vmatprep.subr.bf16.mxu0 0
        %1010 = vmatpush1.bf16.msra.mxu0 0
        %1011 = vmatprep.subr.bf16.mxu0 0
        %1012 = vmatpush1.bf16.msra.mxu0 0
        %1013 = vmatprep.subr.bf16.mxu0 0
        %1014 = vmatpush1.bf16.msra.mxu0 0
        %1015 = vmatprep.mubr.bf16.mxu0 0
        %1016 = vmatmul.mubr.bf16.gmra.mrb[0].mxu0 %v490
        %v1017 = vpop.f32.mrb[0].mxu0
        %v1018 = vadd.f32 %v810, %v1017
        %v1019 = vpop.f32.mrb[0].mxu0
        %v1020 = vpop.f32.mrb[0].mxu0
        %v1021 = vpop.f32.mrb[0].mxu0
        %1022 = vdwg.mxu0
        %v1023 = vld [vmem:[%s8] sm:$0xff]
        %v1024 = vld [vmem:[%s8 + $0x8] sm:$0xf]
        %v1025 = vld [vmem:[%s8 + $0xc] sm:$0xff]
        %v1026 = vld [vmem:[%s8 + $0x14] sm:$0xf]
        %v1027 = vld [vmem:[%s8 + $0x18] sm:$0xff]
        %v1028 = vld [vmem:[%s8 + $0x20] sm:$0xf]
        %v1029 = vld [vmem:[%s8 + $0x24] sm:$0xff]
        %v1030 = vld [vmem:[%s8 + $0x2c] sm:$0xf]
        %v1031 = vld [vmem:[%s8 + $0x30] sm:$0xff]
        %v1032 = vld [vmem:[%s8 + $0x38] sm:$0xf]
        %v1033 = vld [vmem:[%s8 + $0x3c] sm:$0xff]
        %v1034 = vld [vmem:[%s8 + $0x44] sm:$0xf]
        %v1035 = vld [vmem:[%s8 + $0x48] sm:$0xff]
        %v1036 = vld [vmem:[%s8 + $0x50] sm:$0xf]
        %v1037 = vld [vmem:[%s8 + $0x54] sm:$0xff]
        %v1038 = vld [vmem:[%s8 + $0x5c] sm:$0xf]
        %v1039 = vld [vmem:[%s8 + $0x60] sm:$0xff]
        %v1040 = vld [vmem:[%s8 + $0x68] sm:$0xf]
        %v1041 = vld [vmem:[%s8 + $0x6c] sm:$0xff]
        %v1042 = vld [vmem:[%s8 + $0x74] sm:$0xf]
        %v1043 = vld [vmem:[%s8 + $0x78] sm:$0xff]
        %v1044 = vld [vmem:[%s8 + $0x80] sm:$0xf]
        %v1045 = vld [vmem:[%s8 + $0x84] sm:$0xff]
        %v1046 = vld [vmem:[%s8 + $0x8c] sm:$0xf]
        %v1047 = vld [vmem:[%s8 + $0x90] sm:$0xff]
        %v1048 = vld [vmem:[%s8 + $0x98] sm:$0xf]
        %v1049 = vld [vmem:[%s8 + $0x9c] sm:$0xff]
        %v1050 = vld [vmem:[%s8 + $0xa4] sm:$0xf]
        %v1051 = vld [vmem:[%s8 + $0xa8] sm:$0xff]
        %v1052 = vld [vmem:[%s8 + $0xb0] sm:$0xf]
        %v1053 = vld [vmem:[%s8 + $0xb4] sm:$0xff]
        %v1054 = vld [vmem:[%s8 + $0xbc] sm:$0xf]
        %v1063 = vunpack.c.l.b16 %v499
        %v1064 = vunpack.c.l.b16 %v500
        %v1065 = vunpack.c.l.b16 %v501
        %v1066 = vunpack.c.l.b16 %v502
        %v1067 = vunpack.c.l.b16 %v503
        %v1068 = vunpack.c.l.b16 %v504
        %v1069 = vunpack.c.l.b16 %v505
        %v1070 = vunpack.c.l.b16 %v506
        %v1071 = vpack.c.b16 %v1064, %v1063
        %v1072 = vpack.c.b16 %v1066, %v1065
        %v1073 = vpack.c.b16 %v1068, %v1067
        %v1074 = vpack.c.b16 %v1070, %v1069
        %v1111 = vunpack.c.l.b16 %v1023
        %v1112 = vunpack.c.h.b16 %v1023
        %v1113 = vunpack.c.l.b16 %v1024
        %v1114 = vunpack.c.l.b16 %v1025
        %v1115 = vunpack.c.h.b16 %v1025
        %v1116 = vunpack.c.l.b16 %v1026
        %v1117 = vunpack.c.l.b16 %v1027
        %v1118 = vunpack.c.h.b16 %v1027
        %v1119 = vunpack.c.l.b16 %v1028
        %v1120 = vunpack.c.l.b16 %v1029
        %v1121 = vunpack.c.h.b16 %v1029
        %v1122 = vunpack.c.l.b16 %v1030
        %v1123 = vunpack.c.l.b16 %v1031
        %v1124 = vunpack.c.h.b16 %v1031
        %v1125 = vunpack.c.l.b16 %v1032
        %v1126 = vunpack.c.l.b16 %v1033
        %v1127 = vunpack.c.h.b16 %v1033
        %v1128 = vunpack.c.l.b16 %v1034
        %v1129 = vunpack.c.l.b16 %v1035
        %v1130 = vunpack.c.h.b16 %v1035
        %v1131 = vunpack.c.l.b16 %v1036
        %v1132 = vunpack.c.l.b16 %v1037
        %v1133 = vunpack.c.h.b16 %v1037
        %v1134 = vunpack.c.l.b16 %v1038
        %v1135 = vunpack.c.l.b16 %v1039
        %v1136 = vunpack.c.h.b16 %v1039
        %v1137 = vunpack.c.l.b16 %v1040
        %v1138 = vunpack.c.l.b16 %v1041
        %v1139 = vunpack.c.h.b16 %v1041
        %v1140 = vunpack.c.l.b16 %v1042
        %v1141 = vunpack.c.l.b16 %v1043
        %v1142 = vunpack.c.h.b16 %v1043
        %v1143 = vunpack.c.l.b16 %v1044
        %v1144 = vunpack.c.l.b16 %v1045
        %v1145 = vunpack.c.h.b16 %v1045
        %v1146 = vunpack.c.l.b16 %v1046
        %v1147 = vunpack.c.l.b16 %v1047
        %v1148 = vunpack.c.h.b16 %v1047
        %v1149 = vunpack.c.l.b16 %v1048
        %v1150 = vunpack.c.l.b16 %v1049
        %v1151 = vunpack.c.h.b16 %v1049
        %v1152 = vunpack.c.l.b16 %v1050
        %v1153 = vunpack.c.l.b16 %v1051
        %v1154 = vunpack.c.h.b16 %v1051
        %v1155 = vunpack.c.l.b16 %v1052
        %v1156 = vunpack.c.l.b16 %v1053
        %v1157 = vunpack.c.h.b16 %v1053
        %v1158 = vunpack.c.l.b16 %v1054
        %v1159 = vpack.c.b16 %v1114, %v1111
        %v1160 = vpack.c.b16 %v1115, %v1112
        %v1161 = vpack.c.b16 %v1116, %v1113
        %v1162 = vpack.c.b16 %v1120, %v1117
        %v1163 = vpack.c.b16 %v1121, %v1118
        %v1164 = vpack.c.b16 %v1122, %v1119
        %v1165 = vpack.c.b16 %v1126, %v1123
        %v1166 = vpack.c.b16 %v1127, %v1124
        %v1167 = vpack.c.b16 %v1128, %v1125
        %v1168 = vpack.c.b16 %v1132, %v1129
        %v1169 = vpack.c.b16 %v1133, %v1130
        %v1170 = vpack.c.b16 %v1134, %v1131
        %v1171 = vpack.c.b16 %v1138, %v1135
        %v1172 = vpack.c.b16 %v1139, %v1136
        %v1173 = vpack.c.b16 %v1140, %v1137
        %v1174 = vpack.c.b16 %v1144, %v1141
        %v1175 = vpack.c.b16 %v1145, %v1142
        %v1176 = vpack.c.b16 %v1146, %v1143
        %v1177 = vpack.c.b16 %v1150, %v1147
        %v1178 = vpack.c.b16 %v1151, %v1148
        %v1179 = vpack.c.b16 %v1152, %v1149
        %v1180 = vpack.c.b16 %v1156, %v1153
        %v1181 = vpack.c.b16 %v1157, %v1154
        %v1182 = vpack.c.b16 %v1158, %v1155
        %1207 = vmatprep.subr.bf16.mxu0 %v1160
        %1208 = vmatpush1.bf16.msra.mxu0 %v1159
        %1209 = vmatprep.subr.bf16.mxu0 %v1163
        %1210 = vmatpush1.bf16.msra.mxu0 %v1162
        %1211 = vmatprep.subr.bf16.mxu0 %v1166
        %1212 = vmatpush1.bf16.msra.mxu0 %v1165
        %1213 = vmatprep.subr.bf16.mxu0 %v1169
        %1214 = vmatpush1.bf16.msra.mxu0 %v1168
        %1215 = vmatprep.subr.bf16.mxu0 %v1172
        %1216 = vmatpush1.bf16.msra.mxu0 %v1171
        %1217 = vmatprep.subr.bf16.mxu0 %v1175
        %1218 = vmatpush1.bf16.msra.mxu0 %v1174
        %1219 = vmatprep.subr.bf16.mxu0 %v1178
        %1220 = vmatpush1.bf16.msra.mxu0 %v1177
        %1221 = vmatprep.subr.bf16.mxu0 %v1181
        %1222 = vmatpush1.bf16.msra.mxu0 %v1180
        %1223 = vmatprep.subr.bf16.mxu0 0
        %1224 = vmatpush1.bf16.msra.mxu0 0
        %1225 = vmatprep.subr.bf16.mxu0 0
        %1226 = vmatpush1.bf16.msra.mxu0 0
        %1227 = vmatprep.subr.bf16.mxu0 0
        %1228 = vmatpush1.bf16.msra.mxu0 0
        %1229 = vmatprep.subr.bf16.mxu0 0
        %1230 = vmatpush1.bf16.msra.mxu0 0
        %1231 = vmatprep.subr.bf16.mxu0 0
        %1232 = vmatpush1.bf16.msra.mxu0 0
        %1233 = vmatprep.subr.bf16.mxu0 0
        %1234 = vmatpush1.bf16.msra.mxu0 0
        %1235 = vmatprep.subr.bf16.mxu0 0
        %1236 = vmatpush1.bf16.msra.mxu0 0
        %1237 = vmatprep.subr.bf16.mxu0 0
        %1238 = vmatpush1.bf16.msra.mxu0 0
        %1239 = vmatprep.mubr.bf16.mxu0 0
        %1240 = vmatmul.mubr.bf16.gmra.mrb[0].mxu0 %v1071
        %v1241 = vpop.f32.mrb[0].mxu0
        %v1242 = vadd.f32 0.0, %v1241
        %v1243 = vpop.f32.mrb[0].mxu0
        %v1244 = vadd.f32 0.0, %v1243
        %v1245 = vpop.f32.mrb[0].mxu0
        %v1246 = vadd.f32 0.0, %v1245
        %v1247 = vpop.f32.mrb[0].mxu0
        %v1248 = vadd.f32 0.0, %v1247
        %1249 = vmatprep.mubr.bf16.mxu0 0
        %1250 = vmatmul.mubr.bf16.gmra.mrb[0].mxu0 %v1072
        %v1251 = vpop.f32.mrb[0].mxu0
        %v1252 = vadd.f32 0.0, %v1251
        %v1253 = vpop.f32.mrb[0].mxu0
        %v1254 = vadd.f32 0.0, %v1253
        %v1255 = vpop.f32.mrb[0].mxu0
        %v1256 = vadd.f32 0.0, %v1255
        %v1257 = vpop.f32.mrb[0].mxu0
        %v1258 = vadd.f32 0.0, %v1257
        %1259 = vmatprep.mubr.bf16.mxu0 0
        %1260 = vmatmul.mubr.bf16.gmra.mrb[0].mxu0 %v1073
        %v1261 = vpop.f32.mrb[0].mxu0
        %v1262 = vadd.f32 0.0, %v1261
        %v1263 = vpop.f32.mrb[0].mxu0
        %v1264 = vadd.f32 0.0, %v1263
        %v1265 = vpop.f32.mrb[0].mxu0
        %v1266 = vadd.f32 0.0, %v1265
        %v1267 = vpop.f32.mrb[0].mxu0
        %v1268 = vadd.f32 0.0, %v1267
        %1269 = vmatprep.mubr.bf16.mxu0 0
        %1270 = vmatmul.mubr.bf16.gmra.mrb[0].mxu0 %v1074
        %v1271 = vpop.f32.mrb[0].mxu0
        %v1272 = vadd.f32 0.0, %v1271
        %v1273 = vpop.f32.mrb[0].mxu0
        %v1274 = vadd.f32 0.0, %v1273
        %v1275 = vpop.f32.mrb[0].mxu0
        %v1276 = vadd.f32 0.0, %v1275
        %v1277 = vpop.f32.mrb[0].mxu0
        %v1278 = vadd.f32 0.0, %v1277
        %1279 = vdwg.mxu0
        %1280 = vmatprep.subr.bf16.mxu0 0
        %1281 = vmatpush1.bf16.msra.mxu0 %v1161
        %1282 = vmatprep.subr.bf16.mxu0 0
        %1283 = vmatpush1.bf16.msra.mxu0 %v1164
        %1284 = vmatprep.subr.bf16.mxu0 0
        %1285 = vmatpush1.bf16.msra.mxu0 %v1167
        %1286 = vmatprep.subr.bf16.mxu0 0
        %1287 = vmatpush1.bf16.msra.mxu0 %v1170
        %1288 = vmatprep.subr.bf16.mxu0 0
        %1289 = vmatpush1.bf16.msra.mxu0 %v1173
        %1290 = vmatprep.subr.bf16.mxu0 0
        %1291 = vmatpush1.bf16.msra.mxu0 %v1176
        %1292 = vmatprep.subr.bf16.mxu0 0
        %1293 = vmatpush1.bf16.msra.mxu0 %v1179
        %1294 = vmatprep.subr.bf16.mxu0 0
        %1295 = vmatpush1.bf16.msra.mxu0 %v1182
        %1296 = vmatprep.subr.bf16.mxu0 0
        %1297 = vmatpush1.bf16.msra.mxu0 0
        %1298 = vmatprep.subr.bf16.mxu0 0
        %1299 = vmatpush1.bf16.msra.mxu0 0
        %1300 = vmatprep.subr.bf16.mxu0 0
        %1301 = vmatpush1.bf16.msra.mxu0 0
        %1302 = vmatprep.subr.bf16.mxu0 0
        %1303 = vmatpush1.bf16.msra.mxu0 0
        %1304 = vmatprep.subr.bf16.mxu0 0
        %1305 = vmatpush1.bf16.msra.mxu0 0
        %1306 = vmatprep.subr.bf16.mxu0 0
        %1307 = vmatpush1.bf16.msra.mxu0 0
        %1308 = vmatprep.subr.bf16.mxu0 0
        %1309 = vmatpush1.bf16.msra.mxu0 0
        %1310 = vmatprep.subr.bf16.mxu0 0
        %1311 = vmatpush1.bf16.msra.mxu0 0
        %1312 = vmatprep.mubr.bf16.mxu0 0
        %1313 = vmatmul.mubr.bf16.gmra.mrb[0].mxu0 %v1071
        %v1314 = vpop.f32.mrb[0].mxu0
        %v1315 = vadd.f32 0.0, %v1314
        %v1316 = vpop.f32.mrb[0].mxu0
        %v1317 = vpop.f32.mrb[0].mxu0
        %v1318 = vadd.f32 0.0, %v1317
        %v1319 = vpop.f32.mrb[0].mxu0
        %1320 = vmatprep.mubr.bf16.mxu0 0
        %1321 = vmatmul.mubr.bf16.gmra.mrb[0].mxu0 %v1072
        %v1322 = vpop.f32.mrb[0].mxu0
        %v1323 = vadd.f32 0.0, %v1322
        %v1324 = vpop.f32.mrb[0].mxu0
        %v1325 = vpop.f32.mrb[0].mxu0
        %v1326 = vadd.f32 0.0, %v1325
        %v1327 = vpop.f32.mrb[0].mxu0
        %1328 = vmatprep.mubr.bf16.mxu0 0
        %1329 = vmatmul.mubr.bf16.gmra.mrb[0].mxu0 %v1073
        %v1330 = vpop.f32.mrb[0].mxu0
        %v1331 = vadd.f32 0.0, %v1330
        %v1332 = vpop.f32.mrb[0].mxu0
        %v1333 = vpop.f32.mrb[0].mxu0
        %v1334 = vadd.f32 0.0, %v1333
        %v1335 = vpop.f32.mrb[0].mxu0
        %1336 = vmatprep.mubr.bf16.mxu0 0
        %1337 = vmatmul.mubr.bf16.gmra.mrb[0].mxu0 %v1074
        %v1338 = vpop.f32.mrb[0].mxu0
        %v1339 = vadd.f32 0.0, %v1338
        %v1340 = vpop.f32.mrb[0].mxu0
        %v1341 = vpop.f32.mrb[0].mxu0
        %v1342 = vadd.f32 0.0, %v1341
        %v1343 = vpop.f32.mrb[0].mxu0
        %1344 = vdwg.mxu0
        %v1348 = vcombine.low %v977, %v979
        %v1349 = vcombine.high %v977, %v979
        %v1350 = vcombine.high %v1018, %v1018
        %v1352 = vunpack.c.l.s4 1966171168
        %v1353 = vunpack.c.0.s8 %v1352
        %v1354 = vlaneseq
        %v1355 = vshrl.u32 %v1354, 7
        %v1356 = vsub.s32 %v1353, %v1355
        %v1357 = vrot.slane %v1348, %v1356
        %v1359 = vunpack.c.l.s4 1966171168
        %v1360 = vunpack.c.0.s8 %v1359
        %v1361 = vlaneseq
        %v1362 = vshrl.u32 %v1361, 7
        %v1363 = vsub.s32 %v1360, %v1362
        %v1364 = vrot.slane %v1349, %v1363
        %v1366 = vunpack.c.l.s4 1966171168
        %v1367 = vunpack.c.0.s8 %v1366
        %v1368 = vlaneseq
        %v1369 = vshrl.u32 %v1368, 7
        %v1370 = vsub.s32 %v1367, %v1369
        %v1371 = vrot.slane %v1018, %v1370
        %v1373 = vunpack.c.l.s4 1966171168
        %v1374 = vunpack.c.0.s8 %v1373
        %v1375 = vlaneseq
        %v1376 = vshrl.u32 %v1375, 7
        %v1377 = vsub.s32 %v1374, %v1376
        %v1378 = vrot.slane %v1350, %v1377
        %v1379 = vcombine.low %v1357, %v1371
        %v1380 = vcombine.high %v1357, %v1371
        %v1381 = vcombine.low %v1364, %v1378
        %v1382 = vcombine.high %v1364, %v1378
        %v1384 = vunpack.c.l.s4 1966171168
        %v1385 = vunpack.c.0.s8 %v1384
        %v1386 = vlaneseq
        %v1387 = vshrl.u32 %v1386, 7
        %v1388 = vsub.s32 %v1385, %v1387
        %v1389 = vrot.slane %v1379, %v1388
        %v1391 = vunpack.c.l.s4 1966171168
        %v1392 = vunpack.c.0.s8 %v1391
        %v1393 = vlaneseq
        %v1394 = vshrl.u32 %v1393, 7
        %v1395 = vsub.s32 %v1392, %v1394
        %v1396 = vrot.slane %v1381, %v1395
        %v1398 = vunpack.c.l.s4 1966171168
        %v1399 = vunpack.c.0.s8 %v1398
        %v1400 = vlaneseq
        %v1401 = vshrl.u32 %v1400, 7
        %v1402 = vsub.s32 %v1399, %v1401
        %v1403 = vrot.slane %v1380, %v1402
        %v1405 = vunpack.c.l.s4 1966171168
        %v1406 = vunpack.c.0.s8 %v1405
        %v1407 = vlaneseq
        %v1408 = vshrl.u32 %v1407, 7
        %v1409 = vsub.s32 %v1406, %v1408
        %v1410 = vrot.slane %v1382, %v1409
        %v1411 = vcombine.high %v1389, %v1389
        %v1412 = vcombine.high %v1396, %v1396
        %v1413 = vcombine.high %v1403, %v1403
        %v1414 = vcombine.high %v1410, %v1410
        %v1415 = vlaneseq
        %v1416 = vshrl.u32 %v1415, 7
        %v1417 = vsub.s32 0, %v1416
        %v1418 = vrot.slane %v1389, %v1417
        %v1419 = vlaneseq
        %v1420 = vshrl.u32 %v1419, 7
        %v1421 = vsub.s32 1, %v1420
        %v1422 = vrot.slane %v1389, %v1421
        %v1423 = vlaneseq
        %v1424 = vshrl.u32 %v1423, 7
        %v1425 = vsub.s32 2, %v1424
        %v1426 = vrot.slane %v1389, %v1425
        %v1427 = vlaneseq
        %v1428 = vshrl.u32 %v1427, 7
        %v1429 = vsub.s32 0, %v1428
        %v1430 = vrot.slane %v1403, %v1429
        %v1431 = vlaneseq
        %v1432 = vshrl.u32 %v1431, 7
        %v1433 = vsub.s32 1, %v1432
        %v1434 = vrot.slane %v1403, %v1433
        %v1435 = vlaneseq
        %v1436 = vshrl.u32 %v1435, 7
        %v1437 = vsub.s32 2, %v1436
        %v1438 = vrot.slane %v1403, %v1437
        %v1439 = vlaneseq
        %v1440 = vshrl.u32 %v1439, 7
        %v1441 = vsub.s32 0, %v1440
        %v1442 = vrot.slane %v1411, %v1441
        %v1443 = vlaneseq
        %v1444 = vshrl.u32 %v1443, 7
        %v1445 = vsub.s32 1, %v1444
        %v1446 = vrot.slane %v1411, %v1445
        %v1447 = vlaneseq
        %v1448 = vshrl.u32 %v1447, 7
        %v1449 = vsub.s32 2, %v1448
        %v1450 = vrot.slane %v1411, %v1449
        %v1451 = vlaneseq
        %v1452 = vshrl.u32 %v1451, 7
        %v1453 = vsub.s32 0, %v1452
        %v1454 = vrot.slane %v1413, %v1453
        %v1455 = vlaneseq
        %v1456 = vshrl.u32 %v1455, 7
        %v1457 = vsub.s32 1, %v1456
        %v1458 = vrot.slane %v1413, %v1457
        %v1459 = vlaneseq
        %v1460 = vshrl.u32 %v1459, 7
        %v1461 = vsub.s32 2, %v1460
        %v1462 = vrot.slane %v1413, %v1461
        %v1463 = vlaneseq
        %v1464 = vshrl.u32 %v1463, 7
        %v1465 = vsub.s32 0, %v1464
        %v1466 = vrot.slane %v1396, %v1465
        %v1467 = vlaneseq
        %v1468 = vshrl.u32 %v1467, 7
        %v1469 = vsub.s32 1, %v1468
        %v1470 = vrot.slane %v1396, %v1469
        %v1471 = vlaneseq
        %v1472 = vshrl.u32 %v1471, 7
        %v1473 = vsub.s32 2, %v1472
        %v1474 = vrot.slane %v1396, %v1473
        %v1475 = vlaneseq
        %v1476 = vshrl.u32 %v1475, 7
        %v1477 = vsub.s32 0, %v1476
        %v1478 = vrot.slane %v1410, %v1477
        %v1479 = vlaneseq
        %v1480 = vshrl.u32 %v1479, 7
        %v1481 = vsub.s32 1, %v1480
        %v1482 = vrot.slane %v1410, %v1481
        %v1483 = vlaneseq
        %v1484 = vshrl.u32 %v1483, 7
        %v1485 = vsub.s32 2, %v1484
        %v1486 = vrot.slane %v1410, %v1485
        %v1487 = vlaneseq
        %v1488 = vshrl.u32 %v1487, 7
        %v1489 = vsub.s32 0, %v1488
        %v1490 = vrot.slane %v1412, %v1489
        %v1491 = vlaneseq
        %v1492 = vshrl.u32 %v1491, 7
        %v1493 = vsub.s32 1, %v1492
        %v1494 = vrot.slane %v1412, %v1493
        %v1495 = vlaneseq
        %v1496 = vshrl.u32 %v1495, 7
        %v1497 = vsub.s32 2, %v1496
        %v1498 = vrot.slane %v1412, %v1497
        %v1499 = vlaneseq
        %v1500 = vshrl.u32 %v1499, 7
        %v1501 = vsub.s32 0, %v1500
        %v1502 = vrot.slane %v1414, %v1501
        %v1503 = vlaneseq
        %v1504 = vshrl.u32 %v1503, 7
        %v1505 = vsub.s32 1, %v1504
        %v1506 = vrot.slane %v1414, %v1505
        %v1507 = vlaneseq
        %v1508 = vshrl.u32 %v1507, 7
        %v1509 = vsub.s32 2, %v1508
        %v1510 = vrot.slane %v1414, %v1509
        %v1535 = vadd.f32 %v1242, %v1418
        %v1536 = vadd.f32 %v1244, %v1422
        %v1537 = vadd.f32 %v1315, %v1426
        %v1538 = vadd.f32 %v1246, %v1430
        %v1539 = vadd.f32 %v1248, %v1434
        %v1540 = vadd.f32 %v1318, %v1438
        %v1541 = vadd.f32 %v1252, %v1442
        %v1542 = vadd.f32 %v1254, %v1446
        %v1543 = vadd.f32 %v1323, %v1450
        %v1544 = vadd.f32 %v1256, %v1454
        %v1545 = vadd.f32 %v1258, %v1458
        %v1546 = vadd.f32 %v1326, %v1462
        %v1547 = vadd.f32 %v1262, %v1466
        %v1548 = vadd.f32 %v1264, %v1470
        %v1549 = vadd.f32 %v1331, %v1474
        %v1550 = vadd.f32 %v1266, %v1478
        %v1551 = vadd.f32 %v1268, %v1482
        %v1552 = vadd.f32 %v1334, %v1486
        %v1553 = vadd.f32 %v1272, %v1490
        %v1554 = vadd.f32 %v1274, %v1494
        %v1555 = vadd.f32 %v1339, %v1498
        %v1556 = vadd.f32 %v1276, %v1502
        %v1557 = vadd.f32 %v1278, %v1506
        %v1558 = vadd.f32 %v1342, %v1510
        %v1559 = vadd.f32 %v1535, %v719
        %v1560 = vadd.f32 %v1536, %v721
        %v1561 = vadd.f32 %v1537, %v760
        %v1562 = vadd.f32 %v1538, %v719
        %v1563 = vadd.f32 %v1539, %v721
        %v1564 = vadd.f32 %v1540, %v760
        %v1565 = vadd.f32 %v1541, %v719
        %v1566 = vadd.f32 %v1542, %v721
        %v1567 = vadd.f32 %v1543, %v760
        %v1568 = vadd.f32 %v1544, %v719
        %v1569 = vadd.f32 %v1545, %v721
        %v1570 = vadd.f32 %v1546, %v760
        %v1571 = vadd.f32 %v1547, %v719
        %v1572 = vadd.f32 %v1548, %v721
        %v1573 = vadd.f32 %v1549, %v760
        %v1574 = vadd.f32 %v1550, %v719
        %v1575 = vadd.f32 %v1551, %v721
        %v1576 = vadd.f32 %v1552, %v760
        %v1577 = vadd.f32 %v1553, %v719
        %v1578 = vadd.f32 %v1554, %v721
        %v1579 = vadd.f32 %v1555, %v760
        %v1580 = vadd.f32 %v1556, %v719
        %v1581 = vadd.f32 %v1557, %v721
        %v1582 = vadd.f32 %v1558, %v760
        %vm1583 = vcmp.ge.f32.partialorder %v1559, 0.0
        %vm1584 = vcmp.ge.f32.partialorder %v1560, 0.0
        %vm1585 = vcmp.ge.f32.partialorder %v1561, 0.0
        %vm1586 = vcmp.ge.f32.partialorder %v1562, 0.0
        %vm1587 = vcmp.ge.f32.partialorder %v1563, 0.0
        %vm1588 = vcmp.ge.f32.partialorder %v1564, 0.0
        %vm1589 = vcmp.ge.f32.partialorder %v1565, 0.0
        %vm1590 = vcmp.ge.f32.partialorder %v1566, 0.0
        %vm1591 = vcmp.ge.f32.partialorder %v1567, 0.0
        %vm1592 = vcmp.ge.f32.partialorder %v1568, 0.0
        %vm1593 = vcmp.ge.f32.partialorder %v1569, 0.0
        %vm1594 = vcmp.ge.f32.partialorder %v1570, 0.0
        %vm1595 = vcmp.ge.f32.partialorder %v1571, 0.0
        %vm1596 = vcmp.ge.f32.partialorder %v1572, 0.0
        %vm1597 = vcmp.ge.f32.partialorder %v1573, 0.0
        %vm1598 = vcmp.ge.f32.partialorder %v1574, 0.0
        %vm1599 = vcmp.ge.f32.partialorder %v1575, 0.0
        %vm1600 = vcmp.ge.f32.partialorder %v1576, 0.0
        %vm1601 = vcmp.ge.f32.partialorder %v1577, 0.0
        %vm1602 = vcmp.ge.f32.partialorder %v1578, 0.0
        %vm1603 = vcmp.ge.f32.partialorder %v1579, 0.0
        %vm1604 = vcmp.ge.f32.partialorder %v1580, 0.0
        %vm1605 = vcmp.ge.f32.partialorder %v1581, 0.0
        %vm1606 = vcmp.ge.f32.partialorder %v1582, 0.0
        %v1607 = vmul.f32 %v1559, 0.2
        %v1608 = vmul.f32 %v1560, 0.2
        %v1609 = vmul.f32 %v1561, 0.2
        %v1610 = vmul.f32 %v1562, 0.2
        %v1611 = vmul.f32 %v1563, 0.2
        %v1612 = vmul.f32 %v1564, 0.2
        %v1613 = vmul.f32 %v1565, 0.2
        %v1614 = vmul.f32 %v1566, 0.2
        %v1615 = vmul.f32 %v1567, 0.2
        %v1616 = vmul.f32 %v1568, 0.2
        %v1617 = vmul.f32 %v1569, 0.2
        %v1618 = vmul.f32 %v1570, 0.2
        %v1619 = vmul.f32 %v1571, 0.2
        %v1620 = vmul.f32 %v1572, 0.2
        %v1621 = vmul.f32 %v1573, 0.2
        %v1622 = vmul.f32 %v1574, 0.2
        %v1623 = vmul.f32 %v1575, 0.2
        %v1624 = vmul.f32 %v1576, 0.2
        %v1625 = vmul.f32 %v1577, 0.2
        %v1626 = vmul.f32 %v1578, 0.2
        %v1627 = vmul.f32 %v1579, 0.2
        %v1628 = vmul.f32 %v1580, 0.2
        %v1629 = vmul.f32 %v1581, 0.2
        %v1630 = vmul.f32 %v1582, 0.2
        %v1631 = vsel %vm1583, %v1559, %v1607
        %v1632 = vsel %vm1584, %v1560, %v1608
        %v1633 = vsel %vm1585, %v1561, %v1609
        %v1634 = vsel %vm1586, %v1562, %v1610
        %v1635 = vsel %vm1587, %v1563, %v1611
        %v1636 = vsel %vm1588, %v1564, %v1612
        %v1637 = vsel %vm1589, %v1565, %v1613
        %v1638 = vsel %vm1590, %v1566, %v1614
        %v1639 = vsel %vm1591, %v1567, %v1615
        %v1640 = vsel %vm1592, %v1568, %v1616
        %v1641 = vsel %vm1593, %v1569, %v1617
        %v1642 = vsel %vm1594, %v1570, %v1618
        %v1643 = vsel %vm1595, %v1571, %v1619
        %v1644 = vsel %vm1596, %v1572, %v1620
        %v1645 = vsel %vm1597, %v1573, %v1621
        %v1646 = vsel %vm1598, %v1574, %v1622
        %v1647 = vsel %vm1599, %v1575, %v1623
        %v1648 = vsel %vm1600, %v1576, %v1624
        %v1649 = vsel %vm1601, %v1577, %v1625
        %v1650 = vsel %vm1602, %v1578, %v1626
        %v1651 = vsel %vm1603, %v1579, %v1627
        %v1652 = vsel %vm1604, %v1580, %v1628
        %v1653 = vsel %vm1605, %v1581, %v1629
        %v1654 = vsel %vm1606, %v1582, %v1630
        %v1655 = vld [vmem:[%s9] sm:$0xff]
        %v1656 = vld [vmem:[%s9 + $0x8] sm:$0xff]
        %v1657 = vld [vmem:[%s9 + $0x10] sm:$0xff]
        %v1658 = vld [vmem:[%s9 + $0x18] sm:$0xff]
        %v1659 = vld [vmem:[%s9 + $0x20] sm:$0xff]
        %v1660 = vld [vmem:[%s9 + $0x28] sm:$0xff]
        %v1661 = vld [vmem:[%s9 + $0x30] sm:$0xff]
        %v1662 = vld [vmem:[%s9 + $0x38] sm:$0xff]
        %v1663 = vld [vmem:[%s9 + $0x40] sm:$0xff]
        %v1664 = vld [vmem:[%s9 + $0x48] sm:$0xff]
        %v1665 = vld [vmem:[%s9 + $0x50] sm:$0xff]
        %v1666 = vld [vmem:[%s9 + $0x58] sm:$0xff]
        %v1667 = vld [vmem:[%s9 + $0x60] sm:$0xff]
        %v1668 = vld [vmem:[%s9 + $0x68] sm:$0xff]
        %v1669 = vld [vmem:[%s9 + $0x70] sm:$0xff]
        %v1670 = vld [vmem:[%s9 + $0x78] sm:$0xff]
        %v1671 = vld [vmem:[%s9 + $0x80] sm:$0xff]
        %v1672 = vld [vmem:[%s9 + $0x88] sm:$0xff]
        %v1673 = vld [vmem:[%s9 + $0x90] sm:$0xff]
        %v1674 = vld [vmem:[%s9 + $0x98] sm:$0xff]
        %v1675 = vld [vmem:[%s9 + $0xa0] sm:$0xff]
        %v1676 = vld [vmem:[%s9 + $0xa8] sm:$0xff]
        %v1677 = vld [vmem:[%s9 + $0xb0] sm:$0xff]
        %v1678 = vld [vmem:[%s9 + $0xb8] sm:$0xff]
        %v1679 = vld [vmem:[%s9 + $0xc0] sm:$0xff]
        %v1680 = vld [vmem:[%s9 + $0xc8] sm:$0xff]
        %v1681 = vld [vmem:[%s9 + $0xd0] sm:$0xff]
        %v1682 = vld [vmem:[%s9 + $0xd8] sm:$0xff]
        %v1683 = vld [vmem:[%s9 + $0xe0] sm:$0xff]
        %v1684 = vld [vmem:[%s9 + $0xe8] sm:$0xff]
        %v1685 = vld [vmem:[%s9 + $0xf0] sm:$0xff]
        %v1686 = vld [vmem:[%s9 + $0xf8] sm:$0xff]
        %v1687 = vld [vmem:[%s9 + $0x100] sm:$0xff]
        %v1688 = vld [vmem:[%s9 + $0x108] sm:$0xff]
        %v1689 = vld [vmem:[%s9 + $0x110] sm:$0xff]
        %v1690 = vld [vmem:[%s9 + $0x118] sm:$0xff]
        %v1691 = vld [vmem:[%s9 + $0x120] sm:$0xff]
        %v1692 = vld [vmem:[%s9 + $0x128] sm:$0xff]
        %v1693 = vld [vmem:[%s9 + $0x130] sm:$0xff]
        %v1694 = vld [vmem:[%s9 + $0x138] sm:$0xff]
        %vm1695 = vcmask 523264
        %v1697 = vsel %vm1695, %v1633, 0
        %v1700 = vsel %vm1695, %v1636, 0
        %v1703 = vsel %vm1695, %v1639, 0
        %v1706 = vsel %vm1695, %v1642, 0
        %v1709 = vsel %vm1695, %v1645, 0
        %v1712 = vsel %vm1695, %v1648, 0
        %v1715 = vsel %vm1695, %v1651, 0
        %v1718 = vsel %vm1695, %v1654, 0
        %1720 = vmatprep.subr.mxu0 0.0
        %1721 = vmatpush1.msra.mxu0 %v1655
        %1722 = vmatprep.subr.mxu0 0.0
        %1723 = vmatpush1.msra.mxu0 %v1656
        %1724 = vmatprep.subr.mxu0 0.0
        %1725 = vmatpush1.msra.mxu0 %v1657
        %1726 = vmatprep.subr.mxu0 0.0
        %1727 = vmatpush1.msra.mxu0 %v1658
        %1728 = vmatprep.subr.mxu0 0.0
        %1729 = vmatpush1.msra.mxu0 %v1659
        %1730 = vmatprep.subr.mxu0 0.0
        %1731 = vmatpush1.msra.mxu0 %v1660
        %1732 = vmatprep.subr.mxu0 0.0
        %1733 = vmatpush1.msra.mxu0 %v1661
        %1734 = vmatprep.subr.mxu0 0.0
        %1735 = vmatpush1.msra.mxu0 %v1662
        %1736 = vmatprep.subr.mxu0 0.0
        %1737 = vmatpush1.msra.mxu0 %v1663
        %1738 = vmatprep.subr.mxu0 0.0
        %1739 = vmatpush1.msra.mxu0 %v1664
        %1740 = vmatprep.subr.mxu0 0.0
        %1741 = vmatpush1.msra.mxu0 %v1665
        %1742 = vmatprep.subr.mxu0 0.0
        %1743 = vmatpush1.msra.mxu0 %v1666
        %1744 = vmatprep.subr.mxu0 0.0
        %1745 = vmatpush1.msra.mxu0 %v1667
        %1746 = vmatprep.subr.mxu0 0.0
        %1747 = vmatpush1.msra.mxu0 %v1668
        %1748 = vmatprep.subr.mxu0 0.0
        %1749 = vmatpush1.msra.mxu0 %v1669
        %1750 = vmatprep.subr.mxu0 0.0
        %1751 = vmatpush1.msra.mxu0 %v1670
        %1752 = vmatprep.subr.mxu0 0.0
        %1753 = vmatpush1.msra.mxu0 %v1671
        %1754 = vmatprep.subr.mxu0 0.0
        %1755 = vmatpush1.msra.mxu0 %v1672
        %1756 = vmatprep.subr.mxu0 0.0
        %1757 = vmatpush1.msra.mxu0 %v1673
        %1758 = vmatprep.subr.mxu0 0.0
        %1759 = vmatpush1.msra.mxu0 %v1674
        %1760 = vmatprep.subr.mxu0 0.0
        %1761 = vmatpush1.msra.mxu0 %v1675
        %1762 = vmatprep.subr.mxu0 0.0
        %1763 = vmatpush1.msra.mxu0 %v1676
        %1764 = vmatprep.subr.mxu0 0.0
        %1765 = vmatpush1.msra.mxu0 %v1677
        %1766 = vmatprep.subr.mxu0 0.0
        %1767 = vmatpush1.msra.mxu0 %v1678
        %1768 = vmatprep.subr.mxu0 0.0
        %1769 = vmatpush1.msra.mxu0 %v1679
        %1770 = vmatprep.subr.mxu0 0.0
        %1771 = vmatpush1.msra.mxu0 %v1680
        %1772 = vmatprep.subr.mxu0 0.0
        %1773 = vmatpush1.msra.mxu0 %v1681
        %1774 = vmatprep.subr.mxu0 0.0
        %1775 = vmatpush1.msra.mxu0 %v1682
        %1776 = vmatprep.subr.mxu0 0.0
        %1777 = vmatpush1.msra.mxu0 %v1683
        %1778 = vmatprep.subr.mxu0 0.0
        %1779 = vmatpush1.msra.mxu0 %v1684
        %1780 = vmatprep.subr.mxu0 0.0
        %1781 = vmatpush1.msra.mxu0 %v1685
        %1782 = vmatprep.subr.mxu0 0.0
        %1783 = vmatpush1.msra.mxu0 %v1686
        %1784 = vmatprep.mubr.f32.mxu0 %v1632
        %1785 = vmatmul.mubr.f32.gmra.mrb[0].mxu0 %v1631
        %v1786 = vpop.f32.mrb[0].mxu0
        %v1787 = vadd.f32 0.0, %v1786
        %v1788 = vpop.f32.mrb[0].mxu0
        %1789 = vmatprep.mubr.f32.mxu0 %v1635
        %1790 = vmatmul.mubr.f32.gmra.mrb[0].mxu0 %v1634
        %v1791 = vpop.f32.mrb[0].mxu0
        %v1792 = vadd.f32 0.0, %v1791
        %v1793 = vpop.f32.mrb[0].mxu0
        %1794 = vmatprep.mubr.f32.mxu0 %v1638
        %1795 = vmatmul.mubr.f32.gmra.mrb[0].mxu0 %v1637
        %v1796 = vpop.f32.mrb[0].mxu0
        %v1797 = vadd.f32 0.0, %v1796
        %v1798 = vpop.f32.mrb[0].mxu0
        %1799 = vmatprep.mubr.f32.mxu0 %v1641
        %1800 = vmatmul.mubr.f32.gmra.mrb[0].mxu0 %v1640
        %v1801 = vpop.f32.mrb[0].mxu0
        %v1802 = vadd.f32 0.0, %v1801
        %v1803 = vpop.f32.mrb[0].mxu0
        %1804 = vmatprep.mubr.f32.mxu0 %v1644
        %1805 = vmatmul.mubr.f32.gmra.mrb[0].mxu0 %v1643
        %v1806 = vpop.f32.mrb[0].mxu0
        %v1807 = vadd.f32 0.0, %v1806
        %v1808 = vpop.f32.mrb[0].mxu0
        %1809 = vmatprep.mubr.f32.mxu0 %v1647
        %1810 = vmatmul.mubr.f32.gmra.mrb[0].mxu0 %v1646
        %v1811 = vpop.f32.mrb[0].mxu0
        %v1812 = vadd.f32 0.0, %v1811
        %v1813 = vpop.f32.mrb[0].mxu0
        %1814 = vmatprep.mubr.f32.mxu0 %v1650
        %1815 = vmatmul.mubr.f32.gmra.mrb[0].mxu0 %v1649
        %v1816 = vpop.f32.mrb[0].mxu0
        %v1817 = vadd.f32 0.0, %v1816
        %v1818 = vpop.f32.mrb[0].mxu0
        %1819 = vmatprep.mubr.f32.mxu0 %v1653
        %1820 = vmatmul.mubr.f32.gmra.mrb[0].mxu0 %v1652
        %v1821 = vpop.f32.mrb[0].mxu0
        %v1822 = vadd.f32 0.0, %v1821
        %v1823 = vpop.f32.mrb[0].mxu0
        %1824 = vdwg.mxu0
        %1825 = vmatprep.subr.mxu0 0.0
        %1826 = vmatpush1.msra.mxu0 %v1687
        %1827 = vmatprep.subr.mxu0 0.0
        %1828 = vmatpush1.msra.mxu0 %v1688
        %1829 = vmatprep.subr.mxu0 0.0
        %1830 = vmatpush1.msra.mxu0 %v1689
        %1831 = vmatprep.subr.mxu0 0.0
        %1832 = vmatpush1.msra.mxu0 %v1690
        %1833 = vmatprep.subr.mxu0 0.0
        %1834 = vmatpush1.msra.mxu0 %v1691
        %1835 = vmatprep.subr.mxu0 0.0
        %1836 = vmatpush1.msra.mxu0 %v1692
        %1837 = vmatprep.subr.mxu0 0.0
        %1838 = vmatpush1.msra.mxu0 %v1693
        %1839 = vmatprep.subr.mxu0 0.0
        %1840 = vmatpush1.msra.mxu0 %v1694
        %1841 = vmatprep.subr.mxu0 0.0
        %1842 = vmatpush1.msra.mxu0 0.0
        %1843 = vmatprep.subr.mxu0 0.0
        %1844 = vmatpush1.msra.mxu0 0.0
        %1845 = vmatprep.subr.mxu0 0.0
        %1846 = vmatpush1.msra.mxu0 0.0
        %1847 = vmatprep.subr.mxu0 0.0
        %1848 = vmatpush1.msra.mxu0 0.0
        %1849 = vmatprep.subr.mxu0 0.0
        %1850 = vmatpush1.msra.mxu0 0.0
        %1851 = vmatprep.subr.mxu0 0.0
        %1852 = vmatpush1.msra.mxu0 0.0
        %1853 = vmatprep.subr.mxu0 0.0
        %1854 = vmatpush1.msra.mxu0 0.0
        %1855 = vmatprep.subr.mxu0 0.0
        %1856 = vmatpush1.msra.mxu0 0.0
        %1857 = vmatprep.subr.mxu0 0.0
        %1858 = vmatpush1.msra.mxu0 0.0
        %1859 = vmatprep.subr.mxu0 0.0
        %1860 = vmatpush1.msra.mxu0 0.0
        %1861 = vmatprep.subr.mxu0 0.0
        %1862 = vmatpush1.msra.mxu0 0.0
        %1863 = vmatprep.subr.mxu0 0.0
        %1864 = vmatpush1.msra.mxu0 0.0
        %1865 = vmatprep.subr.mxu0 0.0
        %1866 = vmatpush1.msra.mxu0 0.0
        %1867 = vmatprep.subr.mxu0 0.0
        %1868 = vmatpush1.msra.mxu0 0.0
        %1869 = vmatprep.subr.mxu0 0.0
        %1870 = vmatpush1.msra.mxu0 0.0
        %1871 = vmatprep.subr.mxu0 0.0
        %1872 = vmatpush1.msra.mxu0 0.0
        %1873 = vmatprep.subr.mxu0 0.0
        %1874 = vmatpush1.msra.mxu0 0.0
        %1875 = vmatprep.subr.mxu0 0.0
        %1876 = vmatpush1.msra.mxu0 0.0
        %1877 = vmatprep.subr.mxu0 0.0
        %1878 = vmatpush1.msra.mxu0 0.0
        %1879 = vmatprep.subr.mxu0 0.0
        %1880 = vmatpush1.msra.mxu0 0.0
        %1881 = vmatprep.subr.mxu0 0.0
        %1882 = vmatpush1.msra.mxu0 0.0
        %1883 = vmatprep.subr.mxu0 0.0
        %1884 = vmatpush1.msra.mxu0 0.0
        %1885 = vmatprep.subr.mxu0 0.0
        %1886 = vmatpush1.msra.mxu0 0.0
        %1887 = vmatprep.subr.mxu0 0.0
        %1888 = vmatpush1.msra.mxu0 0.0
        %1889 = vmatprep.mubr.f32.mxu0 0.0
        %1890 = vmatmul.mubr.f32.gmra.mrb[0].mxu0 %v1697
        %v1891 = vpop.f32.mrb[0].mxu0
        %v1892 = vadd.f32 %v1787, %v1891
        %v1893 = vpop.f32.mrb[0].mxu0
        %1894 = vmatprep.mubr.f32.mxu0 0.0
        %1895 = vmatmul.mubr.f32.gmra.mrb[0].mxu0 %v1700
        %v1896 = vpop.f32.mrb[0].mxu0
        %v1897 = vadd.f32 %v1792, %v1896
        %v1898 = vpop.f32.mrb[0].mxu0
        %1899 = vmatprep.mubr.f32.mxu0 0.0
        %1900 = vmatmul.mubr.f32.gmra.mrb[0].mxu0 %v1703
        %v1901 = vpop.f32.mrb[0].mxu0
        %v1902 = vadd.f32 %v1797, %v1901
        %v1903 = vpop.f32.mrb[0].mxu0
        %1904 = vmatprep.mubr.f32.mxu0 0.0
        %1905 = vmatmul.mubr.f32.gmra.mrb[0].mxu0 %v1706
        %v1906 = vpop.f32.mrb[0].mxu0
        %v1907 = vadd.f32 %v1802, %v1906
        %v1908 = vpop.f32.mrb[0].mxu0
        %1909 = vmatprep.mubr.f32.mxu0 0.0
        %1910 = vmatmul.mubr.f32.gmra.mrb[0].mxu0 %v1709
        %v1911 = vpop.f32.mrb[0].mxu0
        %v1912 = vadd.f32 %v1807, %v1911
        %v1913 = vpop.f32.mrb[0].mxu0
        %1914 = vmatprep.mubr.f32.mxu0 0.0
        %1915 = vmatmul.mubr.f32.gmra.mrb[0].mxu0 %v1712
        %v1916 = vpop.f32.mrb[0].mxu0
        %v1917 = vadd.f32 %v1812, %v1916
        %v1918 = vpop.f32.mrb[0].mxu0
        %1919 = vmatprep.mubr.f32.mxu0 0.0
        %1920 = vmatmul.mubr.f32.gmra.mrb[0].mxu0 %v1715
        %v1921 = vpop.f32.mrb[0].mxu0
        %v1922 = vadd.f32 %v1817, %v1921
        %v1923 = vpop.f32.mrb[0].mxu0
        %1924 = vmatprep.mubr.f32.mxu0 0.0
        %1925 = vmatmul.mubr.f32.gmra.mrb[0].mxu0 %v1718
        %v1926 = vpop.f32.mrb[0].mxu0
        %v1927 = vadd.f32 %v1822, %v1926
        %v1928 = vpop.f32.mrb[0].mxu0
        %1929 = vdwg.mxu0
        %vm1930 = vcmp.gt.f32.partialorder %v491, 0.0
        %vm1931 = vcmp.gt.f32.partialorder %v492, 0.0
        %vm1932 = vcmp.gt.f32.partialorder %v493, 0.0
        %vm1933 = vcmp.gt.f32.partialorder %v494, 0.0
        %vm1934 = vcmp.gt.f32.partialorder %v495, 0.0
        %vm1935 = vcmp.gt.f32.partialorder %v496, 0.0
        %vm1936 = vcmp.gt.f32.partialorder %v497, 0.0
        %vm1937 = vcmp.gt.f32.partialorder %v498, 0.0
        %v1938 = vsel %vm1930, 1, 0
        %v1939 = vsel %vm1931, 1, 0
        %v1940 = vsel %vm1932, 1, 0
        %v1941 = vsel %vm1933, 1, 0
        %v1942 = vsel %vm1934, 1, 0
        %v1943 = vsel %vm1935, 1, 0
        %v1944 = vsel %vm1936, 1, 0
        %v1945 = vsel %vm1937, 1, 0
        %1946 = vset.pattern.permute.xlu0 0
        %1947 = vperm.xlu0 %1946, %v1938
        %v1948 = vpop.permute.xlu0 %1947
        %1949 = vset.pattern.permute.xlu0 0
        %1950 = vperm.xlu0 %1949, %v1939
        %v1951 = vpop.permute.xlu0 %1950
        %1952 = vset.pattern.permute.xlu0 0
        %1953 = vperm.xlu0 %1952, %v1940
        %v1954 = vpop.permute.xlu0 %1953
        %1955 = vset.pattern.permute.xlu0 0
        %1956 = vperm.xlu0 %1955, %v1941
        %v1957 = vpop.permute.xlu0 %1956
        %1958 = vset.pattern.permute.xlu0 0
        %1959 = vperm.xlu0 %1958, %v1942
        %v1960 = vpop.permute.xlu0 %1959
        %1961 = vset.pattern.permute.xlu0 0
        %1962 = vperm.xlu0 %1961, %v1943
        %v1963 = vpop.permute.xlu0 %1962
        %1964 = vset.pattern.permute.xlu0 0
        %1965 = vperm.xlu0 %1964, %v1944
        %v1966 = vpop.permute.xlu0 %1965
        %1967 = vset.pattern.permute.xlu0 0
        %1968 = vperm.xlu0 %1967, %v1945
        %v1969 = vpop.permute.xlu0 %1968
        %vm1970 = vcmp.eq.s32.totalorder %v1948, 1
        %vm1971 = vcmp.eq.s32.totalorder %v1951, 1
        %vm1972 = vcmp.eq.s32.totalorder %v1954, 1
        %vm1973 = vcmp.eq.s32.totalorder %v1957, 1
        %vm1974 = vcmp.eq.s32.totalorder %v1960, 1
        %vm1975 = vcmp.eq.s32.totalorder %v1963, 1
        %vm1976 = vcmp.eq.s32.totalorder %v1966, 1
        %vm1977 = vcmp.eq.s32.totalorder %v1969, 1
        %v1978 = vsel %vm1970, %v1892, -1e+30
        %v1979 = vsel %vm1971, %v1897, -1e+30
        %v1980 = vsel %vm1972, %v1902, -1e+30
        %v1981 = vsel %vm1973, %v1907, -1e+30
        %v1982 = vsel %vm1974, %v1912, -1e+30
        %v1983 = vsel %vm1975, %v1917, -1e+30
        %v1984 = vsel %vm1976, %v1922, -1e+30
        %v1985 = vsel %vm1977, %v1927, -1e+30
        %vm1986 = vcmask 80896
        %v1987 = vsel %vm1986, %v1978, -inf
        %v1988 = vrot.slane %v1987, 4
        %v1989 = vmax.f32 %v1987, %v1988
        %v1990 = vrot.slane %v1989, 2
        %v1991 = vmax.f32 %v1989, %v1990
        %v1992 = vrot.slane %v1991, 1
        %v1993 = vmax.f32 %v1991, %v1992
        %v1994 = vsel %vm1986, %v1979, -inf
        %v1995 = vrot.slane %v1994, 4
        %v1996 = vmax.f32 %v1994, %v1995
        %v1997 = vrot.slane %v1996, 2
        %v1998 = vmax.f32 %v1996, %v1997
        %v1999 = vrot.slane %v1998, 1
        %v2000 = vmax.f32 %v1998, %v1999
        %v2001 = vsel %vm1986, %v1980, -inf
        %v2002 = vrot.slane %v2001, 4
        %v2003 = vmax.f32 %v2001, %v2002
        %v2004 = vrot.slane %v2003, 2
        %v2005 = vmax.f32 %v2003, %v2004
        %v2006 = vrot.slane %v2005, 1
        %v2007 = vmax.f32 %v2005, %v2006
        %v2008 = vsel %vm1986, %v1981, -inf
        %v2009 = vrot.slane %v2008, 4
        %v2010 = vmax.f32 %v2008, %v2009
        %v2011 = vrot.slane %v2010, 2
        %v2012 = vmax.f32 %v2010, %v2011
        %v2013 = vrot.slane %v2012, 1
        %v2014 = vmax.f32 %v2012, %v2013
        %v2015 = vsel %vm1986, %v1982, -inf
        %v2016 = vrot.slane %v2015, 4
        %v2017 = vmax.f32 %v2015, %v2016
        %v2018 = vrot.slane %v2017, 2
        %v2019 = vmax.f32 %v2017, %v2018
        %v2020 = vrot.slane %v2019, 1
        %v2021 = vmax.f32 %v2019, %v2020
        %v2022 = vsel %vm1986, %v1983, -inf
        %v2023 = vrot.slane %v2022, 4
        %v2024 = vmax.f32 %v2022, %v2023
        %v2025 = vrot.slane %v2024, 2
        %v2026 = vmax.f32 %v2024, %v2025
        %v2027 = vrot.slane %v2026, 1
        %v2028 = vmax.f32 %v2026, %v2027
        %v2029 = vsel %vm1986, %v1984, -inf
        %v2030 = vrot.slane %v2029, 4
        %v2031 = vmax.f32 %v2029, %v2030
        %v2032 = vrot.slane %v2031, 2
        %v2033 = vmax.f32 %v2031, %v2032
        %v2034 = vrot.slane %v2033, 1
        %v2035 = vmax.f32 %v2033, %v2034
        %v2036 = vsel %vm1986, %v1985, -inf
        %v2037 = vrot.slane %v2036, 4
        %v2038 = vmax.f32 %v2036, %v2037
        %v2039 = vrot.slane %v2038, 2
        %v2040 = vmax.f32 %v2038, %v2039
        %v2041 = vrot.slane %v2040, 1
        %v2042 = vmax.f32 %v2040, %v2041
        %v2043 = vsub.f32 %v1978, %v1993
        %v2044 = vsub.f32 %v1979, %v2000
        %v2045 = vsub.f32 %v1980, %v2007
        %v2046 = vsub.f32 %v1981, %v2014
        %v2047 = vsub.f32 %v1982, %v2021
        %v2048 = vsub.f32 %v1983, %v2028
        %v2049 = vsub.f32 %v1984, %v2035
        %v2050 = vsub.f32 %v1985, %v2042
        %v2051 = vmul.f32 %v2043, 1.442695
        %v2052 = vpow.pop %v2051
        %v2053 = vmul.f32 %v2044, 1.442695
        %v2054 = vpow.pop %v2053
        %v2055 = vmul.f32 %v2045, 1.442695
        %v2056 = vpow.pop %v2055
        %v2057 = vmul.f32 %v2046, 1.442695
        %v2058 = vpow.pop %v2057
        %v2059 = vmul.f32 %v2047, 1.442695
        %v2060 = vpow.pop %v2059
        %v2061 = vmul.f32 %v2048, 1.442695
        %v2062 = vpow.pop %v2061
        %v2063 = vmul.f32 %v2049, 1.442695
        %v2064 = vpow.pop %v2063
        %v2065 = vmul.f32 %v2050, 1.442695
        %v2066 = vpow.pop %v2065
        %2068 = vset.pattern.permute.xlu0 0
        %2069 = vperm.xlu0 %2068, %v491
        %v2070 = vpop.permute.xlu0 %2069
        %2073 = vset.pattern.permute.xlu0 0
        %2074 = vperm.xlu0 %2073, %v492
        %v2075 = vpop.permute.xlu0 %2074
        %2078 = vset.pattern.permute.xlu0 0
        %2079 = vperm.xlu0 %2078, %v493
        %v2080 = vpop.permute.xlu0 %2079
        %2083 = vset.pattern.permute.xlu0 0
        %2084 = vperm.xlu0 %2083, %v494
        %v2085 = vpop.permute.xlu0 %2084
        %2088 = vset.pattern.permute.xlu0 0
        %2089 = vperm.xlu0 %2088, %v495
        %v2090 = vpop.permute.xlu0 %2089
        %2093 = vset.pattern.permute.xlu0 0
        %2094 = vperm.xlu0 %2093, %v496
        %v2095 = vpop.permute.xlu0 %2094
        %2098 = vset.pattern.permute.xlu0 0
        %2099 = vperm.xlu0 %2098, %v497
        %v2100 = vpop.permute.xlu0 %2099
        %2103 = vset.pattern.permute.xlu0 0
        %2104 = vperm.xlu0 %2103, %v498
        %v2105 = vpop.permute.xlu0 %2104
        %v2107 = vmul.f32 %v2052, %v2070
        %v2108 = vmul.f32 %v2054, %v2075
        %v2109 = vmul.f32 %v2056, %v2080
        %v2110 = vmul.f32 %v2058, %v2085
        %v2111 = vmul.f32 %v2060, %v2090
        %v2112 = vmul.f32 %v2062, %v2095
        %v2113 = vmul.f32 %v2064, %v2100
        %v2114 = vmul.f32 %v2066, %v2105
        %v2115 = vsel %vm1986, %v2107, 0.0
        %v2116 = vrot.slane %v2115, 4
        %v2117 = vadd.f32 %v2115, %v2116
        %v2118 = vrot.slane %v2117, 2
        %v2119 = vadd.f32 %v2117, %v2118
        %v2120 = vrot.slane %v2119, 1
        %v2121 = vadd.f32 %v2119, %v2120
        %v2122 = vsel %vm1986, %v2108, 0.0
        %v2123 = vrot.slane %v2122, 4
        %v2124 = vadd.f32 %v2122, %v2123
        %v2125 = vrot.slane %v2124, 2
        %v2126 = vadd.f32 %v2124, %v2125
        %v2127 = vrot.slane %v2126, 1
        %v2128 = vadd.f32 %v2126, %v2127
        %v2129 = vsel %vm1986, %v2109, 0.0
        %v2130 = vrot.slane %v2129, 4
        %v2131 = vadd.f32 %v2129, %v2130
        %v2132 = vrot.slane %v2131, 2
        %v2133 = vadd.f32 %v2131, %v2132
        %v2134 = vrot.slane %v2133, 1
        %v2135 = vadd.f32 %v2133, %v2134
        %v2136 = vsel %vm1986, %v2110, 0.0
        %v2137 = vrot.slane %v2136, 4
        %v2138 = vadd.f32 %v2136, %v2137
        %v2139 = vrot.slane %v2138, 2
        %v2140 = vadd.f32 %v2138, %v2139
        %v2141 = vrot.slane %v2140, 1
        %v2142 = vadd.f32 %v2140, %v2141
        %v2143 = vsel %vm1986, %v2111, 0.0
        %v2144 = vrot.slane %v2143, 4
        %v2145 = vadd.f32 %v2143, %v2144
        %v2146 = vrot.slane %v2145, 2
        %v2147 = vadd.f32 %v2145, %v2146
        %v2148 = vrot.slane %v2147, 1
        %v2149 = vadd.f32 %v2147, %v2148
        %v2150 = vsel %vm1986, %v2112, 0.0
        %v2151 = vrot.slane %v2150, 4
        %v2152 = vadd.f32 %v2150, %v2151
        %v2153 = vrot.slane %v2152, 2
        %v2154 = vadd.f32 %v2152, %v2153
        %v2155 = vrot.slane %v2154, 1
        %v2156 = vadd.f32 %v2154, %v2155
        %v2157 = vsel %vm1986, %v2113, 0.0
        %v2158 = vrot.slane %v2157, 4
        %v2159 = vadd.f32 %v2157, %v2158
        %v2160 = vrot.slane %v2159, 2
        %v2161 = vadd.f32 %v2159, %v2160
        %v2162 = vrot.slane %v2161, 1
        %v2163 = vadd.f32 %v2161, %v2162
        %v2164 = vsel %vm1986, %v2114, 0.0
        %v2165 = vrot.slane %v2164, 4
        %v2166 = vadd.f32 %v2164, %v2165
        %v2167 = vrot.slane %v2166, 2
        %v2168 = vadd.f32 %v2166, %v2167
        %v2169 = vrot.slane %v2168, 1
        %v2170 = vadd.f32 %v2168, %v2169
        %v2171 = vmax.f32 %v2121, 1e-20
        %v2172 = vmax.f32 %v2128, 1e-20
        %v2173 = vmax.f32 %v2135, 1e-20
        %v2174 = vmax.f32 %v2142, 1e-20
        %v2175 = vmax.f32 %v2149, 1e-20
        %v2176 = vmax.f32 %v2156, 1e-20
        %v2177 = vmax.f32 %v2163, 1e-20
        %v2178 = vmax.f32 %v2170, 1e-20
        %v2179 = vmul.f32 %v2171, 10.0
        %v2180 = vmul.f32 %v2172, 10.0
        %v2181 = vmul.f32 %v2173, 10.0
        %v2182 = vmul.f32 %v2174, 10.0
        %v2183 = vmul.f32 %v2175, 10.0
        %v2184 = vmul.f32 %v2176, 10.0
        %v2185 = vmul.f32 %v2177, 10.0
        %v2186 = vmul.f32 %v2178, 10.0
        %v2187 = vrcp.pop %v2179
        %v2188 = vrcp.pop %v2180
        %v2189 = vrcp.pop %v2181
        %v2190 = vrcp.pop %v2182
        %v2191 = vrcp.pop %v2183
        %v2192 = vrcp.pop %v2184
        %v2193 = vrcp.pop %v2185
        %v2194 = vrcp.pop %v2186
        %v2195 = vmul.f32 %v2107, %v2187
        %v2196 = vmul.f32 %v2108, %v2188
        %v2197 = vmul.f32 %v2109, %v2189
        %v2198 = vmul.f32 %v2110, %v2190
        %v2199 = vmul.f32 %v2111, %v2191
        %v2200 = vmul.f32 %v2112, %v2192
        %v2201 = vmul.f32 %v2113, %v2193
        %v2202 = vmul.f32 %v2114, %v2194
        %2204 = vset.pattern.permute.xlu0 0
        %2205 = vperm.xlu0 %2204, %v2195
        %v2206 = vpop.permute.xlu0 %2205
        %2209 = vset.pattern.permute.xlu0 0
        %2210 = vperm.xlu0 %2209, %v2196
        %v2211 = vpop.permute.xlu0 %2210
        %2214 = vset.pattern.permute.xlu0 0
        %2215 = vperm.xlu0 %2214, %v2197
        %v2216 = vpop.permute.xlu0 %2215
        %2219 = vset.pattern.permute.xlu0 0
        %2220 = vperm.xlu0 %2219, %v2198
        %v2221 = vpop.permute.xlu0 %2220
        %2224 = vset.pattern.permute.xlu0 0
        %2225 = vperm.xlu0 %2224, %v2199
        %v2226 = vpop.permute.xlu0 %2225
        %2229 = vset.pattern.permute.xlu0 0
        %2230 = vperm.xlu0 %2229, %v2200
        %v2231 = vpop.permute.xlu0 %2230
        %2234 = vset.pattern.permute.xlu0 0
        %2235 = vperm.xlu0 %2234, %v2201
        %v2236 = vpop.permute.xlu0 %2235
        %2239 = vset.pattern.permute.xlu0 0
        %2240 = vperm.xlu0 %2239, %v2202
        %v2241 = vpop.permute.xlu0 %2240
        %v2243 = vmul.f32 %v2206, %v719
        %v2244 = vmul.f32 %v2211, %v719
        %v2245 = vmul.f32 %v2216, %v719
        %v2246 = vmul.f32 %v2221, %v719
        %v2247 = vmul.f32 %v2226, %v719
        %v2248 = vmul.f32 %v2231, %v719
        %v2249 = vmul.f32 %v2236, %v719
        %v2250 = vmul.f32 %v2241, %v719
        %vm2251 = vcmask 261120
        %v2252 = vsel %vm2251, %v2243, 0.0
        %v2253 = vrot.slane %v2252, 4
        %v2254 = vadd.f32 %v2252, %v2253
        %v2255 = vrot.slane %v2254, 2
        %v2256 = vadd.f32 %v2254, %v2255
        %v2257 = vrot.slane %v2256, 1
        %v2258 = vadd.f32 %v2256, %v2257
        %v2259 = vsel %vm2251, %v2244, 0.0
        %v2260 = vrot.slane %v2259, 4
        %v2261 = vadd.f32 %v2259, %v2260
        %v2262 = vrot.slane %v2261, 2
        %v2263 = vadd.f32 %v2261, %v2262
        %v2264 = vrot.slane %v2263, 1
        %v2265 = vadd.f32 %v2263, %v2264
        %v2266 = vsel %vm2251, %v2245, 0.0
        %v2267 = vrot.slane %v2266, 4
        %v2268 = vadd.f32 %v2266, %v2267
        %v2269 = vrot.slane %v2268, 2
        %v2270 = vadd.f32 %v2268, %v2269
        %v2271 = vrot.slane %v2270, 1
        %v2272 = vadd.f32 %v2270, %v2271
        %v2273 = vsel %vm2251, %v2246, 0.0
        %v2274 = vrot.slane %v2273, 4
        %v2275 = vadd.f32 %v2273, %v2274
        %v2276 = vrot.slane %v2275, 2
        %v2277 = vadd.f32 %v2275, %v2276
        %v2278 = vrot.slane %v2277, 1
        %v2279 = vadd.f32 %v2277, %v2278
        %v2280 = vsel %vm2251, %v2247, 0.0
        %v2281 = vrot.slane %v2280, 4
        %v2282 = vadd.f32 %v2280, %v2281
        %v2283 = vrot.slane %v2282, 2
        %v2284 = vadd.f32 %v2282, %v2283
        %v2285 = vrot.slane %v2284, 1
        %v2286 = vadd.f32 %v2284, %v2285
        %v2287 = vsel %vm2251, %v2248, 0.0
        %v2288 = vrot.slane %v2287, 4
        %v2289 = vadd.f32 %v2287, %v2288
        %v2290 = vrot.slane %v2289, 2
        %v2291 = vadd.f32 %v2289, %v2290
        %v2292 = vrot.slane %v2291, 1
        %v2293 = vadd.f32 %v2291, %v2292
        %v2294 = vsel %vm2251, %v2249, 0.0
        %v2295 = vrot.slane %v2294, 4
        %v2296 = vadd.f32 %v2294, %v2295
        %v2297 = vrot.slane %v2296, 2
        %v2298 = vadd.f32 %v2296, %v2297
        %v2299 = vrot.slane %v2298, 1
        %v2300 = vadd.f32 %v2298, %v2299
        %v2301 = vsel %vm2251, %v2250, 0.0
        %v2302 = vrot.slane %v2301, 4
        %v2303 = vadd.f32 %v2301, %v2302
        %v2304 = vrot.slane %v2303, 2
        %v2305 = vadd.f32 %v2303, %v2304
        %v2306 = vrot.slane %v2305, 1
        %v2307 = vadd.f32 %v2305, %v2306
        %v2308 = vadd.f32 %v2258, 0.0
        %v2309 = vadd.f32 %v2265, 0.0
        %v2310 = vadd.f32 %v2272, 0.0
        %v2311 = vadd.f32 %v2279, 0.0
        %v2312 = vadd.f32 %v2286, 0.0
        %v2313 = vadd.f32 %v2293, 0.0
        %v2314 = vadd.f32 %v2300, 0.0
        %v2315 = vadd.f32 %v2307, 0.0
        %2316 = vset.pattern.permute.xlu0 1
        %2317 = vperm.xlu0 %2316, %v2195
        %v2318 = vpop.permute.xlu0 %2317
        %2320 = vset.pattern.permute.xlu0 1
        %2321 = vperm.xlu0 %2320, %v2196
        %v2322 = vpop.permute.xlu0 %2321
        %2324 = vset.pattern.permute.xlu0 1
        %2325 = vperm.xlu0 %2324, %v2197
        %v2326 = vpop.permute.xlu0 %2325
        %2328 = vset.pattern.permute.xlu0 1
        %2329 = vperm.xlu0 %2328, %v2198
        %v2330 = vpop.permute.xlu0 %2329
        %2332 = vset.pattern.permute.xlu0 1
        %2333 = vperm.xlu0 %2332, %v2199
        %v2334 = vpop.permute.xlu0 %2333
        %2336 = vset.pattern.permute.xlu0 1
        %2337 = vperm.xlu0 %2336, %v2200
        %v2338 = vpop.permute.xlu0 %2337
        %2340 = vset.pattern.permute.xlu0 1
        %2341 = vperm.xlu0 %2340, %v2201
        %v2342 = vpop.permute.xlu0 %2341
        %2344 = vset.pattern.permute.xlu0 1
        %2345 = vperm.xlu0 %2344, %v2202
        %v2346 = vpop.permute.xlu0 %2345
        %v2348 = vmul.f32 %v2318, %v719
        %v2349 = vmul.f32 %v2322, %v719
        %v2350 = vmul.f32 %v2326, %v719
        %v2351 = vmul.f32 %v2330, %v719
        %v2352 = vmul.f32 %v2334, %v719
        %v2353 = vmul.f32 %v2338, %v719
        %v2354 = vmul.f32 %v2342, %v719
        %v2355 = vmul.f32 %v2346, %v719
        %vm2356 = vcmask 523520
        %v2357 = vsel %vm2356, %v2348, 0.0
        %v2358 = vrot.slane %v2357, 4
        %v2359 = vadd.f32 %v2357, %v2358
        %v2360 = vrot.slane %v2359, 2
        %v2361 = vadd.f32 %v2359, %v2360
        %v2362 = vrot.slane %v2361, 1
        %v2363 = vadd.f32 %v2361, %v2362
        %v2364 = vsel %vm2356, %v2349, 0.0
        %v2365 = vrot.slane %v2364, 4
        %v2366 = vadd.f32 %v2364, %v2365
        %v2367 = vrot.slane %v2366, 2
        %v2368 = vadd.f32 %v2366, %v2367
        %v2369 = vrot.slane %v2368, 1
        %v2370 = vadd.f32 %v2368, %v2369
        %v2371 = vsel %vm2356, %v2350, 0.0
        %v2372 = vrot.slane %v2371, 4
        %v2373 = vadd.f32 %v2371, %v2372
        %v2374 = vrot.slane %v2373, 2
        %v2375 = vadd.f32 %v2373, %v2374
        %v2376 = vrot.slane %v2375, 1
        %v2377 = vadd.f32 %v2375, %v2376
        %v2378 = vsel %vm2356, %v2351, 0.0
        %v2379 = vrot.slane %v2378, 4
        %v2380 = vadd.f32 %v2378, %v2379
        %v2381 = vrot.slane %v2380, 2
        %v2382 = vadd.f32 %v2380, %v2381
        %v2383 = vrot.slane %v2382, 1
        %v2384 = vadd.f32 %v2382, %v2383
        %v2385 = vsel %vm2356, %v2352, 0.0
        %v2386 = vrot.slane %v2385, 4
        %v2387 = vadd.f32 %v2385, %v2386
        %v2388 = vrot.slane %v2387, 2
        %v2389 = vadd.f32 %v2387, %v2388
        %v2390 = vrot.slane %v2389, 1
        %v2391 = vadd.f32 %v2389, %v2390
        %v2392 = vsel %vm2356, %v2353, 0.0
        %v2393 = vrot.slane %v2392, 4
        %v2394 = vadd.f32 %v2392, %v2393
        %v2395 = vrot.slane %v2394, 2
        %v2396 = vadd.f32 %v2394, %v2395
        %v2397 = vrot.slane %v2396, 1
        %v2398 = vadd.f32 %v2396, %v2397
        %v2399 = vsel %vm2356, %v2354, 0.0
        %v2400 = vrot.slane %v2399, 4
        %v2401 = vadd.f32 %v2399, %v2400
        %v2402 = vrot.slane %v2401, 2
        %v2403 = vadd.f32 %v2401, %v2402
        %v2404 = vrot.slane %v2403, 1
        %v2405 = vadd.f32 %v2403, %v2404
        %v2406 = vsel %vm2356, %v2355, 0.0
        %v2407 = vrot.slane %v2406, 4
        %v2408 = vadd.f32 %v2406, %v2407
        %v2409 = vrot.slane %v2408, 2
        %v2410 = vadd.f32 %v2408, %v2409
        %v2411 = vrot.slane %v2410, 1
        %v2412 = vadd.f32 %v2410, %v2411
        %2421 = vrot.lane.b32.xlu0 %v2363, 96
        %v2422 = vpop.permute.xlu0 %2421
        %2423 = vrot.lane.b32.xlu0 %v2370, 96
        %v2424 = vpop.permute.xlu0 %2423
        %2425 = vrot.lane.b32.xlu0 %v2377, 96
        %v2426 = vpop.permute.xlu0 %2425
        %2427 = vrot.lane.b32.xlu0 %v2384, 96
        %v2428 = vpop.permute.xlu0 %2427
        %2429 = vrot.lane.b32.xlu0 %v2391, 96
        %v2430 = vpop.permute.xlu0 %2429
        %2431 = vrot.lane.b32.xlu0 %v2398, 96
        %v2432 = vpop.permute.xlu0 %2431
        %2433 = vrot.lane.b32.xlu0 %v2405, 96
        %v2434 = vpop.permute.xlu0 %2433
        %2435 = vrot.lane.b32.xlu0 %v2412, 96
        %v2436 = vpop.permute.xlu0 %2435
        %v2445 = vadd.f32 %v2308, %v2422
        %v2446 = vadd.f32 %v2309, %v2424
        %v2447 = vadd.f32 %v2310, %v2426
        %v2448 = vadd.f32 %v2311, %v2428
        %v2449 = vadd.f32 %v2312, %v2430
        %v2450 = vadd.f32 %v2313, %v2432
        %v2451 = vadd.f32 %v2314, %v2434
        %v2452 = vadd.f32 %v2315, %v2436
        %2453 = vset.pattern.permute.xlu0 2
        %2454 = vperm.xlu0 %2453, %v2195
        %v2455 = vpop.permute.xlu0 %2454
        %2457 = vset.pattern.permute.xlu0 2
        %2458 = vperm.xlu0 %2457, %v2196
        %v2459 = vpop.permute.xlu0 %2458
        %2461 = vset.pattern.permute.xlu0 2
        %2462 = vperm.xlu0 %2461, %v2197
        %v2463 = vpop.permute.xlu0 %2462
        %2465 = vset.pattern.permute.xlu0 2
        %2466 = vperm.xlu0 %2465, %v2198
        %v2467 = vpop.permute.xlu0 %2466
        %2469 = vset.pattern.permute.xlu0 2
        %2470 = vperm.xlu0 %2469, %v2199
        %v2471 = vpop.permute.xlu0 %2470
        %2473 = vset.pattern.permute.xlu0 2
        %2474 = vperm.xlu0 %2473, %v2200
        %v2475 = vpop.permute.xlu0 %2474
        %2477 = vset.pattern.permute.xlu0 2
        %2478 = vperm.xlu0 %2477, %v2201
        %v2479 = vpop.permute.xlu0 %2478
        %2481 = vset.pattern.permute.xlu0 2
        %2482 = vperm.xlu0 %2481, %v2202
        %v2483 = vpop.permute.xlu0 %2482
        %v2485 = vmul.f32 %v2455, %v719
        %v2486 = vmul.f32 %v2459, %v719
        %v2487 = vmul.f32 %v2463, %v719
        %v2488 = vmul.f32 %v2467, %v719
        %v2489 = vmul.f32 %v2471, %v719
        %v2490 = vmul.f32 %v2475, %v719
        %v2491 = vmul.f32 %v2479, %v719
        %v2492 = vmul.f32 %v2483, %v719
        %vm2493 = vcmask 785920
        %v2494 = vsel %vm2493, %v2485, 0.0
        %v2495 = vrot.slane %v2494, 4
        %v2496 = vadd.f32 %v2494, %v2495
        %v2497 = vrot.slane %v2496, 2
        %v2498 = vadd.f32 %v2496, %v2497
        %v2499 = vrot.slane %v2498, 1
        %v2500 = vadd.f32 %v2498, %v2499
        %v2501 = vsel %vm2493, %v2486, 0.0
        %v2502 = vrot.slane %v2501, 4
        %v2503 = vadd.f32 %v2501, %v2502
        %v2504 = vrot.slane %v2503, 2
        %v2505 = vadd.f32 %v2503, %v2504
        %v2506 = vrot.slane %v2505, 1
        %v2507 = vadd.f32 %v2505, %v2506
        %v2508 = vsel %vm2493, %v2487, 0.0
        %v2509 = vrot.slane %v2508, 4
        %v2510 = vadd.f32 %v2508, %v2509
        %v2511 = vrot.slane %v2510, 2
        %v2512 = vadd.f32 %v2510, %v2511
        %v2513 = vrot.slane %v2512, 1
        %v2514 = vadd.f32 %v2512, %v2513
        %v2515 = vsel %vm2493, %v2488, 0.0
        %v2516 = vrot.slane %v2515, 4
        %v2517 = vadd.f32 %v2515, %v2516
        %v2518 = vrot.slane %v2517, 2
        %v2519 = vadd.f32 %v2517, %v2518
        %v2520 = vrot.slane %v2519, 1
        %v2521 = vadd.f32 %v2519, %v2520
        %v2522 = vsel %vm2493, %v2489, 0.0
        %v2523 = vrot.slane %v2522, 4
        %v2524 = vadd.f32 %v2522, %v2523
        %v2525 = vrot.slane %v2524, 2
        %v2526 = vadd.f32 %v2524, %v2525
        %v2527 = vrot.slane %v2526, 1
        %v2528 = vadd.f32 %v2526, %v2527
        %v2529 = vsel %vm2493, %v2490, 0.0
        %v2530 = vrot.slane %v2529, 4
        %v2531 = vadd.f32 %v2529, %v2530
        %v2532 = vrot.slane %v2531, 2
        %v2533 = vadd.f32 %v2531, %v2532
        %v2534 = vrot.slane %v2533, 1
        %v2535 = vadd.f32 %v2533, %v2534
        %v2536 = vsel %vm2493, %v2491, 0.0
        %v2537 = vrot.slane %v2536, 4
        %v2538 = vadd.f32 %v2536, %v2537
        %v2539 = vrot.slane %v2538, 2
        %v2540 = vadd.f32 %v2538, %v2539
        %v2541 = vrot.slane %v2540, 1
        %v2542 = vadd.f32 %v2540, %v2541
        %v2543 = vsel %vm2493, %v2492, 0.0
        %v2544 = vrot.slane %v2543, 4
        %v2545 = vadd.f32 %v2543, %v2544
        %v2546 = vrot.slane %v2545, 2
        %v2547 = vadd.f32 %v2545, %v2546
        %v2548 = vrot.slane %v2547, 1
        %v2549 = vadd.f32 %v2547, %v2548
        %2558 = vrot.lane.b32.xlu0 %v2500, 64
        %v2559 = vpop.permute.xlu0 %2558
        %2560 = vrot.lane.b32.xlu0 %v2507, 64
        %v2561 = vpop.permute.xlu0 %2560
        %2562 = vrot.lane.b32.xlu0 %v2514, 64
        %v2563 = vpop.permute.xlu0 %2562
        %2564 = vrot.lane.b32.xlu0 %v2521, 64
        %v2565 = vpop.permute.xlu0 %2564
        %2566 = vrot.lane.b32.xlu0 %v2528, 64
        %v2567 = vpop.permute.xlu0 %2566
        %2568 = vrot.lane.b32.xlu0 %v2535, 64
        %v2569 = vpop.permute.xlu0 %2568
        %2570 = vrot.lane.b32.xlu0 %v2542, 64
        %v2571 = vpop.permute.xlu0 %2570
        %2572 = vrot.lane.b32.xlu0 %v2549, 64
        %v2573 = vpop.permute.xlu0 %2572
        %v2582 = vadd.f32 %v2445, %v2559
        %v2583 = vadd.f32 %v2446, %v2561
        %v2584 = vadd.f32 %v2447, %v2563
        %v2585 = vadd.f32 %v2448, %v2565
        %v2586 = vadd.f32 %v2449, %v2567
        %v2587 = vadd.f32 %v2450, %v2569
        %v2588 = vadd.f32 %v2451, %v2571
        %v2589 = vadd.f32 %v2452, %v2573
        %2590 = vset.pattern.permute.xlu0 3
        %2591 = vperm.xlu0 %2590, %v2195
        %v2592 = vpop.permute.xlu0 %2591
        %2594 = vset.pattern.permute.xlu0 3
        %2595 = vperm.xlu0 %2594, %v2196
        %v2596 = vpop.permute.xlu0 %2595
        %2598 = vset.pattern.permute.xlu0 3
        %2599 = vperm.xlu0 %2598, %v2197
        %v2600 = vpop.permute.xlu0 %2599
        %2602 = vset.pattern.permute.xlu0 3
        %2603 = vperm.xlu0 %2602, %v2198
        %v2604 = vpop.permute.xlu0 %2603
        %2606 = vset.pattern.permute.xlu0 3
        %2607 = vperm.xlu0 %2606, %v2199
        %v2608 = vpop.permute.xlu0 %2607
        %2610 = vset.pattern.permute.xlu0 3
        %2611 = vperm.xlu0 %2610, %v2200
        %v2612 = vpop.permute.xlu0 %2611
        %2614 = vset.pattern.permute.xlu0 3
        %2615 = vperm.xlu0 %2614, %v2201
        %v2616 = vpop.permute.xlu0 %2615
        %2618 = vset.pattern.permute.xlu0 3
        %2619 = vperm.xlu0 %2618, %v2202
        %v2620 = vpop.permute.xlu0 %2619
        %v2622 = vmul.f32 %v2592, %v719
        %v2623 = vmul.f32 %v2596, %v719
        %v2624 = vmul.f32 %v2600, %v719
        %v2625 = vmul.f32 %v2604, %v719
        %v2626 = vmul.f32 %v2608, %v719
        %v2627 = vmul.f32 %v2612, %v719
        %v2628 = vmul.f32 %v2616, %v719
        %v2629 = vmul.f32 %v2620, %v719
        %vm2630 = vcmask 1048320
        %v2631 = vsel %vm2630, %v2622, 0.0
        %v2632 = vrot.slane %v2631, 4
        %v2633 = vadd.f32 %v2631, %v2632
        %v2634 = vrot.slane %v2633, 2
        %v2635 = vadd.f32 %v2633, %v2634
        %v2636 = vrot.slane %v2635, 1
        %v2637 = vadd.f32 %v2635, %v2636
        %v2638 = vsel %vm2630, %v2623, 0.0
        %v2639 = vrot.slane %v2638, 4
        %v2640 = vadd.f32 %v2638, %v2639
        %v2641 = vrot.slane %v2640, 2
        %v2642 = vadd.f32 %v2640, %v2641
        %v2643 = vrot.slane %v2642, 1
        %v2644 = vadd.f32 %v2642, %v2643
        %v2645 = vsel %vm2630, %v2624, 0.0
        %v2646 = vrot.slane %v2645, 4
        %v2647 = vadd.f32 %v2645, %v2646
        %v2648 = vrot.slane %v2647, 2
        %v2649 = vadd.f32 %v2647, %v2648
        %v2650 = vrot.slane %v2649, 1
        %v2651 = vadd.f32 %v2649, %v2650
        %v2652 = vsel %vm2630, %v2625, 0.0
        %v2653 = vrot.slane %v2652, 4
        %v2654 = vadd.f32 %v2652, %v2653
        %v2655 = vrot.slane %v2654, 2
        %v2656 = vadd.f32 %v2654, %v2655
        %v2657 = vrot.slane %v2656, 1
        %v2658 = vadd.f32 %v2656, %v2657
        %v2659 = vsel %vm2630, %v2626, 0.0
        %v2660 = vrot.slane %v2659, 4
        %v2661 = vadd.f32 %v2659, %v2660
        %v2662 = vrot.slane %v2661, 2
        %v2663 = vadd.f32 %v2661, %v2662
        %v2664 = vrot.slane %v2663, 1
        %v2665 = vadd.f32 %v2663, %v2664
        %v2666 = vsel %vm2630, %v2627, 0.0
        %v2667 = vrot.slane %v2666, 4
        %v2668 = vadd.f32 %v2666, %v2667
        %v2669 = vrot.slane %v2668, 2
        %v2670 = vadd.f32 %v2668, %v2669
        %v2671 = vrot.slane %v2670, 1
        %v2672 = vadd.f32 %v2670, %v2671
        %v2673 = vsel %vm2630, %v2628, 0.0
        %v2674 = vrot.slane %v2673, 4
        %v2675 = vadd.f32 %v2673, %v2674
        %v2676 = vrot.slane %v2675, 2
        %v2677 = vadd.f32 %v2675, %v2676
        %v2678 = vrot.slane %v2677, 1
        %v2679 = vadd.f32 %v2677, %v2678
        %v2680 = vsel %vm2630, %v2629, 0.0
        %v2681 = vrot.slane %v2680, 4
        %v2682 = vadd.f32 %v2680, %v2681
        %v2683 = vrot.slane %v2682, 2
        %v2684 = vadd.f32 %v2682, %v2683
        %v2685 = vrot.slane %v2684, 1
        %v2686 = vadd.f32 %v2684, %v2685
        %2695 = vrot.lane.b32.xlu0 %v2637, 32
        %v2696 = vpop.permute.xlu0 %2695
        %2697 = vrot.lane.b32.xlu0 %v2644, 32
        %v2698 = vpop.permute.xlu0 %2697
        %2699 = vrot.lane.b32.xlu0 %v2651, 32
        %v2700 = vpop.permute.xlu0 %2699
        %2701 = vrot.lane.b32.xlu0 %v2658, 32
        %v2702 = vpop.permute.xlu0 %2701
        %2703 = vrot.lane.b32.xlu0 %v2665, 32
        %v2704 = vpop.permute.xlu0 %2703
        %2705 = vrot.lane.b32.xlu0 %v2672, 32
        %v2706 = vpop.permute.xlu0 %2705
        %2707 = vrot.lane.b32.xlu0 %v2679, 32
        %v2708 = vpop.permute.xlu0 %2707
        %2709 = vrot.lane.b32.xlu0 %v2686, 32
        %v2710 = vpop.permute.xlu0 %2709
        %v2719 = vadd.f32 %v2582, %v2696
        %v2720 = vadd.f32 %v2583, %v2698
        %v2721 = vadd.f32 %v2584, %v2700
        %v2722 = vadd.f32 %v2585, %v2702
        %v2723 = vadd.f32 %v2586, %v2704
        %v2724 = vadd.f32 %v2587, %v2706
        %v2725 = vadd.f32 %v2588, %v2708
        %v2726 = vadd.f32 %v2589, %v2710
        %2727 = vset.pattern.permute.xlu0 4
        %2728 = vperm.xlu0 %2727, %v2195
        %v2729 = vpop.permute.xlu0 %2728
        %2731 = vset.pattern.permute.xlu0 4
        %2732 = vperm.xlu0 %2731, %v2196
        %v2733 = vpop.permute.xlu0 %2732
        %2735 = vset.pattern.permute.xlu0 4
        %2736 = vperm.xlu0 %2735, %v2197
        %v2737 = vpop.permute.xlu0 %2736
        %2739 = vset.pattern.permute.xlu0 4
        %2740 = vperm.xlu0 %2739, %v2198
        %v2741 = vpop.permute.xlu0 %2740
        %2743 = vset.pattern.permute.xlu0 4
        %2744 = vperm.xlu0 %2743, %v2199
        %v2745 = vpop.permute.xlu0 %2744
        %2747 = vset.pattern.permute.xlu0 4
        %2748 = vperm.xlu0 %2747, %v2200
        %v2749 = vpop.permute.xlu0 %2748
        %2751 = vset.pattern.permute.xlu0 4
        %2752 = vperm.xlu0 %2751, %v2201
        %v2753 = vpop.permute.xlu0 %2752
        %2755 = vset.pattern.permute.xlu0 4
        %2756 = vperm.xlu0 %2755, %v2202
        %v2757 = vpop.permute.xlu0 %2756
        %v2759 = vmul.f32 %v2729, %v721
        %v2760 = vmul.f32 %v2733, %v721
        %v2761 = vmul.f32 %v2737, %v721
        %v2762 = vmul.f32 %v2741, %v721
        %v2763 = vmul.f32 %v2745, %v721
        %v2764 = vmul.f32 %v2749, %v721
        %v2765 = vmul.f32 %v2753, %v721
        %v2766 = vmul.f32 %v2757, %v721
        %v2767 = vsel %vm2251, %v2759, 0.0
        %v2768 = vrot.slane %v2767, 4
        %v2769 = vadd.f32 %v2767, %v2768
        %v2770 = vrot.slane %v2769, 2
        %v2771 = vadd.f32 %v2769, %v2770
        %v2772 = vrot.slane %v2771, 1
        %v2773 = vadd.f32 %v2771, %v2772
        %v2774 = vsel %vm2251, %v2760, 0.0
        %v2775 = vrot.slane %v2774, 4
        %v2776 = vadd.f32 %v2774, %v2775
        %v2777 = vrot.slane %v2776, 2
        %v2778 = vadd.f32 %v2776, %v2777
        %v2779 = vrot.slane %v2778, 1
        %v2780 = vadd.f32 %v2778, %v2779
        %v2781 = vsel %vm2251, %v2761, 0.0
        %v2782 = vrot.slane %v2781, 4
        %v2783 = vadd.f32 %v2781, %v2782
        %v2784 = vrot.slane %v2783, 2
        %v2785 = vadd.f32 %v2783, %v2784
        %v2786 = vrot.slane %v2785, 1
        %v2787 = vadd.f32 %v2785, %v2786
        %v2788 = vsel %vm2251, %v2762, 0.0
        %v2789 = vrot.slane %v2788, 4
        %v2790 = vadd.f32 %v2788, %v2789
        %v2791 = vrot.slane %v2790, 2
        %v2792 = vadd.f32 %v2790, %v2791
        %v2793 = vrot.slane %v2792, 1
        %v2794 = vadd.f32 %v2792, %v2793
        %v2795 = vsel %vm2251, %v2763, 0.0
        %v2796 = vrot.slane %v2795, 4
        %v2797 = vadd.f32 %v2795, %v2796
        %v2798 = vrot.slane %v2797, 2
        %v2799 = vadd.f32 %v2797, %v2798
        %v2800 = vrot.slane %v2799, 1
        %v2801 = vadd.f32 %v2799, %v2800
        %v2802 = vsel %vm2251, %v2764, 0.0
        %v2803 = vrot.slane %v2802, 4
        %v2804 = vadd.f32 %v2802, %v2803
        %v2805 = vrot.slane %v2804, 2
        %v2806 = vadd.f32 %v2804, %v2805
        %v2807 = vrot.slane %v2806, 1
        %v2808 = vadd.f32 %v2806, %v2807
        %v2809 = vsel %vm2251, %v2765, 0.0
        %v2810 = vrot.slane %v2809, 4
        %v2811 = vadd.f32 %v2809, %v2810
        %v2812 = vrot.slane %v2811, 2
        %v2813 = vadd.f32 %v2811, %v2812
        %v2814 = vrot.slane %v2813, 1
        %v2815 = vadd.f32 %v2813, %v2814
        %v2816 = vsel %vm2251, %v2766, 0.0
        %v2817 = vrot.slane %v2816, 4
        %v2818 = vadd.f32 %v2816, %v2817
        %v2819 = vrot.slane %v2818, 2
        %v2820 = vadd.f32 %v2818, %v2819
        %v2821 = vrot.slane %v2820, 1
        %v2822 = vadd.f32 %v2820, %v2821
        %v2823 = vadd.f32 %v2719, %v2773
        %v2824 = vadd.f32 %v2720, %v2780
        %v2825 = vadd.f32 %v2721, %v2787
        %v2826 = vadd.f32 %v2722, %v2794
        %v2827 = vadd.f32 %v2723, %v2801
        %v2828 = vadd.f32 %v2724, %v2808
        %v2829 = vadd.f32 %v2725, %v2815
        %v2830 = vadd.f32 %v2726, %v2822
        %2831 = vset.pattern.permute.xlu0 5
        %2832 = vperm.xlu0 %2831, %v2195
        %v2833 = vpop.permute.xlu0 %2832
        %2835 = vset.pattern.permute.xlu0 5
        %2836 = vperm.xlu0 %2835, %v2196
        %v2837 = vpop.permute.xlu0 %2836
        %2839 = vset.pattern.permute.xlu0 5
        %2840 = vperm.xlu0 %2839, %v2197
        %v2841 = vpop.permute.xlu0 %2840
        %2843 = vset.pattern.permute.xlu0 5
        %2844 = vperm.xlu0 %2843, %v2198
        %v2845 = vpop.permute.xlu0 %2844
        %2847 = vset.pattern.permute.xlu0 5
        %2848 = vperm.xlu0 %2847, %v2199
        %v2849 = vpop.permute.xlu0 %2848
        %2851 = vset.pattern.permute.xlu0 5
        %2852 = vperm.xlu0 %2851, %v2200
        %v2853 = vpop.permute.xlu0 %2852
        %2855 = vset.pattern.permute.xlu0 5
        %2856 = vperm.xlu0 %2855, %v2201
        %v2857 = vpop.permute.xlu0 %2856
        %2859 = vset.pattern.permute.xlu0 5
        %2860 = vperm.xlu0 %2859, %v2202
        %v2861 = vpop.permute.xlu0 %2860
        %v2863 = vmul.f32 %v2833, %v721
        %v2864 = vmul.f32 %v2837, %v721
        %v2865 = vmul.f32 %v2841, %v721
        %v2866 = vmul.f32 %v2845, %v721
        %v2867 = vmul.f32 %v2849, %v721
        %v2868 = vmul.f32 %v2853, %v721
        %v2869 = vmul.f32 %v2857, %v721
        %v2870 = vmul.f32 %v2861, %v721
        %v2871 = vsel %vm2356, %v2863, 0.0
        %v2872 = vrot.slane %v2871, 4
        %v2873 = vadd.f32 %v2871, %v2872
        %v2874 = vrot.slane %v2873, 2
        %v2875 = vadd.f32 %v2873, %v2874
        %v2876 = vrot.slane %v2875, 1
        %v2877 = vadd.f32 %v2875, %v2876
        %v2878 = vsel %vm2356, %v2864, 0.0
        %v2879 = vrot.slane %v2878, 4
        %v2880 = vadd.f32 %v2878, %v2879
        %v2881 = vrot.slane %v2880, 2
        %v2882 = vadd.f32 %v2880, %v2881
        %v2883 = vrot.slane %v2882, 1
        %v2884 = vadd.f32 %v2882, %v2883
        %v2885 = vsel %vm2356, %v2865, 0.0
        %v2886 = vrot.slane %v2885, 4
        %v2887 = vadd.f32 %v2885, %v2886
        %v2888 = vrot.slane %v2887, 2
        %v2889 = vadd.f32 %v2887, %v2888
        %v2890 = vrot.slane %v2889, 1
        %v2891 = vadd.f32 %v2889, %v2890
        %v2892 = vsel %vm2356, %v2866, 0.0
        %v2893 = vrot.slane %v2892, 4
        %v2894 = vadd.f32 %v2892, %v2893
        %v2895 = vrot.slane %v2894, 2
        %v2896 = vadd.f32 %v2894, %v2895
        %v2897 = vrot.slane %v2896, 1
        %v2898 = vadd.f32 %v2896, %v2897
        %v2899 = vsel %vm2356, %v2867, 0.0
        %v2900 = vrot.slane %v2899, 4
        %v2901 = vadd.f32 %v2899, %v2900
        %v2902 = vrot.slane %v2901, 2
        %v2903 = vadd.f32 %v2901, %v2902
        %v2904 = vrot.slane %v2903, 1
        %v2905 = vadd.f32 %v2903, %v2904
        %v2906 = vsel %vm2356, %v2868, 0.0
        %v2907 = vrot.slane %v2906, 4
        %v2908 = vadd.f32 %v2906, %v2907
        %v2909 = vrot.slane %v2908, 2
        %v2910 = vadd.f32 %v2908, %v2909
        %v2911 = vrot.slane %v2910, 1
        %v2912 = vadd.f32 %v2910, %v2911
        %v2913 = vsel %vm2356, %v2869, 0.0
        %v2914 = vrot.slane %v2913, 4
        %v2915 = vadd.f32 %v2913, %v2914
        %v2916 = vrot.slane %v2915, 2
        %v2917 = vadd.f32 %v2915, %v2916
        %v2918 = vrot.slane %v2917, 1
        %v2919 = vadd.f32 %v2917, %v2918
        %v2920 = vsel %vm2356, %v2870, 0.0
        %v2921 = vrot.slane %v2920, 4
        %v2922 = vadd.f32 %v2920, %v2921
        %v2923 = vrot.slane %v2922, 2
        %v2924 = vadd.f32 %v2922, %v2923
        %v2925 = vrot.slane %v2924, 1
        %v2926 = vadd.f32 %v2924, %v2925
        %2935 = vrot.lane.b32.xlu0 %v2877, 96
        %v2936 = vpop.permute.xlu0 %2935
        %2937 = vrot.lane.b32.xlu0 %v2884, 96
        %v2938 = vpop.permute.xlu0 %2937
        %2939 = vrot.lane.b32.xlu0 %v2891, 96
        %v2940 = vpop.permute.xlu0 %2939
        %2941 = vrot.lane.b32.xlu0 %v2898, 96
        %v2942 = vpop.permute.xlu0 %2941
        %2943 = vrot.lane.b32.xlu0 %v2905, 96
        %v2944 = vpop.permute.xlu0 %2943
        %2945 = vrot.lane.b32.xlu0 %v2912, 96
        %v2946 = vpop.permute.xlu0 %2945
        %2947 = vrot.lane.b32.xlu0 %v2919, 96
        %v2948 = vpop.permute.xlu0 %2947
        %2949 = vrot.lane.b32.xlu0 %v2926, 96
        %v2950 = vpop.permute.xlu0 %2949
        %v2959 = vadd.f32 %v2823, %v2936
        %v2960 = vadd.f32 %v2824, %v2938
        %v2961 = vadd.f32 %v2825, %v2940
        %v2962 = vadd.f32 %v2826, %v2942
        %v2963 = vadd.f32 %v2827, %v2944
        %v2964 = vadd.f32 %v2828, %v2946
        %v2965 = vadd.f32 %v2829, %v2948
        %v2966 = vadd.f32 %v2830, %v2950
        %2967 = vset.pattern.permute.xlu0 6
        %2968 = vperm.xlu0 %2967, %v2195
        %v2969 = vpop.permute.xlu0 %2968
        %2971 = vset.pattern.permute.xlu0 6
        %2972 = vperm.xlu0 %2971, %v2196
        %v2973 = vpop.permute.xlu0 %2972
        %2975 = vset.pattern.permute.xlu0 6
        %2976 = vperm.xlu0 %2975, %v2197
        %v2977 = vpop.permute.xlu0 %2976
        %2979 = vset.pattern.permute.xlu0 6
        %2980 = vperm.xlu0 %2979, %v2198
        %v2981 = vpop.permute.xlu0 %2980
        %2983 = vset.pattern.permute.xlu0 6
        %2984 = vperm.xlu0 %2983, %v2199
        %v2985 = vpop.permute.xlu0 %2984
        %2987 = vset.pattern.permute.xlu0 6
        %2988 = vperm.xlu0 %2987, %v2200
        %v2989 = vpop.permute.xlu0 %2988
        %2991 = vset.pattern.permute.xlu0 6
        %2992 = vperm.xlu0 %2991, %v2201
        %v2993 = vpop.permute.xlu0 %2992
        %2995 = vset.pattern.permute.xlu0 6
        %2996 = vperm.xlu0 %2995, %v2202
        %v2997 = vpop.permute.xlu0 %2996
        %v2999 = vmul.f32 %v2969, %v721
        %v3000 = vmul.f32 %v2973, %v721
        %v3001 = vmul.f32 %v2977, %v721
        %v3002 = vmul.f32 %v2981, %v721
        %v3003 = vmul.f32 %v2985, %v721
        %v3004 = vmul.f32 %v2989, %v721
        %v3005 = vmul.f32 %v2993, %v721
        %v3006 = vmul.f32 %v2997, %v721
        %v3007 = vsel %vm2493, %v2999, 0.0
        %v3008 = vrot.slane %v3007, 4
        %v3009 = vadd.f32 %v3007, %v3008
        %v3010 = vrot.slane %v3009, 2
        %v3011 = vadd.f32 %v3009, %v3010
        %v3012 = vrot.slane %v3011, 1
        %v3013 = vadd.f32 %v3011, %v3012
        %v3014 = vsel %vm2493, %v3000, 0.0
        %v3015 = vrot.slane %v3014, 4
        %v3016 = vadd.f32 %v3014, %v3015
        %v3017 = vrot.slane %v3016, 2
        %v3018 = vadd.f32 %v3016, %v3017
        %v3019 = vrot.slane %v3018, 1
        %v3020 = vadd.f32 %v3018, %v3019
        %v3021 = vsel %vm2493, %v3001, 0.0
        %v3022 = vrot.slane %v3021, 4
        %v3023 = vadd.f32 %v3021, %v3022
        %v3024 = vrot.slane %v3023, 2
        %v3025 = vadd.f32 %v3023, %v3024
        %v3026 = vrot.slane %v3025, 1
        %v3027 = vadd.f32 %v3025, %v3026
        %v3028 = vsel %vm2493, %v3002, 0.0
        %v3029 = vrot.slane %v3028, 4
        %v3030 = vadd.f32 %v3028, %v3029
        %v3031 = vrot.slane %v3030, 2
        %v3032 = vadd.f32 %v3030, %v3031
        %v3033 = vrot.slane %v3032, 1
        %v3034 = vadd.f32 %v3032, %v3033
        %v3035 = vsel %vm2493, %v3003, 0.0
        %v3036 = vrot.slane %v3035, 4
        %v3037 = vadd.f32 %v3035, %v3036
        %v3038 = vrot.slane %v3037, 2
        %v3039 = vadd.f32 %v3037, %v3038
        %v3040 = vrot.slane %v3039, 1
        %v3041 = vadd.f32 %v3039, %v3040
        %v3042 = vsel %vm2493, %v3004, 0.0
        %v3043 = vrot.slane %v3042, 4
        %v3044 = vadd.f32 %v3042, %v3043
        %v3045 = vrot.slane %v3044, 2
        %v3046 = vadd.f32 %v3044, %v3045
        %v3047 = vrot.slane %v3046, 1
        %v3048 = vadd.f32 %v3046, %v3047
        %v3049 = vsel %vm2493, %v3005, 0.0
        %v3050 = vrot.slane %v3049, 4
        %v3051 = vadd.f32 %v3049, %v3050
        %v3052 = vrot.slane %v3051, 2
        %v3053 = vadd.f32 %v3051, %v3052
        %v3054 = vrot.slane %v3053, 1
        %v3055 = vadd.f32 %v3053, %v3054
        %v3056 = vsel %vm2493, %v3006, 0.0
        %v3057 = vrot.slane %v3056, 4
        %v3058 = vadd.f32 %v3056, %v3057
        %v3059 = vrot.slane %v3058, 2
        %v3060 = vadd.f32 %v3058, %v3059
        %v3061 = vrot.slane %v3060, 1
        %v3062 = vadd.f32 %v3060, %v3061
        %3071 = vrot.lane.b32.xlu0 %v3013, 64
        %v3072 = vpop.permute.xlu0 %3071
        %3073 = vrot.lane.b32.xlu0 %v3020, 64
        %v3074 = vpop.permute.xlu0 %3073
        %3075 = vrot.lane.b32.xlu0 %v3027, 64
        %v3076 = vpop.permute.xlu0 %3075
        %3077 = vrot.lane.b32.xlu0 %v3034, 64
        %v3078 = vpop.permute.xlu0 %3077
        %3079 = vrot.lane.b32.xlu0 %v3041, 64
        %v3080 = vpop.permute.xlu0 %3079
        %3081 = vrot.lane.b32.xlu0 %v3048, 64
        %v3082 = vpop.permute.xlu0 %3081
        %3083 = vrot.lane.b32.xlu0 %v3055, 64
        %v3084 = vpop.permute.xlu0 %3083
        %3085 = vrot.lane.b32.xlu0 %v3062, 64
        %v3086 = vpop.permute.xlu0 %3085
        %v3095 = vadd.f32 %v2959, %v3072
        %v3096 = vadd.f32 %v2960, %v3074
        %v3097 = vadd.f32 %v2961, %v3076
        %v3098 = vadd.f32 %v2962, %v3078
        %v3099 = vadd.f32 %v2963, %v3080
        %v3100 = vadd.f32 %v2964, %v3082
        %v3101 = vadd.f32 %v2965, %v3084
        %v3102 = vadd.f32 %v2966, %v3086
        %3103 = vset.pattern.permute.xlu0 7
        %3104 = vperm.xlu0 %3103, %v2195
        %v3105 = vpop.permute.xlu0 %3104
        %3107 = vset.pattern.permute.xlu0 7
        %3108 = vperm.xlu0 %3107, %v2196
        %v3109 = vpop.permute.xlu0 %3108
        %3111 = vset.pattern.permute.xlu0 7
        %3112 = vperm.xlu0 %3111, %v2197
        %v3113 = vpop.permute.xlu0 %3112
        %3115 = vset.pattern.permute.xlu0 7
        %3116 = vperm.xlu0 %3115, %v2198
        %v3117 = vpop.permute.xlu0 %3116
        %3119 = vset.pattern.permute.xlu0 7
        %3120 = vperm.xlu0 %3119, %v2199
        %v3121 = vpop.permute.xlu0 %3120
        %3123 = vset.pattern.permute.xlu0 7
        %3124 = vperm.xlu0 %3123, %v2200
        %v3125 = vpop.permute.xlu0 %3124
        %3127 = vset.pattern.permute.xlu0 7
        %3128 = vperm.xlu0 %3127, %v2201
        %v3129 = vpop.permute.xlu0 %3128
        %3131 = vset.pattern.permute.xlu0 7
        %3132 = vperm.xlu0 %3131, %v2202
        %v3133 = vpop.permute.xlu0 %3132
        %v3135 = vmul.f32 %v3105, %v721
        %v3136 = vmul.f32 %v3109, %v721
        %v3137 = vmul.f32 %v3113, %v721
        %v3138 = vmul.f32 %v3117, %v721
        %v3139 = vmul.f32 %v3121, %v721
        %v3140 = vmul.f32 %v3125, %v721
        %v3141 = vmul.f32 %v3129, %v721
        %v3142 = vmul.f32 %v3133, %v721
        %v3143 = vsel %vm2630, %v3135, 0.0
        %v3144 = vrot.slane %v3143, 4
        %v3145 = vadd.f32 %v3143, %v3144
        %v3146 = vrot.slane %v3145, 2
        %v3147 = vadd.f32 %v3145, %v3146
        %v3148 = vrot.slane %v3147, 1
        %v3149 = vadd.f32 %v3147, %v3148
        %v3150 = vsel %vm2630, %v3136, 0.0
        %v3151 = vrot.slane %v3150, 4
        %v3152 = vadd.f32 %v3150, %v3151
        %v3153 = vrot.slane %v3152, 2
        %v3154 = vadd.f32 %v3152, %v3153
        %v3155 = vrot.slane %v3154, 1
        %v3156 = vadd.f32 %v3154, %v3155
        %v3157 = vsel %vm2630, %v3137, 0.0
        %v3158 = vrot.slane %v3157, 4
        %v3159 = vadd.f32 %v3157, %v3158
        %v3160 = vrot.slane %v3159, 2
        %v3161 = vadd.f32 %v3159, %v3160
        %v3162 = vrot.slane %v3161, 1
        %v3163 = vadd.f32 %v3161, %v3162
        %v3164 = vsel %vm2630, %v3138, 0.0
        %v3165 = vrot.slane %v3164, 4
        %v3166 = vadd.f32 %v3164, %v3165
        %v3167 = vrot.slane %v3166, 2
        %v3168 = vadd.f32 %v3166, %v3167
        %v3169 = vrot.slane %v3168, 1
        %v3170 = vadd.f32 %v3168, %v3169
        %v3171 = vsel %vm2630, %v3139, 0.0
        %v3172 = vrot.slane %v3171, 4
        %v3173 = vadd.f32 %v3171, %v3172
        %v3174 = vrot.slane %v3173, 2
        %v3175 = vadd.f32 %v3173, %v3174
        %v3176 = vrot.slane %v3175, 1
        %v3177 = vadd.f32 %v3175, %v3176
        %v3178 = vsel %vm2630, %v3140, 0.0
        %v3179 = vrot.slane %v3178, 4
        %v3180 = vadd.f32 %v3178, %v3179
        %v3181 = vrot.slane %v3180, 2
        %v3182 = vadd.f32 %v3180, %v3181
        %v3183 = vrot.slane %v3182, 1
        %v3184 = vadd.f32 %v3182, %v3183
        %v3185 = vsel %vm2630, %v3141, 0.0
        %v3186 = vrot.slane %v3185, 4
        %v3187 = vadd.f32 %v3185, %v3186
        %v3188 = vrot.slane %v3187, 2
        %v3189 = vadd.f32 %v3187, %v3188
        %v3190 = vrot.slane %v3189, 1
        %v3191 = vadd.f32 %v3189, %v3190
        %v3192 = vsel %vm2630, %v3142, 0.0
        %v3193 = vrot.slane %v3192, 4
        %v3194 = vadd.f32 %v3192, %v3193
        %v3195 = vrot.slane %v3194, 2
        %v3196 = vadd.f32 %v3194, %v3195
        %v3197 = vrot.slane %v3196, 1
        %v3198 = vadd.f32 %v3196, %v3197
        %3207 = vrot.lane.b32.xlu0 %v3149, 32
        %v3208 = vpop.permute.xlu0 %3207
        %3209 = vrot.lane.b32.xlu0 %v3156, 32
        %v3210 = vpop.permute.xlu0 %3209
        %3211 = vrot.lane.b32.xlu0 %v3163, 32
        %v3212 = vpop.permute.xlu0 %3211
        %3213 = vrot.lane.b32.xlu0 %v3170, 32
        %v3214 = vpop.permute.xlu0 %3213
        %3215 = vrot.lane.b32.xlu0 %v3177, 32
        %v3216 = vpop.permute.xlu0 %3215
        %3217 = vrot.lane.b32.xlu0 %v3184, 32
        %v3218 = vpop.permute.xlu0 %3217
        %3219 = vrot.lane.b32.xlu0 %v3191, 32
        %v3220 = vpop.permute.xlu0 %3219
        %3221 = vrot.lane.b32.xlu0 %v3198, 32
        %v3222 = vpop.permute.xlu0 %3221
        %v3231 = vadd.f32 %v3095, %v3208
        %v3232 = vadd.f32 %v3096, %v3210
        %v3233 = vadd.f32 %v3097, %v3212
        %v3234 = vadd.f32 %v3098, %v3214
        %v3235 = vadd.f32 %v3099, %v3216
        %v3236 = vadd.f32 %v3100, %v3218
        %v3237 = vadd.f32 %v3101, %v3220
        %v3238 = vadd.f32 %v3102, %v3222
        %3239 = vset.pattern.permute.xlu0 8
        %3240 = vperm.xlu0 %3239, %v2195
        %v3241 = vpop.permute.xlu0 %3240
        %3243 = vset.pattern.permute.xlu0 8
        %3244 = vperm.xlu0 %3243, %v2196
        %v3245 = vpop.permute.xlu0 %3244
        %3247 = vset.pattern.permute.xlu0 8
        %3248 = vperm.xlu0 %3247, %v2197
        %v3249 = vpop.permute.xlu0 %3248
        %3251 = vset.pattern.permute.xlu0 8
        %3252 = vperm.xlu0 %3251, %v2198
        %v3253 = vpop.permute.xlu0 %3252
        %3255 = vset.pattern.permute.xlu0 8
        %3256 = vperm.xlu0 %3255, %v2199
        %v3257 = vpop.permute.xlu0 %3256
        %3259 = vset.pattern.permute.xlu0 8
        %3260 = vperm.xlu0 %3259, %v2200
        %v3261 = vpop.permute.xlu0 %3260
        %3263 = vset.pattern.permute.xlu0 8
        %3264 = vperm.xlu0 %3263, %v2201
        %v3265 = vpop.permute.xlu0 %3264
        %3267 = vset.pattern.permute.xlu0 8
        %3268 = vperm.xlu0 %3267, %v2202
        %v3269 = vpop.permute.xlu0 %3268
        %v3271 = vmul.f32 %v3241, %v760
        %v3272 = vmul.f32 %v3245, %v760
        %v3273 = vmul.f32 %v3249, %v760
        %v3274 = vmul.f32 %v3253, %v760
        %v3275 = vmul.f32 %v3257, %v760
        %v3276 = vmul.f32 %v3261, %v760
        %v3277 = vmul.f32 %v3265, %v760
        %v3278 = vmul.f32 %v3269, %v760
        %v3279 = vsel %vm2251, %v3271, 0.0
        %v3280 = vrot.slane %v3279, 4
        %v3281 = vadd.f32 %v3279, %v3280
        %v3282 = vrot.slane %v3281, 2
        %v3283 = vadd.f32 %v3281, %v3282
        %v3284 = vrot.slane %v3283, 1
        %v3285 = vadd.f32 %v3283, %v3284
        %v3286 = vsel %vm2251, %v3272, 0.0
        %v3287 = vrot.slane %v3286, 4
        %v3288 = vadd.f32 %v3286, %v3287
        %v3289 = vrot.slane %v3288, 2
        %v3290 = vadd.f32 %v3288, %v3289
        %v3291 = vrot.slane %v3290, 1
        %v3292 = vadd.f32 %v3290, %v3291
        %v3293 = vsel %vm2251, %v3273, 0.0
        %v3294 = vrot.slane %v3293, 4
        %v3295 = vadd.f32 %v3293, %v3294
        %v3296 = vrot.slane %v3295, 2
        %v3297 = vadd.f32 %v3295, %v3296
        %v3298 = vrot.slane %v3297, 1
        %v3299 = vadd.f32 %v3297, %v3298
        %v3300 = vsel %vm2251, %v3274, 0.0
        %v3301 = vrot.slane %v3300, 4
        %v3302 = vadd.f32 %v3300, %v3301
        %v3303 = vrot.slane %v3302, 2
        %v3304 = vadd.f32 %v3302, %v3303
        %v3305 = vrot.slane %v3304, 1
        %v3306 = vadd.f32 %v3304, %v3305
        %v3307 = vsel %vm2251, %v3275, 0.0
        %v3308 = vrot.slane %v3307, 4
        %v3309 = vadd.f32 %v3307, %v3308
        %v3310 = vrot.slane %v3309, 2
        %v3311 = vadd.f32 %v3309, %v3310
        %v3312 = vrot.slane %v3311, 1
        %v3313 = vadd.f32 %v3311, %v3312
        %v3314 = vsel %vm2251, %v3276, 0.0
        %v3315 = vrot.slane %v3314, 4
        %v3316 = vadd.f32 %v3314, %v3315
        %v3317 = vrot.slane %v3316, 2
        %v3318 = vadd.f32 %v3316, %v3317
        %v3319 = vrot.slane %v3318, 1
        %v3320 = vadd.f32 %v3318, %v3319
        %v3321 = vsel %vm2251, %v3277, 0.0
        %v3322 = vrot.slane %v3321, 4
        %v3323 = vadd.f32 %v3321, %v3322
        %v3324 = vrot.slane %v3323, 2
        %v3325 = vadd.f32 %v3323, %v3324
        %v3326 = vrot.slane %v3325, 1
        %v3327 = vadd.f32 %v3325, %v3326
        %v3328 = vsel %vm2251, %v3278, 0.0
        %v3329 = vrot.slane %v3328, 4
        %v3330 = vadd.f32 %v3328, %v3329
        %v3331 = vrot.slane %v3330, 2
        %v3332 = vadd.f32 %v3330, %v3331
        %v3333 = vrot.slane %v3332, 1
        %v3334 = vadd.f32 %v3332, %v3333
        %v3335 = vadd.f32 %v3231, %v3285
        %v3336 = vadd.f32 %v3232, %v3292
        %v3337 = vadd.f32 %v3233, %v3299
        %v3338 = vadd.f32 %v3234, %v3306
        %v3339 = vadd.f32 %v3235, %v3313
        %v3340 = vadd.f32 %v3236, %v3320
        %v3341 = vadd.f32 %v3237, %v3327
        %v3342 = vadd.f32 %v3238, %v3334
        %3343 = vset.pattern.permute.xlu0 9
        %3344 = vperm.xlu0 %3343, %v2195
        %v3345 = vpop.permute.xlu0 %3344
        %3347 = vset.pattern.permute.xlu0 9
        %3348 = vperm.xlu0 %3347, %v2196
        %v3349 = vpop.permute.xlu0 %3348
        %3351 = vset.pattern.permute.xlu0 9
        %3352 = vperm.xlu0 %3351, %v2197
        %v3353 = vpop.permute.xlu0 %3352
        %3355 = vset.pattern.permute.xlu0 9
        %3356 = vperm.xlu0 %3355, %v2198
        %v3357 = vpop.permute.xlu0 %3356
        %3359 = vset.pattern.permute.xlu0 9
        %3360 = vperm.xlu0 %3359, %v2199
        %v3361 = vpop.permute.xlu0 %3360
        %3363 = vset.pattern.permute.xlu0 9
        %3364 = vperm.xlu0 %3363, %v2200
        %v3365 = vpop.permute.xlu0 %3364
        %3367 = vset.pattern.permute.xlu0 9
        %3368 = vperm.xlu0 %3367, %v2201
        %v3369 = vpop.permute.xlu0 %3368
        %3371 = vset.pattern.permute.xlu0 9
        %3372 = vperm.xlu0 %3371, %v2202
        %v3373 = vpop.permute.xlu0 %3372
        %v3375 = vmul.f32 %v3345, %v760
        %v3376 = vmul.f32 %v3349, %v760
        %v3377 = vmul.f32 %v3353, %v760
        %v3378 = vmul.f32 %v3357, %v760
        %v3379 = vmul.f32 %v3361, %v760
        %v3380 = vmul.f32 %v3365, %v760
        %v3381 = vmul.f32 %v3369, %v760
        %v3382 = vmul.f32 %v3373, %v760
        %v3383 = vsel %vm2356, %v3375, 0.0
        %v3384 = vrot.slane %v3383, 4
        %v3385 = vadd.f32 %v3383, %v3384
        %v3386 = vrot.slane %v3385, 2
        %v3387 = vadd.f32 %v3385, %v3386
        %v3388 = vrot.slane %v3387, 1
        %v3389 = vadd.f32 %v3387, %v3388
        %v3390 = vsel %vm2356, %v3376, 0.0
        %v3391 = vrot.slane %v3390, 4
        %v3392 = vadd.f32 %v3390, %v3391
        %v3393 = vrot.slane %v3392, 2
        %v3394 = vadd.f32 %v3392, %v3393
        %v3395 = vrot.slane %v3394, 1
        %v3396 = vadd.f32 %v3394, %v3395
        %v3397 = vsel %vm2356, %v3377, 0.0
        %v3398 = vrot.slane %v3397, 4
        %v3399 = vadd.f32 %v3397, %v3398
        %v3400 = vrot.slane %v3399, 2
        %v3401 = vadd.f32 %v3399, %v3400
        %v3402 = vrot.slane %v3401, 1
        %v3403 = vadd.f32 %v3401, %v3402
        %v3404 = vsel %vm2356, %v3378, 0.0
        %v3405 = vrot.slane %v3404, 4
        %v3406 = vadd.f32 %v3404, %v3405
        %v3407 = vrot.slane %v3406, 2
        %v3408 = vadd.f32 %v3406, %v3407
        %v3409 = vrot.slane %v3408, 1
        %v3410 = vadd.f32 %v3408, %v3409
        %v3411 = vsel %vm2356, %v3379, 0.0
        %v3412 = vrot.slane %v3411, 4
        %v3413 = vadd.f32 %v3411, %v3412
        %v3414 = vrot.slane %v3413, 2
        %v3415 = vadd.f32 %v3413, %v3414
        %v3416 = vrot.slane %v3415, 1
        %v3417 = vadd.f32 %v3415, %v3416
        %v3418 = vsel %vm2356, %v3380, 0.0
        %v3419 = vrot.slane %v3418, 4
        %v3420 = vadd.f32 %v3418, %v3419
        %v3421 = vrot.slane %v3420, 2
        %v3422 = vadd.f32 %v3420, %v3421
        %v3423 = vrot.slane %v3422, 1
        %v3424 = vadd.f32 %v3422, %v3423
        %v3425 = vsel %vm2356, %v3381, 0.0
        %v3426 = vrot.slane %v3425, 4
        %v3427 = vadd.f32 %v3425, %v3426
        %v3428 = vrot.slane %v3427, 2
        %v3429 = vadd.f32 %v3427, %v3428
        %v3430 = vrot.slane %v3429, 1
        %v3431 = vadd.f32 %v3429, %v3430
        %v3432 = vsel %vm2356, %v3382, 0.0
        %v3433 = vrot.slane %v3432, 4
        %v3434 = vadd.f32 %v3432, %v3433
        %v3435 = vrot.slane %v3434, 2
        %v3436 = vadd.f32 %v3434, %v3435
        %v3437 = vrot.slane %v3436, 1
        %v3438 = vadd.f32 %v3436, %v3437
        %3447 = vrot.lane.b32.xlu0 %v3389, 96
        %v3448 = vpop.permute.xlu0 %3447
        %3449 = vrot.lane.b32.xlu0 %v3396, 96
        %v3450 = vpop.permute.xlu0 %3449
        %3451 = vrot.lane.b32.xlu0 %v3403, 96
        %v3452 = vpop.permute.xlu0 %3451
        %3453 = vrot.lane.b32.xlu0 %v3410, 96
        %v3454 = vpop.permute.xlu0 %3453
        %3455 = vrot.lane.b32.xlu0 %v3417, 96
        %v3456 = vpop.permute.xlu0 %3455
        %3457 = vrot.lane.b32.xlu0 %v3424, 96
        %v3458 = vpop.permute.xlu0 %3457
        %3459 = vrot.lane.b32.xlu0 %v3431, 96
        %v3460 = vpop.permute.xlu0 %3459
        %3461 = vrot.lane.b32.xlu0 %v3438, 96
        %v3462 = vpop.permute.xlu0 %3461
        %v3471 = vadd.f32 %v3335, %v3448
        %v3472 = vadd.f32 %v3336, %v3450
        %v3473 = vadd.f32 %v3337, %v3452
        %v3474 = vadd.f32 %v3338, %v3454
        %v3475 = vadd.f32 %v3339, %v3456
        %v3476 = vadd.f32 %v3340, %v3458
        %v3477 = vadd.f32 %v3341, %v3460
        %v3478 = vadd.f32 %v3342, %v3462
        %v3479 = vld [vmem:[%s10] sm:$0x1]
        %v3481 = vlaneseq
        %v3482 = vshrl.u32 %v3481, 7
        %v3483 = vsub.s32 0, %v3482
        %v3484 = vrot.slane %v3479, %v3483
        %v3486 = vadd.f32 %v3471, %v3484
        %v3487 = vadd.f32 %v3472, %v3484
        %v3488 = vadd.f32 %v3473, %v3484
        %v3489 = vadd.f32 %v3474, %v3484
        %v3490 = vadd.f32 %v3475, %v3484
        %v3491 = vadd.f32 %v3476, %v3484
        %v3492 = vadd.f32 %v3477, %v3484
        %v3493 = vadd.f32 %v3478, %v3484
        %v3494 = vmax.f32 %v3486, 0.0
        %v3495 = vmax.f32 %v3487, 0.0
        %v3496 = vmax.f32 %v3488, 0.0
        %v3497 = vmax.f32 %v3489, 0.0
        %v3498 = vmax.f32 %v3490, 0.0
        %v3499 = vmax.f32 %v3491, 0.0
        %v3500 = vmax.f32 %v3492, 0.0
        %v3501 = vmax.f32 %v3493, 0.0
        %v3502 = vld [vmem:[%s488] sm:$0x1]
        %v3511 = vrot.slane %v3495, 7
        %vm3512 = vcmask 1041409
        %v3513 = vsel %vm3512, %v3511, %v3494
        %v3514 = vrot.slane %v3496, 6
        %vm3515 = vcmask 1042434
        %v3516 = vsel %vm3515, %v3514, %v3513
        %v3517 = vrot.slane %v3497, 5
        %vm3518 = vcmask 1043459
        %v3519 = vsel %vm3518, %v3517, %v3516
        %v3520 = vrot.slane %v3498, 4
        %vm3521 = vcmask 1044484
        %v3522 = vsel %vm3521, %v3520, %v3519
        %v3523 = vrot.slane %v3499, 3
        %vm3524 = vcmask 1045509
        %v3525 = vsel %vm3524, %v3523, %v3522
        %v3526 = vrot.slane %v3500, 2
        %vm3527 = vcmask 1046534
        %v3528 = vsel %vm3527, %v3526, %v3525
        %v3529 = vrot.slane %v3501, 1
        %vm3530 = vcmask 1047559
        %v3531 = vsel %vm3530, %v3529, %v3528
        %vm3533 = vcmask 64512
        %v3535 = vsel %vm3533, %v3502, 0
        %3537 = vmatprep.subr.mxu0 0.0
        %3538 = vmatpush1.msra.mxu0 %v3531
        %3539 = vmatprep.subr.mxu0 0.0
        %3540 = vmatpush1.msra.mxu0 0.0
        %3541 = vmatprep.subr.mxu0 0.0
        %3542 = vmatpush1.msra.mxu0 0.0
        %3543 = vmatprep.subr.mxu0 0.0
        %3544 = vmatpush1.msra.mxu0 0.0
        %3545 = vmatprep.subr.mxu0 0.0
        %3546 = vmatpush1.msra.mxu0 0.0
        %3547 = vmatprep.subr.mxu0 0.0
        %3548 = vmatpush1.msra.mxu0 0.0
        %3549 = vmatprep.subr.mxu0 0.0
        %3550 = vmatpush1.msra.mxu0 0.0
        %3551 = vmatprep.subr.mxu0 0.0
        %3552 = vmatpush1.msra.mxu0 0.0
        %3553 = vmatprep.subr.mxu0 0.0
        %3554 = vmatpush1.msra.mxu0 0.0
        %3555 = vmatprep.subr.mxu0 0.0
        %3556 = vmatpush1.msra.mxu0 0.0
        %3557 = vmatprep.subr.mxu0 0.0
        %3558 = vmatpush1.msra.mxu0 0.0
        %3559 = vmatprep.subr.mxu0 0.0
        %3560 = vmatpush1.msra.mxu0 0.0
        %3561 = vmatprep.subr.mxu0 0.0
        %3562 = vmatpush1.msra.mxu0 0.0
        %3563 = vmatprep.subr.mxu0 0.0
        %3564 = vmatpush1.msra.mxu0 0.0
        %3565 = vmatprep.subr.mxu0 0.0
        %3566 = vmatpush1.msra.mxu0 0.0
        %3567 = vmatprep.subr.mxu0 0.0
        %3568 = vmatpush1.msra.mxu0 0.0
        %3569 = vmatprep.subr.mxu0 0.0
        %3570 = vmatpush1.msra.mxu0 0.0
        %3571 = vmatprep.subr.mxu0 0.0
        %3572 = vmatpush1.msra.mxu0 0.0
        %3573 = vmatprep.subr.mxu0 0.0
        %3574 = vmatpush1.msra.mxu0 0.0
        %3575 = vmatprep.subr.mxu0 0.0
        %3576 = vmatpush1.msra.mxu0 0.0
        %3577 = vmatprep.subr.mxu0 0.0
        %3578 = vmatpush1.msra.mxu0 0.0
        %3579 = vmatprep.subr.mxu0 0.0
        %3580 = vmatpush1.msra.mxu0 0.0
        %3581 = vmatprep.subr.mxu0 0.0
        %3582 = vmatpush1.msra.mxu0 0.0
        %3583 = vmatprep.subr.mxu0 0.0
        %3584 = vmatpush1.msra.mxu0 0.0
        %3585 = vmatprep.subr.mxu0 0.0
        %3586 = vmatpush1.msra.mxu0 0.0
        %3587 = vmatprep.subr.mxu0 0.0
        %3588 = vmatpush1.msra.mxu0 0.0
        %3589 = vmatprep.subr.mxu0 0.0
        %3590 = vmatpush1.msra.mxu0 0.0
        %3591 = vmatprep.subr.mxu0 0.0
        %3592 = vmatpush1.msra.mxu0 0.0
        %3593 = vmatprep.subr.mxu0 0.0
        %3594 = vmatpush1.msra.mxu0 0.0
        %3595 = vmatprep.subr.mxu0 0.0
        %3596 = vmatpush1.msra.mxu0 0.0
        %3597 = vmatprep.subr.mxu0 0.0
        %3598 = vmatpush1.msra.mxu0 0.0
        %3599 = vmatprep.subr.mxu0 0.0
        %3600 = vmatpush1.msra.mxu0 0.0
        %3601 = vmatprep.mubr.f32.mxu0 0.0
        %3602 = vmatmul.mubr.f32.gmra.mrb[0].mxu0 %v3535
        %v3603 = vpop.f32.mrb[0].mxu0
        %v3604 = vadd.f32 0.0, %v3603
        %v3605 = vpop.f32.mrb[0].mxu0
        %3606 = vdwg.mxu0
        %v3607 = vld [vmem:[%s11] sm:$0xff]
        %v3608 = vld [vmem:[%s11 + $0x8] sm:$0xff]
        %v3609 = vld [vmem:[%s11 + $0x10] sm:$0xff]
        %v3610 = vld [vmem:[%s11 + $0x18] sm:$0xff]
        %v3611 = vld [vmem:[%s12] sm:$0x1]
        %v3613 = vsel %vm2251, %v3604, 0
        %3615 = vmatprep.subr.mxu0 0.0
        %3616 = vmatpush1.msra.mxu0 %v3607
        %3617 = vmatprep.subr.mxu0 0.0
        %3618 = vmatpush1.msra.mxu0 %v3608
        %3619 = vmatprep.subr.mxu0 0.0
        %3620 = vmatpush1.msra.mxu0 %v3609
        %3621 = vmatprep.subr.mxu0 0.0
        %3622 = vmatpush1.msra.mxu0 %v3610
        %3623 = vmatprep.subr.mxu0 0.0
        %3624 = vmatpush1.msra.mxu0 0.0
        %3625 = vmatprep.subr.mxu0 0.0
        %3626 = vmatpush1.msra.mxu0 0.0
        %3627 = vmatprep.subr.mxu0 0.0
        %3628 = vmatpush1.msra.mxu0 0.0
        %3629 = vmatprep.subr.mxu0 0.0
        %3630 = vmatpush1.msra.mxu0 0.0
        %3631 = vmatprep.subr.mxu0 0.0
        %3632 = vmatpush1.msra.mxu0 0.0
        %3633 = vmatprep.subr.mxu0 0.0
        %3634 = vmatpush1.msra.mxu0 0.0
        %3635 = vmatprep.subr.mxu0 0.0
        %3636 = vmatpush1.msra.mxu0 0.0
        %3637 = vmatprep.subr.mxu0 0.0
        %3638 = vmatpush1.msra.mxu0 0.0
        %3639 = vmatprep.subr.mxu0 0.0
        %3640 = vmatpush1.msra.mxu0 0.0
        %3641 = vmatprep.subr.mxu0 0.0
        %3642 = vmatpush1.msra.mxu0 0.0
        %3643 = vmatprep.subr.mxu0 0.0
        %3644 = vmatpush1.msra.mxu0 0.0
        %3645 = vmatprep.subr.mxu0 0.0
        %3646 = vmatpush1.msra.mxu0 0.0
        %3647 = vmatprep.subr.mxu0 0.0
        %3648 = vmatpush1.msra.mxu0 0.0
        %3649 = vmatprep.subr.mxu0 0.0
        %3650 = vmatpush1.msra.mxu0 0.0
        %3651 = vmatprep.subr.mxu0 0.0
        %3652 = vmatpush1.msra.mxu0 0.0
        %3653 = vmatprep.subr.mxu0 0.0
        %3654 = vmatpush1.msra.mxu0 0.0
        %3655 = vmatprep.subr.mxu0 0.0
        %3656 = vmatpush1.msra.mxu0 0.0
        %3657 = vmatprep.subr.mxu0 0.0
        %3658 = vmatpush1.msra.mxu0 0.0
        %3659 = vmatprep.subr.mxu0 0.0
        %3660 = vmatpush1.msra.mxu0 0.0
        %3661 = vmatprep.subr.mxu0 0.0
        %3662 = vmatpush1.msra.mxu0 0.0
        %3663 = vmatprep.subr.mxu0 0.0
        %3664 = vmatpush1.msra.mxu0 0.0
        %3665 = vmatprep.subr.mxu0 0.0
        %3666 = vmatpush1.msra.mxu0 0.0
        %3667 = vmatprep.subr.mxu0 0.0
        %3668 = vmatpush1.msra.mxu0 0.0
        %3669 = vmatprep.subr.mxu0 0.0
        %3670 = vmatpush1.msra.mxu0 0.0
        %3671 = vmatprep.subr.mxu0 0.0
        %3672 = vmatpush1.msra.mxu0 0.0
        %3673 = vmatprep.subr.mxu0 0.0
        %3674 = vmatpush1.msra.mxu0 0.0
        %3675 = vmatprep.subr.mxu0 0.0
        %3676 = vmatpush1.msra.mxu0 0.0
        %3677 = vmatprep.subr.mxu0 0.0
        %3678 = vmatpush1.msra.mxu0 0.0
        %3679 = vmatprep.mubr.f32.mxu0 0.0
        %3680 = vmatmul.mubr.f32.gmra.mrb[0].mxu0 %v3613
        %v3681 = vpop.f32.mrb[0].mxu0
        %v3682 = vadd.f32 %v3611, %v3681
        %v3683 = vpop.f32.mrb[0].mxu0
        %3684 = vdwg.mxu0
        %vm3685 = vcmask 8192
        %3686 = vst.msk [vmem:[%s471] sm:$0x1] %vm3685, %v3682
        %s3687 = sand.u32 %s328, 1
        %s3688 = scalar_lea.sflag [#allocation3], %s3687
        %s3689 = sand.u32 %s328, 1
        %s3690 = scalar_lea.vmem [#allocation2], %s3689
        // Predicated region
        $region73: #{tpu_custom_call.1} parent=71 // pred_check
          %p3691 = pneg %p338
        $region74: #{tpu_custom_call.1} parent=71 // pred_check_branch
          %3693 = sbr.rel (%p3691) target = $region76
        $region75: #{tpu_custom_call.1} parent=71 // pred_region
          %s3695 = ssub.s32 16, 16
          %3696 = vsyncadd %s3688, %s3695
          %s3697 = smul.addr %s27, 16
          %s3698 = scalar_lea.hbm %s13, %s3697
          %s3700 = sshll.u32 %s3690, 4
          %s3701 = int_to_ptr.vmem [resolvable:$true] %s3700
          %3703 = dma.vmem_to_hbm [thread:$0]  %s3701, 16, %s3698, %s3688
        $region76: #{tpu_custom_call.1} parent=71 // pred_fallthru
          _
      $region72: #{tpu_custom_call.1} parent=5 // pred_fallthru
        _
      %p3704 = scmp.le.s32.totalorder 2, %s22
      // Predicated region
      $region77: #{tpu_custom_call.1} parent=5 // pred_check
        %p3705 = pneg %p3704
      $region78: #{tpu_custom_call.1} parent=5 // pred_check_branch
        %3707 = sbr.rel (%p3705) target = $region80
      $region79: #{tpu_custom_call.1} parent=5 // pred_region
        %s3708 = ssub.s32 %s22, 2
        // Predicated region
        $region81: #{tpu_custom_call.1} parent=79 // pred_check
          %p3709 = pneg %p344
        $region82: #{tpu_custom_call.1} parent=79 // pred_check_branch
          %3711 = sbr.rel (%p3709) target = $region84
        $region83: #{tpu_custom_call.1} parent=79 // pred_region
          %s3712 = sand.u32 %s329, 1
          %s3713 = scalar_lea.sflag [#allocation3], %s3712
          %s3714 = sand.u32 %s329, 1
          %s3715 = scalar_lea.vmem [#allocation2], %s3714
          %3716 = dma.done %s3713, 16
        $region84: #{tpu_custom_call.1} parent=79 // pred_fallthru
          _
      $region80: #{tpu_custom_call.1} parent=5 // pred_fallthru
        _
    $region6: #{tpu_custom_call.1} parent=1 // loop_footer
      %s26 = sadd.s32 1, %s22
    $region7: #{tpu_custom_call.1} parent=1 // loop_footer_branch
      %21 = sbr.rel target = $region3
    $region8: #{tpu_custom_call.1} parent=1 // loop_exit
      _
    %3717 = vsyncpa [#allocation3], 1
    %s3718 = scalar_lea.sflag [#allocation3], 1
    %3719 = vsyncpa %s3718, 1

</llo_original>
